<compile_context>
chip_gen: v6e
topology: v6e:2x2x1
jax: 0.10.0
libtpu: 0.0.40
codegen_flags: <defaults>
</compile_context>

<pallas_src>
import jax
import jax.numpy as jnp
from jax import lax
from jax.experimental import pallas as pl
from jax.experimental.pallas import tpu as pltpu


# ---------------------------------------------------------------------------
# Fused kernel: conv1 -> ReLU -> pool -> conv2 -> ReLU -> fc1..fc4
# ---------------------------------------------------------------------------

def net_kernel(p1_ref, w1_ref, b1_ref, w2_ref, b2_ref,
               fc1_w_ref, fc1_b_ref, fc2_w_ref, fc2_b_ref,
               fc3_w_ref, fc3_b_ref, fc4_w_ref, fc4_b_ref, o_ref):
    bn = o_ref.shape[0]                      # images in this batch tile
    f32 = jnp.float32

    # conv1: one Toeplitz MXU dot.  Rows = (n, oh); lanes = parity*128 +
    # pw*8 + oc with ow = 2*pw + parity; lanes with pw >= 14 are zero pad.
    h = jnp.dot(p1_ref[...], w1_ref[...], preferred_element_type=f32)
    h = jnp.maximum(h + b1_ref[...], 0.0)                      # (bn*28, 256)

    # 2x2 / stride-2 max pool.
    h = jnp.max(h.reshape(bn * 14, 2, 256), axis=1)            # oh: sublane pairs
    m = jnp.maximum(h[:, :128], h[:, 128:])                    # ow: aligned halves
    m3 = m.astype(jnp.bfloat16).reshape(bn, 14, 128)           # (n, ph, pw*8+c)

    # conv2: 5 per-kh Toeplitz dots.  Output rows = (n, oh); lanes =
    # ow*24 + oc, zero-padded to 256 (weight cols 240..255 are zero).
    acc = jnp.zeros((bn * 10, 256), f32)
    for kh in range(5):
        lhs = m3[:, kh:kh + 10, :].reshape(bn * 10, 128)
        acc = acc + jnp.dot(lhs, w2_ref[kh], preferred_element_type=f32)
    g = jnp.maximum(acc + b2_ref[...], 0.0)                    # (bn*10, 256)

    # fc1: contract over (oh, ow, oc) without materializing the (bn, 2400)
    # flatten — one dot per conv2 output row oh (weight rows pre-permuted
    # from PyTorch's CHW order and padded to 256 per oh).
    g3 = g.astype(jnp.bfloat16).reshape(bn, 10, 256)
    h = jnp.zeros((bn, 150), f32)
    for oh in range(10):
        h = h + jnp.dot(g3[:, oh, :], fc1_w_ref[oh],
                        preferred_element_type=f32)
    h = jnp.maximum(h + fc1_b_ref[...], 0.0)

    def dense(v, w_ref, b_ref):
        return jnp.dot(v.astype(jnp.bfloat16), w_ref[...],
                       preferred_element_type=f32) + b_ref[...]

    h = jnp.maximum(dense(h, fc2_w_ref, fc2_b_ref), 0.0)
    h = jnp.maximum(dense(h, fc3_w_ref, fc3_b_ref), 0.0)
    o_ref[...] = dense(h, fc4_w_ref, fc4_b_ref)                # (bn, 128), unmasked


# ---------------------------------------------------------------------------
# pallas_call wrapper: batch grid, weights as constant-index resident blocks
# ---------------------------------------------------------------------------

def _const_spec(shape):
    zeros = (0,) * len(shape)
    return pl.BlockSpec(shape, lambda i: zeros)


def _pick_batch_tile(n):
    if n <= 8:
        return n                              # single block == full arrays
    for b in (8, 4, 2):                       # bn*28 must stay a multiple of 8
        if n % b == 0:
            return b
    raise ValueError(f"batch size {n} must be <= 8 or divisible by 2")


def net_forward_pallas(x_nchw, kp):
    n = x_nchw.shape[0]
    bn = _pick_batch_tile(n)

    # conv1 row-band im2col, built wrapper-side (pure layout plumbing, fused
    # by XLA): p1[n*28 + oh, kh*96 + iw*3 + ci] = x[n, ci, oh + kh, iw].
    xt = jnp.transpose(x_nchw, (0, 2, 3, 1))                   # (N, 32, 32, 3)
    bands = [xt[:, kh:kh + 28, :, :].reshape(n, 28, 96) for kh in range(5)]
    p1 = (jnp.concatenate(bands, axis=-1)                      # (N, 28, 480)
          .reshape(n * 28, 480).astype(jnp.bfloat16))

    weights = (kp["w1"], kp["b1"], kp["w2"], kp["b2"],
               kp["fc1_w"], kp["fc1_b"], kp["fc2_w"], kp["fc2_b"],
               kp["fc3_w"], kp["fc3_b"], kp["fc4_w"], kp["fc4_b"])

    out = pl.pallas_call(
        net_kernel,
        out_shape=jax.ShapeDtypeStruct((n, 128), jnp.float32),
        grid=(n // bn,),
        in_specs=[pl.BlockSpec((bn * 28, 480), lambda i: (i, 0))]
                 + [_const_spec(w.shape) for w in weights],
        out_specs=pl.BlockSpec((bn, 128), lambda i: (i, 0)),
        compiler_params=pltpu.CompilerParams(
            dimension_semantics=("parallel",),
            vmem_limit_bytes=32 * 1024 * 1024),
    )(p1, *weights)
    return out[:, :10]


# ---------------------------------------------------------------------------
# Parameters (PyTorch-default-like init) and one-time weight preparation
# ---------------------------------------------------------------------------

def init_params(key):
    ks = jax.random.split(key, 12)

    def u(k, shape, fan_in):
        bound = 1.0 / float(fan_in) ** 0.5
        return jax.random.uniform(k, shape, jnp.float32, -bound, bound)

    return {
        "conv1_w": u(ks[0], (8, 3, 5, 5), 3 * 25),     # PyTorch OIHW
        "conv1_b": u(ks[1], (8,), 3 * 25),
        "conv2_w": u(ks[2], (24, 8, 5, 5), 8 * 25),
        "conv2_b": u(ks[3], (24,), 8 * 25),
        "fc1_w": u(ks[4], (150, 2400), 2400),          # PyTorch (out, in)
        "fc1_b": u(ks[5], (150,), 2400),
        "fc2_w": u(ks[6], (90, 150), 150),
        "fc2_b": u(ks[7], (90,), 150),
        "fc3_w": u(ks[8], (30, 90), 90),
        "fc3_b": u(ks[9], (30,), 90),
        "fc4_w": u(ks[10], (10, 30), 30),
        "fc4_b": u(ks[11], (10,), 30),
    }


def prepare_params(p):
    """One-time Toeplitz expansion / permutation / padding / bf16 casts."""
    f32, bf16 = jnp.float32, jnp.bfloat16

    # conv1 Toeplitz weight (480, 256):
    #   row = kh*96 + iw*3 + ci ; col = parity*128 + pw*8 + oc, ow = 2*pw+parity
    wc1 = jnp.transpose(p["conv1_w"], (2, 3, 1, 0))            # (kh, kw, ci, oc)
    w1t = jnp.zeros((5, 32, 3, 2, 16, 8), f32)                 # (kh,iw,ci,par,pw,oc)
    for ow in range(28):
        par, pw = ow % 2, ow // 2
        w1t = w1t.at[:, ow:ow + 5, :, par, pw, :].set(wc1)
    w1t = w1t.reshape(480, 256).astype(bf16)

    b1t = jnp.zeros((2, 16, 8), f32)
    b1t = b1t.at[:, :14, :].set(jnp.broadcast_to(p["conv1_b"], (2, 14, 8)))
    b1t = b1t.reshape(1, 256)

    # conv2 Toeplitz weights (5, 128, 256), one per kh:
    #   row = pw*8 + ci (rows pw>=14 zero) ; col = ow*24 + oc (cols 240.. zero)
    wc2 = jnp.transpose(p["conv2_w"], (2, 3, 1, 0))            # (kh, kw, ci, oc)
    w2t = jnp.zeros((5, 16, 8, 10, 24), f32)                   # (kh, pw, ci, ow, oc)
    for ow in range(10):
        for kw in range(5):
            w2t = w2t.at[:, ow + kw, :, ow, :].set(wc2[:, kw, :, :])
    w2t = jnp.pad(w2t.reshape(5, 128, 240),
                  ((0, 0), (0, 0), (0, 16))).astype(bf16)

    b2t = jnp.pad(jnp.tile(p["conv2_b"], 10), (0, 16)).reshape(1, 256)

    # fc1: rows permuted from PyTorch CHW flatten to the kernel's per-oh
    # (ow, oc) lane layout, padded to 256 lanes per oh -> (10, 256, 150).
    fc1 = (p["fc1_w"].reshape(150, 24, 10, 10)                 # (j, oc, oh, ow)
           .transpose(2, 3, 1, 0)                              # (oh, ow, oc, j)
           .reshape(10, 240, 150))
    fc1 = jnp.pad(fc1, ((0, 0), (0, 16), (0, 0))).astype(bf16)

    # fc4 padded to 128 output lanes (unmasked final store).
    fc4_w = jnp.zeros((30, 128), f32).at[:, :10].set(p["fc4_w"].T).astype(bf16)
    fc4_b = jnp.zeros((1, 128), f32).at[:, :10].set(p["fc4_b"][None, :])

    return {
        "w1": w1t, "b1": b1t, "w2": w2t, "b2": b2t,
        "fc1_w": fc1, "fc1_b": p["fc1_b"].reshape(1, -1),
        "fc2_w": p["fc2_w"].T.astype(bf16), "fc2_b": p["fc2_b"].reshape(1, -1),
        "fc3_w": p["fc3_w"].T.astype(bf16), "fc3_b": p["fc3_b"].reshape(1, -1),
        "fc4_w": fc4_w, "fc4_b": fc4_b,
    }


# ---------------------------------------------------------------------------
# Pure-JAX reference (float32, mirrors the PyTorch module exactly)
# ---------------------------------------------------------------------------

def net_forward_ref(x, p):
    dn = ("NCHW", "OIHW", "NCHW")
    h = lax.conv_general_dilated(x, p["conv1_w"], (1, 1), "VALID",
                                 dimension_numbers=dn)
    h = jnp.maximum(h + p["conv1_b"].reshape(1, -1, 1, 1), 0.0)
    h = lax.reduce_window(h, -jnp.inf, lax.max,
                          (1, 1, 2, 2), (1, 1, 2, 2), "VALID")
    h = lax.conv_general_dilated(h, p["conv2_w"], (1, 1), "VALID",
                                 dimension_numbers=dn)
    h = jnp.maximum(h + p["conv2_b"].reshape(1, -1, 1, 1), 0.0)
    h = h.reshape(h.shape[0], -1)
    h = jnp.maximum(h @ p["fc1_w"].T + p["fc1_b"], 0.0)
    h = jnp.maximum(h @ p["fc2_w"].T + p["fc2_b"], 0.0)
    h = jnp.maximum(h @ p["fc3_w"].T + p["fc3_b"], 0.0)
    return h @ p["fc4_w"].T + p["fc4_b"]


# ---------------------------------------------------------------------------

if __name__ == "__main__":
    key = jax.random.PRNGKey(0)
    pkey, xkey = jax.random.split(key)
    params = init_params(pkey)
    kparams = prepare_params(params)             # one-time weight preparation
    x = jax.random.normal(xkey, (2, 3, 32, 32), jnp.float32)   # NCHW, like PyTorch

    fwd = jax.jit(net_forward_pallas)
    out = jax.block_until_ready(fwd(x, kparams))

    ref = net_forward_ref(x, params)
    assert out.shape == (2, 10), out.shape
    max_err = float(jnp.max(jnp.abs(out - ref)))
    # bf16 matmul operands with f32 accumulation: expected error ~1e-3.
    assert max_err < 2e-2, f"max abs diff vs reference: {max_err}"
    print("KERNEL_OK")
</pallas_src>

<mosaic_0001>
module attributes {stable_mosaic.version = 11 : i64} {
  func.func @net_kernel(%arg0: i32, %arg1: memref<56x480xbf16, #tpu.memory_space<vmem>>, %arg2: memref<480x256xbf16, #tpu.memory_space<vmem>>, %arg3: memref<1x256xf32, #tpu.memory_space<vmem>>, %arg4: memref<5x128x256xbf16, #tpu.memory_space<vmem>>, %arg5: memref<1x256xf32, #tpu.memory_space<vmem>>, %arg6: memref<10x256x150xbf16, #tpu.memory_space<vmem>>, %arg7: memref<1x150xf32, #tpu.memory_space<vmem>>, %arg8: memref<150x90xbf16, #tpu.memory_space<vmem>>, %arg9: memref<1x90xf32, #tpu.memory_space<vmem>>, %arg10: memref<90x30xbf16, #tpu.memory_space<vmem>>, %arg11: memref<1x30xf32, #tpu.memory_space<vmem>>, %arg12: memref<30x128xbf16, #tpu.memory_space<vmem>>, %arg13: memref<1x128xf32, #tpu.memory_space<vmem>>, %arg14: memref<2x128xf32, #tpu.memory_space<vmem>>) attributes {dimension_semantics = [#tpu.dimension_semantics<parallel>], iteration_bounds = array<i64: 1>, scalar_prefetch = 0 : i64, scratch_operands = 0 : i64, tpu.core_type = #tpu.core_type<tc>, window_params = [{transform_indices = @transform_0, window_bounds = array<i64: 56, 480>}, {pipeline_mode = #tpu.pipeline_mode<synchronous>, transform_indices = @transform_1, window_bounds = array<i64: 480, 256>}, {pipeline_mode = #tpu.pipeline_mode<synchronous>, transform_indices = @transform_2, window_bounds = array<i64: 1, 256>}, {pipeline_mode = #tpu.pipeline_mode<synchronous>, transform_indices = @transform_3, window_bounds = array<i64: 5, 128, 256>}, {pipeline_mode = #tpu.pipeline_mode<synchronous>, transform_indices = @transform_4, window_bounds = array<i64: 1, 256>}, {pipeline_mode = #tpu.pipeline_mode<synchronous>, transform_indices = @transform_5, window_bounds = array<i64: 10, 256, 150>}, {pipeline_mode = #tpu.pipeline_mode<synchronous>, transform_indices = @transform_6, window_bounds = array<i64: 1, 150>}, {pipeline_mode = #tpu.pipeline_mode<synchronous>, transform_indices = @transform_7, window_bounds = array<i64: 150, 90>}, {pipeline_mode = #tpu.pipeline_mode<synchronous>, transform_indices = @transform_8, window_bounds = array<i64: 1, 90>}, {pipeline_mode = #tpu.pipeline_mode<synchronous>, transform_indices = @transform_9, window_bounds = array<i64: 90, 30>}, {pipeline_mode = #tpu.pipeline_mode<synchronous>, transform_indices = @transform_10, window_bounds = array<i64: 1, 30>}, {pipeline_mode = #tpu.pipeline_mode<synchronous>, transform_indices = @transform_11, window_bounds = array<i64: 30, 128>}, {pipeline_mode = #tpu.pipeline_mode<synchronous>, transform_indices = @transform_12, window_bounds = array<i64: 1, 128>}, {transform_indices = @transform_13, window_bounds = array<i64: 2, 128>}]} {
    %c0 = arith.constant 0 : index
    %c0_0 = arith.constant 0 : index
    %0 = vector.load %arg1[%c0, %c0_0] : memref<56x480xbf16, #tpu.memory_space<vmem>>, vector<56x480xbf16>
    %c0_1 = arith.constant 0 : index
    %c0_2 = arith.constant 0 : index
    %1 = vector.load %arg2[%c0_1, %c0_2] : memref<480x256xbf16, #tpu.memory_space<vmem>>, vector<480x256xbf16>
    %cst = arith.constant dense<0.000000e+00> : vector<56x256xf32>
    %2 = tpu.matmul %0, %1, %cst {dimension_numbers = #tpu.dot_dimension_numbers<[1], [0], [0], [1], [0, 0, 1, 1], [], []>} : vector<56x480xbf16>, vector<480x256xbf16>, vector<56x256xf32> -> vector<56x256xf32>
    %c0_3 = arith.constant 0 : index
    %c0_4 = arith.constant 0 : index
    %3 = vector.load %arg3[%c0_3, %c0_4] : memref<1x256xf32, #tpu.memory_space<vmem>>, vector<1x256xf32>
    %4 = vector.broadcast %3 : vector<1x256xf32> to vector<56x256xf32>
    %5 = arith.addf %2, %4 : vector<56x256xf32>
    %cst_5 = arith.constant 0.000000e+00 : f32
    %6 = vector.broadcast %cst_5 : f32 to vector<56x256xf32>
    %7 = arith.maximumf %5, %6 : vector<56x256xf32>
    %8 = vector.shape_cast %7 : vector<56x256xf32> to vector<28x2x256xf32>
    %cst_6 = arith.constant dense<0xFF800000> : vector<28x256xf32>
    %9 = vector.multi_reduction <maximumf>, %8, %cst_6 [1] : vector<28x2x256xf32> to vector<28x256xf32>
    %10 = vector.extract_strided_slice %9 {offsets = [0, 0], sizes = [28, 128], strides = [1, 1]} : vector<28x256xf32> to vector<28x128xf32>
    %11 = vector.extract_strided_slice %9 {offsets = [0, 128], sizes = [28, 128], strides = [1, 1]} : vector<28x256xf32> to vector<28x128xf32>
    %12 = arith.maximumf %10, %11 : vector<28x128xf32>
    %13 = arith.truncf %12 : vector<28x128xf32> to vector<28x128xbf16>
    %14 = vector.shape_cast %13 : vector<28x128xbf16> to vector<2x14x128xbf16>
    %cst_7 = arith.constant 0.000000e+00 : f32
    %15 = vector.broadcast %cst_7 : f32 to vector<20x256xf32>
    %16 = vector.extract_strided_slice %14 {offsets = [0, 0, 0], sizes = [2, 10, 128], strides = [1, 1, 1]} : vector<2x14x128xbf16> to vector<2x10x128xbf16>
    %17 = vector.shape_cast %16 : vector<2x10x128xbf16> to vector<20x128xbf16>
    %c0_8 = arith.constant 0 : index
    %c0_9 = arith.constant 0 : index
    %c0_10 = arith.constant 0 : index
    %18 = vector.load %arg4[%c0_8, %c0_9, %c0_10] : memref<5x128x256xbf16, #tpu.memory_space<vmem>>, vector<1x128x256xbf16>
    %19 = vector.shape_cast %18 : vector<1x128x256xbf16> to vector<128x256xbf16>
    %cst_11 = arith.constant dense<0.000000e+00> : vector<20x256xf32>
    %20 = tpu.matmul %17, %19, %cst_11 {dimension_numbers = #tpu.dot_dimension_numbers<[1], [0], [0], [1], [0, 0, 1, 1], [], []>} : vector<20x128xbf16>, vector<128x256xbf16>, vector<20x256xf32> -> vector<20x256xf32>
    %21 = arith.addf %15, %20 : vector<20x256xf32>
    %22 = vector.extract_strided_slice %14 {offsets = [0, 1, 0], sizes = [2, 10, 128], strides = [1, 1, 1]} : vector<2x14x128xbf16> to vector<2x10x128xbf16>
    %23 = vector.shape_cast %22 : vector<2x10x128xbf16> to vector<20x128xbf16>
    %c1 = arith.constant 1 : index
    %c0_12 = arith.constant 0 : index
    %c0_13 = arith.constant 0 : index
    %24 = vector.load %arg4[%c1, %c0_12, %c0_13] : memref<5x128x256xbf16, #tpu.memory_space<vmem>>, vector<1x128x256xbf16>
    %25 = vector.shape_cast %24 : vector<1x128x256xbf16> to vector<128x256xbf16>
    %cst_14 = arith.constant dense<0.000000e+00> : vector<20x256xf32>
    %26 = tpu.matmul %23, %25, %cst_14 {dimension_numbers = #tpu.dot_dimension_numbers<[1], [0], [0], [1], [0, 0, 1, 1], [], []>} : vector<20x128xbf16>, vector<128x256xbf16>, vector<20x256xf32> -> vector<20x256xf32>
    %27 = arith.addf %21, %26 : vector<20x256xf32>
    %28 = vector.extract_strided_slice %14 {offsets = [0, 2, 0], sizes = [2, 10, 128], strides = [1, 1, 1]} : vector<2x14x128xbf16> to vector<2x10x128xbf16>
    %29 = vector.shape_cast %28 : vector<2x10x128xbf16> to vector<20x128xbf16>
    %c2 = arith.constant 2 : index
    %c0_15 = arith.constant 0 : index
    %c0_16 = arith.constant 0 : index
    %30 = vector.load %arg4[%c2, %c0_15, %c0_16] : memref<5x128x256xbf16, #tpu.memory_space<vmem>>, vector<1x128x256xbf16>
    %31 = vector.shape_cast %30 : vector<1x128x256xbf16> to vector<128x256xbf16>
    %cst_17 = arith.constant dense<0.000000e+00> : vector<20x256xf32>
    %32 = tpu.matmul %29, %31, %cst_17 {dimension_numbers = #tpu.dot_dimension_numbers<[1], [0], [0], [1], [0, 0, 1, 1], [], []>} : vector<20x128xbf16>, vector<128x256xbf16>, vector<20x256xf32> -> vector<20x256xf32>
    %33 = arith.addf %27, %32 : vector<20x256xf32>
    %34 = vector.extract_strided_slice %14 {offsets = [0, 3, 0], sizes = [2, 10, 128], strides = [1, 1, 1]} : vector<2x14x128xbf16> to vector<2x10x128xbf16>
    %35 = vector.shape_cast %34 : vector<2x10x128xbf16> to vector<20x128xbf16>
    %c3 = arith.constant 3 : index
    %c0_18 = arith.constant 0 : index
    %c0_19 = arith.constant 0 : index
    %36 = vector.load %arg4[%c3, %c0_18, %c0_19] : memref<5x128x256xbf16, #tpu.memory_space<vmem>>, vector<1x128x256xbf16>
    %37 = vector.shape_cast %36 : vector<1x128x256xbf16> to vector<128x256xbf16>
    %cst_20 = arith.constant dense<0.000000e+00> : vector<20x256xf32>
    %38 = tpu.matmul %35, %37, %cst_20 {dimension_numbers = #tpu.dot_dimension_numbers<[1], [0], [0], [1], [0, 0, 1, 1], [], []>} : vector<20x128xbf16>, vector<128x256xbf16>, vector<20x256xf32> -> vector<20x256xf32>
    %39 = arith.addf %33, %38 : vector<20x256xf32>
    %40 = vector.extract_strided_slice %14 {offsets = [0, 4, 0], sizes = [2, 10, 128], strides = [1, 1, 1]} : vector<2x14x128xbf16> to vector<2x10x128xbf16>
    %41 = vector.shape_cast %40 : vector<2x10x128xbf16> to vector<20x128xbf16>
    %c4 = arith.constant 4 : index
    %c0_21 = arith.constant 0 : index
    %c0_22 = arith.constant 0 : index
    %42 = vector.load %arg4[%c4, %c0_21, %c0_22] : memref<5x128x256xbf16, #tpu.memory_space<vmem>>, vector<1x128x256xbf16>
    %43 = vector.shape_cast %42 : vector<1x128x256xbf16> to vector<128x256xbf16>
    %cst_23 = arith.constant dense<0.000000e+00> : vector<20x256xf32>
    %44 = tpu.matmul %41, %43, %cst_23 {dimension_numbers = #tpu.dot_dimension_numbers<[1], [0], [0], [1], [0, 0, 1, 1], [], []>} : vector<20x128xbf16>, vector<128x256xbf16>, vector<20x256xf32> -> vector<20x256xf32>
    %45 = arith.addf %39, %44 : vector<20x256xf32>
    %c0_24 = arith.constant 0 : index
    %c0_25 = arith.constant 0 : index
    %46 = vector.load %arg5[%c0_24, %c0_25] : memref<1x256xf32, #tpu.memory_space<vmem>>, vector<1x256xf32>
    %47 = vector.broadcast %46 : vector<1x256xf32> to vector<20x256xf32>
    %48 = arith.addf %45, %47 : vector<20x256xf32>
    %cst_26 = arith.constant 0.000000e+00 : f32
    %49 = vector.broadcast %cst_26 : f32 to vector<20x256xf32>
    %50 = arith.maximumf %48, %49 : vector<20x256xf32>
    %51 = arith.truncf %50 : vector<20x256xf32> to vector<20x256xbf16>
    %52 = vector.shape_cast %51 : vector<20x256xbf16> to vector<2x10x256xbf16>
    %cst_27 = arith.constant 0.000000e+00 : f32
    %53 = vector.broadcast %cst_27 : f32 to vector<2x150xf32>
    %54 = vector.extract_strided_slice %52 {offsets = [0, 0, 0], sizes = [2, 1, 256], strides = [1, 1, 1]} : vector<2x10x256xbf16> to vector<2x1x256xbf16>
    %55 = vector.shape_cast %54 : vector<2x1x256xbf16> to vector<2x256xbf16>
    %c0_28 = arith.constant 0 : index
    %c0_29 = arith.constant 0 : index
    %c0_30 = arith.constant 0 : index
    %56 = vector.load %arg6[%c0_28, %c0_29, %c0_30] : memref<10x256x150xbf16, #tpu.memory_space<vmem>>, vector<1x256x150xbf16>
    %57 = vector.shape_cast %56 : vector<1x256x150xbf16> to vector<256x150xbf16>
    %cst_31 = arith.constant dense<0.000000e+00> : vector<2x150xf32>
    %58 = tpu.matmul %55, %57, %cst_31 {dimension_numbers = #tpu.dot_dimension_numbers<[1], [0], [0], [1], [0, 0, 1, 1], [], []>} : vector<2x256xbf16>, vector<256x150xbf16>, vector<2x150xf32> -> vector<2x150xf32>
    %59 = arith.addf %53, %58 : vector<2x150xf32>
    %60 = vector.extract_strided_slice %52 {offsets = [0, 1, 0], sizes = [2, 1, 256], strides = [1, 1, 1]} : vector<2x10x256xbf16> to vector<2x1x256xbf16>
    %61 = vector.shape_cast %60 : vector<2x1x256xbf16> to vector<2x256xbf16>
    %c1_32 = arith.constant 1 : index
    %c0_33 = arith.constant 0 : index
    %c0_34 = arith.constant 0 : index
    %62 = vector.load %arg6[%c1_32, %c0_33, %c0_34] : memref<10x256x150xbf16, #tpu.memory_space<vmem>>, vector<1x256x150xbf16>
    %63 = vector.shape_cast %62 : vector<1x256x150xbf16> to vector<256x150xbf16>
    %cst_35 = arith.constant dense<0.000000e+00> : vector<2x150xf32>
    %64 = tpu.matmul %61, %63, %cst_35 {dimension_numbers = #tpu.dot_dimension_numbers<[1], [0], [0], [1], [0, 0, 1, 1], [], []>} : vector<2x256xbf16>, vector<256x150xbf16>, vector<2x150xf32> -> vector<2x150xf32>
    %65 = arith.addf %59, %64 : vector<2x150xf32>
    %66 = vector.extract_strided_slice %52 {offsets = [0, 2, 0], sizes = [2, 1, 256], strides = [1, 1, 1]} : vector<2x10x256xbf16> to vector<2x1x256xbf16>
    %67 = vector.shape_cast %66 : vector<2x1x256xbf16> to vector<2x256xbf16>
    %c2_36 = arith.constant 2 : index
    %c0_37 = arith.constant 0 : index
    %c0_38 = arith.constant 0 : index
    %68 = vector.load %arg6[%c2_36, %c0_37, %c0_38] : memref<10x256x150xbf16, #tpu.memory_space<vmem>>, vector<1x256x150xbf16>
    %69 = vector.shape_cast %68 : vector<1x256x150xbf16> to vector<256x150xbf16>
    %cst_39 = arith.constant dense<0.000000e+00> : vector<2x150xf32>
    %70 = tpu.matmul %67, %69, %cst_39 {dimension_numbers = #tpu.dot_dimension_numbers<[1], [0], [0], [1], [0, 0, 1, 1], [], []>} : vector<2x256xbf16>, vector<256x150xbf16>, vector<2x150xf32> -> vector<2x150xf32>
    %71 = arith.addf %65, %70 : vector<2x150xf32>
    %72 = vector.extract_strided_slice %52 {offsets = [0, 3, 0], sizes = [2, 1, 256], strides = [1, 1, 1]} : vector<2x10x256xbf16> to vector<2x1x256xbf16>
    %73 = vector.shape_cast %72 : vector<2x1x256xbf16> to vector<2x256xbf16>
    %c3_40 = arith.constant 3 : index
    %c0_41 = arith.constant 0 : index
    %c0_42 = arith.constant 0 : index
    %74 = vector.load %arg6[%c3_40, %c0_41, %c0_42] : memref<10x256x150xbf16, #tpu.memory_space<vmem>>, vector<1x256x150xbf16>
    %75 = vector.shape_cast %74 : vector<1x256x150xbf16> to vector<256x150xbf16>
    %cst_43 = arith.constant dense<0.000000e+00> : vector<2x150xf32>
    %76 = tpu.matmul %73, %75, %cst_43 {dimension_numbers = #tpu.dot_dimension_numbers<[1], [0], [0], [1], [0, 0, 1, 1], [], []>} : vector<2x256xbf16>, vector<256x150xbf16>, vector<2x150xf32> -> vector<2x150xf32>
    %77 = arith.addf %71, %76 : vector<2x150xf32>
    %78 = vector.extract_strided_slice %52 {offsets = [0, 4, 0], sizes = [2, 1, 256], strides = [1, 1, 1]} : vector<2x10x256xbf16> to vector<2x1x256xbf16>
    %79 = vector.shape_cast %78 : vector<2x1x256xbf16> to vector<2x256xbf16>
    %c4_44 = arith.constant 4 : index
    %c0_45 = arith.constant 0 : index
    %c0_46 = arith.constant 0 : index
    %80 = vector.load %arg6[%c4_44, %c0_45, %c0_46] : memref<10x256x150xbf16, #tpu.memory_space<vmem>>, vector<1x256x150xbf16>
    %81 = vector.shape_cast %80 : vector<1x256x150xbf16> to vector<256x150xbf16>
    %cst_47 = arith.constant dense<0.000000e+00> : vector<2x150xf32>
    %82 = tpu.matmul %79, %81, %cst_47 {dimension_numbers = #tpu.dot_dimension_numbers<[1], [0], [0], [1], [0, 0, 1, 1], [], []>} : vector<2x256xbf16>, vector<256x150xbf16>, vector<2x150xf32> -> vector<2x150xf32>
    %83 = arith.addf %77, %82 : vector<2x150xf32>
    %84 = vector.extract_strided_slice %52 {offsets = [0, 5, 0], sizes = [2, 1, 256], strides = [1, 1, 1]} : vector<2x10x256xbf16> to vector<2x1x256xbf16>
    %85 = vector.shape_cast %84 : vector<2x1x256xbf16> to vector<2x256xbf16>
    %c5 = arith.constant 5 : index
    %c0_48 = arith.constant 0 : index
    %c0_49 = arith.constant 0 : index
    %86 = vector.load %arg6[%c5, %c0_48, %c0_49] : memref<10x256x150xbf16, #tpu.memory_space<vmem>>, vector<1x256x150xbf16>
    %87 = vector.shape_cast %86 : vector<1x256x150xbf16> to vector<256x150xbf16>
    %cst_50 = arith.constant dense<0.000000e+00> : vector<2x150xf32>
    %88 = tpu.matmul %85, %87, %cst_50 {dimension_numbers = #tpu.dot_dimension_numbers<[1], [0], [0], [1], [0, 0, 1, 1], [], []>} : vector<2x256xbf16>, vector<256x150xbf16>, vector<2x150xf32> -> vector<2x150xf32>
    %89 = arith.addf %83, %88 : vector<2x150xf32>
    %90 = vector.extract_strided_slice %52 {offsets = [0, 6, 0], sizes = [2, 1, 256], strides = [1, 1, 1]} : vector<2x10x256xbf16> to vector<2x1x256xbf16>
    %91 = vector.shape_cast %90 : vector<2x1x256xbf16> to vector<2x256xbf16>
    %c6 = arith.constant 6 : index
    %c0_51 = arith.constant 0 : index
    %c0_52 = arith.constant 0 : index
    %92 = vector.load %arg6[%c6, %c0_51, %c0_52] : memref<10x256x150xbf16, #tpu.memory_space<vmem>>, vector<1x256x150xbf16>
    %93 = vector.shape_cast %92 : vector<1x256x150xbf16> to vector<256x150xbf16>
    %cst_53 = arith.constant dense<0.000000e+00> : vector<2x150xf32>
    %94 = tpu.matmul %91, %93, %cst_53 {dimension_numbers = #tpu.dot_dimension_numbers<[1], [0], [0], [1], [0, 0, 1, 1], [], []>} : vector<2x256xbf16>, vector<256x150xbf16>, vector<2x150xf32> -> vector<2x150xf32>
    %95 = arith.addf %89, %94 : vector<2x150xf32>
    %96 = vector.extract_strided_slice %52 {offsets = [0, 7, 0], sizes = [2, 1, 256], strides = [1, 1, 1]} : vector<2x10x256xbf16> to vector<2x1x256xbf16>
    %97 = vector.shape_cast %96 : vector<2x1x256xbf16> to vector<2x256xbf16>
    %c7 = arith.constant 7 : index
    %c0_54 = arith.constant 0 : index
    %c0_55 = arith.constant 0 : index
    %98 = vector.load %arg6[%c7, %c0_54, %c0_55] : memref<10x256x150xbf16, #tpu.memory_space<vmem>>, vector<1x256x150xbf16>
    %99 = vector.shape_cast %98 : vector<1x256x150xbf16> to vector<256x150xbf16>
    %cst_56 = arith.constant dense<0.000000e+00> : vector<2x150xf32>
    %100 = tpu.matmul %97, %99, %cst_56 {dimension_numbers = #tpu.dot_dimension_numbers<[1], [0], [0], [1], [0, 0, 1, 1], [], []>} : vector<2x256xbf16>, vector<256x150xbf16>, vector<2x150xf32> -> vector<2x150xf32>
    %101 = arith.addf %95, %100 : vector<2x150xf32>
    %102 = vector.extract_strided_slice %52 {offsets = [0, 8, 0], sizes = [2, 1, 256], strides = [1, 1, 1]} : vector<2x10x256xbf16> to vector<2x1x256xbf16>
    %103 = vector.shape_cast %102 : vector<2x1x256xbf16> to vector<2x256xbf16>
    %c8 = arith.constant 8 : index
    %c0_57 = arith.constant 0 : index
    %c0_58 = arith.constant 0 : index
    %104 = vector.load %arg6[%c8, %c0_57, %c0_58] : memref<10x256x150xbf16, #tpu.memory_space<vmem>>, vector<1x256x150xbf16>
    %105 = vector.shape_cast %104 : vector<1x256x150xbf16> to vector<256x150xbf16>
    %cst_59 = arith.constant dense<0.000000e+00> : vector<2x150xf32>
    %106 = tpu.matmul %103, %105, %cst_59 {dimension_numbers = #tpu.dot_dimension_numbers<[1], [0], [0], [1], [0, 0, 1, 1], [], []>} : vector<2x256xbf16>, vector<256x150xbf16>, vector<2x150xf32> -> vector<2x150xf32>
    %107 = arith.addf %101, %106 : vector<2x150xf32>
    %108 = vector.extract_strided_slice %52 {offsets = [0, 9, 0], sizes = [2, 1, 256], strides = [1, 1, 1]} : vector<2x10x256xbf16> to vector<2x1x256xbf16>
    %109 = vector.shape_cast %108 : vector<2x1x256xbf16> to vector<2x256xbf16>
    %c9 = arith.constant 9 : index
    %c0_60 = arith.constant 0 : index
    %c0_61 = arith.constant 0 : index
    %110 = vector.load %arg6[%c9, %c0_60, %c0_61] : memref<10x256x150xbf16, #tpu.memory_space<vmem>>, vector<1x256x150xbf16>
    %111 = vector.shape_cast %110 : vector<1x256x150xbf16> to vector<256x150xbf16>
    %cst_62 = arith.constant dense<0.000000e+00> : vector<2x150xf32>
    %112 = tpu.matmul %109, %111, %cst_62 {dimension_numbers = #tpu.dot_dimension_numbers<[1], [0], [0], [1], [0, 0, 1, 1], [], []>} : vector<2x256xbf16>, vector<256x150xbf16>, vector<2x150xf32> -> vector<2x150xf32>
    %113 = arith.addf %107, %112 : vector<2x150xf32>
    %c0_63 = arith.constant 0 : index
    %c0_64 = arith.constant 0 : index
    %114 = vector.load %arg7[%c0_63, %c0_64] : memref<1x150xf32, #tpu.memory_space<vmem>>, vector<1x150xf32>
    %115 = vector.broadcast %114 : vector<1x150xf32> to vector<2x150xf32>
    %116 = arith.addf %113, %115 : vector<2x150xf32>
    %cst_65 = arith.constant 0.000000e+00 : f32
    %117 = vector.broadcast %cst_65 : f32 to vector<2x150xf32>
    %118 = arith.maximumf %116, %117 : vector<2x150xf32>
    %119 = arith.truncf %118 : vector<2x150xf32> to vector<2x150xbf16>
    %c0_66 = arith.constant 0 : index
    %c0_67 = arith.constant 0 : index
    %120 = vector.load %arg8[%c0_66, %c0_67] : memref<150x90xbf16, #tpu.memory_space<vmem>>, vector<150x90xbf16>
    %cst_68 = arith.constant dense<0.000000e+00> : vector<2x90xf32>
    %121 = tpu.matmul %119, %120, %cst_68 {dimension_numbers = #tpu.dot_dimension_numbers<[1], [0], [0], [1], [0, 0, 1, 1], [], []>} : vector<2x150xbf16>, vector<150x90xbf16>, vector<2x90xf32> -> vector<2x90xf32>
    %c0_69 = arith.constant 0 : index
    %c0_70 = arith.constant 0 : index
    %122 = vector.load %arg9[%c0_69, %c0_70] : memref<1x90xf32, #tpu.memory_space<vmem>>, vector<1x90xf32>
    %123 = vector.broadcast %122 : vector<1x90xf32> to vector<2x90xf32>
    %124 = arith.addf %121, %123 : vector<2x90xf32>
    %cst_71 = arith.constant 0.000000e+00 : f32
    %125 = vector.broadcast %cst_71 : f32 to vector<2x90xf32>
    %126 = arith.maximumf %124, %125 : vector<2x90xf32>
    %127 = arith.truncf %126 : vector<2x90xf32> to vector<2x90xbf16>
    %c0_72 = arith.constant 0 : index
    %c0_73 = arith.constant 0 : index
    %128 = vector.load %arg10[%c0_72, %c0_73] : memref<90x30xbf16, #tpu.memory_space<vmem>>, vector<90x30xbf16>
    %cst_74 = arith.constant dense<0.000000e+00> : vector<2x30xf32>
    %129 = tpu.matmul %127, %128, %cst_74 {dimension_numbers = #tpu.dot_dimension_numbers<[1], [0], [0], [1], [0, 0, 1, 1], [], []>} : vector<2x90xbf16>, vector<90x30xbf16>, vector<2x30xf32> -> vector<2x30xf32>
    %c0_75 = arith.constant 0 : index
    %c0_76 = arith.constant 0 : index
    %130 = vector.load %arg11[%c0_75, %c0_76] : memref<1x30xf32, #tpu.memory_space<vmem>>, vector<1x30xf32>
    %131 = vector.broadcast %130 : vector<1x30xf32> to vector<2x30xf32>
    %132 = arith.addf %129, %131 : vector<2x30xf32>
    %cst_77 = arith.constant 0.000000e+00 : f32
    %133 = vector.broadcast %cst_77 : f32 to vector<2x30xf32>
    %134 = arith.maximumf %132, %133 : vector<2x30xf32>
    %135 = arith.truncf %134 : vector<2x30xf32> to vector<2x30xbf16>
    %c0_78 = arith.constant 0 : index
    %c0_79 = arith.constant 0 : index
    %136 = vector.load %arg12[%c0_78, %c0_79] : memref<30x128xbf16, #tpu.memory_space<vmem>>, vector<30x128xbf16>
    %cst_80 = arith.constant dense<0.000000e+00> : vector<2x128xf32>
    %137 = tpu.matmul %135, %136, %cst_80 {dimension_numbers = #tpu.dot_dimension_numbers<[1], [0], [0], [1], [0, 0, 1, 1], [], []>} : vector<2x30xbf16>, vector<30x128xbf16>, vector<2x128xf32> -> vector<2x128xf32>
    %c0_81 = arith.constant 0 : index
    %c0_82 = arith.constant 0 : index
    %138 = vector.load %arg13[%c0_81, %c0_82] : memref<1x128xf32, #tpu.memory_space<vmem>>, vector<1x128xf32>
    %139 = vector.broadcast %138 : vector<1x128xf32> to vector<2x128xf32>
    %140 = arith.addf %137, %139 : vector<2x128xf32>
    %c0_83 = arith.constant 0 : index
    %c0_84 = arith.constant 0 : index
    %141 = vector.load %arg14[%c0_83, %c0_84] : memref<2x128xf32, #tpu.memory_space<vmem>>, vector<2x128xf32>
    tpu.vector_store %arg14[%c0_83, %c0_84], %140 {strides = array<i32>} : memref<2x128xf32, #tpu.memory_space<vmem>>, vector<2x128xf32>,
    return
  }
  func.func @transform_0(%arg0: i32) -> (i32, i32) {
    %c0_i32 = arith.constant 0 : i32
    %c0_i32_0 = arith.constant 0 : i32
    return %arg0, %c0_i32 : i32, i32
  }
  func.func @transform_1(%arg0: i32) -> (i32, i32) {
    %c0_i32 = arith.constant 0 : i32
    %c0_i32_0 = arith.constant 0 : i32
    %c0_i32_1 = arith.constant 0 : i32
    return %c0_i32, %c0_i32_0 : i32, i32
  }
  func.func @transform_2(%arg0: i32) -> (i32, i32) {
    %c0_i32 = arith.constant 0 : i32
    %c0_i32_0 = arith.constant 0 : i32
    %c0_i32_1 = arith.constant 0 : i32
    return %c0_i32, %c0_i32_0 : i32, i32
  }
  func.func @transform_3(%arg0: i32) -> (i32, i32, i32) {
    %c0_i32 = arith.constant 0 : i32
    %c0_i32_0 = arith.constant 0 : i32
    %c0_i32_1 = arith.constant 0 : i32
    %c0_i32_2 = arith.constant 0 : i32
    return %c0_i32, %c0_i32_0, %c0_i32_1 : i32, i32, i32
  }
  func.func @transform_4(%arg0: i32) -> (i32, i32) {
    %c0_i32 = arith.constant 0 : i32
    %c0_i32_0 = arith.constant 0 : i32
    %c0_i32_1 = arith.constant 0 : i32
    return %c0_i32, %c0_i32_0 : i32, i32
  }
  func.func @transform_5(%arg0: i32) -> (i32, i32, i32) {
    %c0_i32 = arith.constant 0 : i32
    %c0_i32_0 = arith.constant 0 : i32
    %c0_i32_1 = arith.constant 0 : i32
    %c0_i32_2 = arith.constant 0 : i32
    return %c0_i32, %c0_i32_0, %c0_i32_1 : i32, i32, i32
  }
  func.func @transform_6(%arg0: i32) -> (i32, i32) {
    %c0_i32 = arith.constant 0 : i32
    %c0_i32_0 = arith.constant 0 : i32
    %c0_i32_1 = arith.constant 0 : i32
    return %c0_i32, %c0_i32_0 : i32, i32
  }
  func.func @transform_7(%arg0: i32) -> (i32, i32) {
    %c0_i32 = arith.constant 0 : i32
    %c0_i32_0 = arith.constant 0 : i32
    %c0_i32_1 = arith.constant 0 : i32
    return %c0_i32, %c0_i32_0 : i32, i32
  }
  func.func @transform_8(%arg0: i32) -> (i32, i32) {
    %c0_i32 = arith.constant 0 : i32
    %c0_i32_0 = arith.constant 0 : i32
    %c0_i32_1 = arith.constant 0 : i32
    return %c0_i32, %c0_i32_0 : i32, i32
  }
  func.func @transform_9(%arg0: i32) -> (i32, i32) {
    %c0_i32 = arith.constant 0 : i32
    %c0_i32_0 = arith.constant 0 : i32
    %c0_i32_1 = arith.constant 0 : i32
    return %c0_i32, %c0_i32_0 : i32, i32
  }
  func.func @transform_10(%arg0: i32) -> (i32, i32) {
    %c0_i32 = arith.constant 0 : i32
    %c0_i32_0 = arith.constant 0 : i32
    %c0_i32_1 = arith.constant 0 : i32
    return %c0_i32, %c0_i32_0 : i32, i32
  }
  func.func @transform_11(%arg0: i32) -> (i32, i32) {
    %c0_i32 = arith.constant 0 : i32
    %c0_i32_0 = arith.constant 0 : i32
    %c0_i32_1 = arith.constant 0 : i32
    return %c0_i32, %c0_i32_0 : i32, i32
  }
  func.func @transform_12(%arg0: i32) -> (i32, i32) {
    %c0_i32 = arith.constant 0 : i32
    %c0_i32_0 = arith.constant 0 : i32
    %c0_i32_1 = arith.constant 0 : i32
    return %c0_i32, %c0_i32_0 : i32, i32
  }
  func.func @transform_13(%arg0: i32) -> (i32, i32) {
    %c0_i32 = arith.constant 0 : i32
    %c0_i32_0 = arith.constant 0 : i32
    return %arg0, %c0_i32 : i32, i32
  }
}

</mosaic_0001>

<llo_original>
// kernel: net_forward_pallas.1
$region0: #{net_forward_pallas.1}
  #allocation0 [shape = 'u32[]', space=smem, size = 0x4, offset = 0x4, fixed_abs, tag = 'smem constant byte address 0x4 - core index']
  #allocation1 [shape = 'u32[144,128]{1,0:T(1,128)}', space=vmem, size = 0x12000, scoped, tag = 'internal scratch']
  %s0 = inlined_call_operand.vmem [shape: bf16[56,480], index: 0, kind: input, shape index: {}]
  %s1 = inlined_call_operand.vmem [shape: bf16[480,256], index: 1, kind: input, shape index: {}]
  %s2 = inlined_call_operand.vmem [shape: f32[1,256], index: 2, kind: input, shape index: {}]
  %s3 = inlined_call_operand.vmem [shape: bf16[5,128,256], index: 3, kind: input, shape index: {}]
  %s4 = inlined_call_operand.vmem [shape: f32[1,256], index: 4, kind: input, shape index: {}]
  %s5 = inlined_call_operand.vmem [shape: bf16[10,256,150], index: 5, kind: input, shape index: {}]
  %s6 = inlined_call_operand.vmem [shape: f32[1,150], index: 6, kind: input, shape index: {}]
  %s7 = inlined_call_operand.vmem [shape: bf16[150,90], index: 7, kind: input, shape index: {}]
  %s8 = inlined_call_operand.vmem [shape: f32[1,90], index: 8, kind: input, shape index: {}]
  %s9 = inlined_call_operand.vmem [shape: bf16[90,30], index: 9, kind: input, shape index: {}]
  %s10 = inlined_call_operand.vmem [shape: f32[1,30], index: 10, kind: input, shape index: {}]
  %s11 = inlined_call_operand.vmem [shape: bf16[30,128], index: 11, kind: input, shape index: {}]
  %s12 = inlined_call_operand.vmem [shape: f32[1,128], index: 12, kind: input, shape index: {}]
  %s13 = inlined_call_operand.hbm [shape: f32[2,128], index: 13, kind: output, shape index: {}]
  %s14 = sld [smem:[#allocation0]]
  $region62: #{net_forward_pallas.1} parent=0
    _
  %s16 = ssub.s32 1, %s14
  %s17 = scalar_select 0, %s16, %s14
  $region1: #{net_forward_pallas.1} parent=0
    #allocation2 [shape = 'u8[1024]{0}', space=vmem, size = 0x400, scoped, tag = 'output window, operand 0, single buffered']
    #allocation3 [shape = 's32[1]{0}', space=sflag, size = 0x4, scoped, tag = 'scoped memory for net_forward_pallas.1']
    %18 = vsyncpa [#allocation3], 0
    // Predicated region
    $region2: #{net_forward_pallas.1} parent=1 // pred_check
      _
    $region3: #{net_forward_pallas.1} parent=1 // pred_check_branch
      %20 = sbr.rel (0) target = $region5
    $region4: #{net_forward_pallas.1} parent=1 // pred_region
      _
    $region5: #{net_forward_pallas.1} parent=1 // pred_fallthru
      _
    // Predicated region
    $region6: #{net_forward_pallas.1} parent=1 // pred_check
      _
    $region7: #{net_forward_pallas.1} parent=1 // pred_check_branch
      %22 = sbr.rel (0) target = $region9
    $region8: #{net_forward_pallas.1} parent=1 // pred_region
      _
    $region9: #{net_forward_pallas.1} parent=1 // pred_fallthru
      _
    // Predicated region
    $region10: #{net_forward_pallas.1} parent=1 // pred_check
      _
    $region11: #{net_forward_pallas.1} parent=1 // pred_check_branch
      %24 = sbr.rel (0) target = $region13
    $region12: #{net_forward_pallas.1} parent=1 // pred_region
      _
    $region13: #{net_forward_pallas.1} parent=1 // pred_fallthru
      _
    // Predicated region
    $region14: #{net_forward_pallas.1} parent=1 // pred_check
      _
    $region15: #{net_forward_pallas.1} parent=1 // pred_check_branch
      %26 = sbr.rel (0) target = $region17
    $region16: #{net_forward_pallas.1} parent=1 // pred_region
      _
    $region17: #{net_forward_pallas.1} parent=1 // pred_fallthru
      _
    // Predicated region
    $region18: #{net_forward_pallas.1} parent=1 // pred_check
      _
    $region19: #{net_forward_pallas.1} parent=1 // pred_check_branch
      %28 = sbr.rel (0) target = $region21
    $region20: #{net_forward_pallas.1} parent=1 // pred_region
      _
    $region21: #{net_forward_pallas.1} parent=1 // pred_fallthru
      _
    // Predicated region
    $region22: #{net_forward_pallas.1} parent=1 // pred_check
      _
    $region23: #{net_forward_pallas.1} parent=1 // pred_check_branch
      %30 = sbr.rel (0) target = $region25
    $region24: #{net_forward_pallas.1} parent=1 // pred_region
      _
    $region25: #{net_forward_pallas.1} parent=1 // pred_fallthru
      _
    // Predicated region
    $region26: #{net_forward_pallas.1} parent=1 // pred_check
      _
    $region27: #{net_forward_pallas.1} parent=1 // pred_check_branch
      %32 = sbr.rel (0) target = $region29
    $region28: #{net_forward_pallas.1} parent=1 // pred_region
      _
    $region29: #{net_forward_pallas.1} parent=1 // pred_fallthru
      _
    // Predicated region
    $region30: #{net_forward_pallas.1} parent=1 // pred_check
      _
    $region31: #{net_forward_pallas.1} parent=1 // pred_check_branch
      %34 = sbr.rel (0) target = $region33
    $region32: #{net_forward_pallas.1} parent=1 // pred_region
      _
    $region33: #{net_forward_pallas.1} parent=1 // pred_fallthru
      _
    // Predicated region
    $region34: #{net_forward_pallas.1} parent=1 // pred_check
      _
    $region35: #{net_forward_pallas.1} parent=1 // pred_check_branch
      %36 = sbr.rel (0) target = $region37
    $region36: #{net_forward_pallas.1} parent=1 // pred_region
      _
    $region37: #{net_forward_pallas.1} parent=1 // pred_fallthru
      _
    // Predicated region
    $region38: #{net_forward_pallas.1} parent=1 // pred_check
      _
    $region39: #{net_forward_pallas.1} parent=1 // pred_check_branch
      %38 = sbr.rel (0) target = $region41
    $region40: #{net_forward_pallas.1} parent=1 // pred_region
      _
    $region41: #{net_forward_pallas.1} parent=1 // pred_fallthru
      _
    // Predicated region
    $region42: #{net_forward_pallas.1} parent=1 // pred_check
      _
    $region43: #{net_forward_pallas.1} parent=1 // pred_check_branch
      %40 = sbr.rel (0) target = $region45
    $region44: #{net_forward_pallas.1} parent=1 // pred_region
      _
    $region45: #{net_forward_pallas.1} parent=1 // pred_fallthru
      _
    // Predicated region
    $region46: #{net_forward_pallas.1} parent=1 // pred_check
      _
    $region47: #{net_forward_pallas.1} parent=1 // pred_check_branch
      %42 = sbr.rel (0) target = $region49
    $region48: #{net_forward_pallas.1} parent=1 // pred_region
      _
    $region49: #{net_forward_pallas.1} parent=1 // pred_fallthru
      _
    // Predicated region
    $region50: #{net_forward_pallas.1} parent=1 // pred_check
      _
    $region51: #{net_forward_pallas.1} parent=1 // pred_check_branch
      %44 = sbr.rel (0) target = $region53
    $region52: #{net_forward_pallas.1} parent=1 // pred_region
      _
    $region53: #{net_forward_pallas.1} parent=1 // pred_fallthru
      _
    %v46 = vld [vmem:[%s0] sm:$0xff]
    %v47 = vld [vmem:[%s0 + $0x8] sm:$0xff]
    %v48 = vld [vmem:[%s0 + $0x10] sm:$0xff]
    %v49 = vld [vmem:[%s0 + $0x18] sm:$0xff]
    %v50 = vld [vmem:[%s0 + $0x20] sm:$0xff]
    %v51 = vld [vmem:[%s0 + $0x28] sm:$0xff]
    %v52 = vld [vmem:[%s0 + $0x30] sm:$0xff]
    %v53 = vld [vmem:[%s0 + $0x38] sm:$0xff]
    %v54 = vld [vmem:[%s0 + $0x40] sm:$0xff]
    %v55 = vld [vmem:[%s0 + $0x48] sm:$0xff]
    %v56 = vld [vmem:[%s0 + $0x50] sm:$0xff]
    %v57 = vld [vmem:[%s0 + $0x58] sm:$0xff]
    %v58 = vld [vmem:[%s0 + $0x60] sm:$0xff]
    %v59 = vld [vmem:[%s0 + $0x68] sm:$0xff]
    %v60 = vld [vmem:[%s1] sm:$0xff]
    %v61 = vld [vmem:[%s1 + $0x8] sm:$0xff]
    %v62 = vld [vmem:[%s1 + $0x10] sm:$0xff]
    %v63 = vld [vmem:[%s1 + $0x18] sm:$0xff]
    %v64 = vld [vmem:[%s1 + $0x20] sm:$0xff]
    %v65 = vld [vmem:[%s1 + $0x28] sm:$0xff]
    %v66 = vld [vmem:[%s1 + $0x30] sm:$0xff]
    %v67 = vld [vmem:[%s1 + $0x38] sm:$0xff]
    %v68 = vld [vmem:[%s1 + $0x40] sm:$0xff]
    %v69 = vld [vmem:[%s1 + $0x48] sm:$0xff]
    %v70 = vld [vmem:[%s1 + $0x50] sm:$0xff]
    %v71 = vld [vmem:[%s1 + $0x58] sm:$0xff]
    %v72 = vld [vmem:[%s1 + $0x60] sm:$0xff]
    %v73 = vld [vmem:[%s1 + $0x68] sm:$0xff]
    %v74 = vld [vmem:[%s1 + $0x70] sm:$0xff]
    %v75 = vld [vmem:[%s1 + $0x78] sm:$0xff]
    %v76 = vld [vmem:[%s1 + $0x80] sm:$0xff]
    %v77 = vld [vmem:[%s1 + $0x88] sm:$0xff]
    %v78 = vld [vmem:[%s1 + $0x90] sm:$0xff]
    %v79 = vld [vmem:[%s1 + $0x98] sm:$0xff]
    %v80 = vld [vmem:[%s1 + $0xa0] sm:$0xff]
    %v81 = vld [vmem:[%s1 + $0xa8] sm:$0xff]
    %v82 = vld [vmem:[%s1 + $0xb0] sm:$0xff]
    %v83 = vld [vmem:[%s1 + $0xb8] sm:$0xff]
    %v84 = vld [vmem:[%s1 + $0xc0] sm:$0xff]
    %v85 = vld [vmem:[%s1 + $0xc8] sm:$0xff]
    %v86 = vld [vmem:[%s1 + $0xd0] sm:$0xff]
    %v87 = vld [vmem:[%s1 + $0xd8] sm:$0xff]
    %v88 = vld [vmem:[%s1 + $0xe0] sm:$0xff]
    %v89 = vld [vmem:[%s1 + $0xe8] sm:$0xff]
    %v90 = vld [vmem:[%s1 + $0xf0] sm:$0xff]
    %v91 = vld [vmem:[%s1 + $0xf8] sm:$0xff]
    %v92 = vld [vmem:[%s1 + $0x100] sm:$0xff]
    %v93 = vld [vmem:[%s1 + $0x108] sm:$0xff]
    %v94 = vld [vmem:[%s1 + $0x110] sm:$0xff]
    %v95 = vld [vmem:[%s1 + $0x118] sm:$0xff]
    %v96 = vld [vmem:[%s1 + $0x120] sm:$0xff]
    %v97 = vld [vmem:[%s1 + $0x128] sm:$0xff]
    %v98 = vld [vmem:[%s1 + $0x130] sm:$0xff]
    %v99 = vld [vmem:[%s1 + $0x138] sm:$0xff]
    %v100 = vld [vmem:[%s1 + $0x140] sm:$0xff]
    %v101 = vld [vmem:[%s1 + $0x148] sm:$0xff]
    %v102 = vld [vmem:[%s1 + $0x150] sm:$0xff]
    %v103 = vld [vmem:[%s1 + $0x158] sm:$0xff]
    %v104 = vld [vmem:[%s1 + $0x160] sm:$0xff]
    %v105 = vld [vmem:[%s1 + $0x168] sm:$0xff]
    %v106 = vld [vmem:[%s1 + $0x170] sm:$0xff]
    %v107 = vld [vmem:[%s1 + $0x178] sm:$0xff]
    %v108 = vld [vmem:[%s1 + $0x180] sm:$0xff]
    %v109 = vld [vmem:[%s1 + $0x188] sm:$0xff]
    %v110 = vld [vmem:[%s1 + $0x190] sm:$0xff]
    %v111 = vld [vmem:[%s1 + $0x198] sm:$0xff]
    %v112 = vld [vmem:[%s1 + $0x1a0] sm:$0xff]
    %v113 = vld [vmem:[%s1 + $0x1a8] sm:$0xff]
    %v114 = vld [vmem:[%s1 + $0x1b0] sm:$0xff]
    %v115 = vld [vmem:[%s1 + $0x1b8] sm:$0xff]
    %v116 = vld [vmem:[%s1 + $0x1c0] sm:$0xff]
    %v117 = vld [vmem:[%s1 + $0x1c8] sm:$0xff]
    %v118 = vld [vmem:[%s1 + $0x1d0] sm:$0xff]
    %v119 = vld [vmem:[%s1 + $0x1d8] sm:$0xff]
    %v120 = vld [vmem:[%s2] sm:$0x3]
    %v122 = vlaneseq
    %v123 = vshrl.u32 %v122, 7
    %v124 = vsub.s32 0, %v123
    %v125 = vrot.slane %v120, %v124
    %v126 = vlaneseq
    %v127 = vshrl.u32 %v126, 7
    %v128 = vsub.s32 1, %v127
    %v129 = vrot.slane %v120, %v128
    %v146 = vunpack.c.l.b16 %v46
    %v147 = vunpack.c.h.b16 %v46
    %v148 = vunpack.c.l.b16 %v47
    %v149 = vunpack.c.h.b16 %v47
    %v150 = vunpack.c.l.b16 %v48
    %v151 = vunpack.c.h.b16 %v48
    %v152 = vunpack.c.l.b16 %v49
    %v153 = vunpack.c.h.b16 %v49
    %v154 = vunpack.c.l.b16 %v50
    %v155 = vunpack.c.h.b16 %v50
    %v156 = vunpack.c.l.b16 %v51
    %v157 = vunpack.c.h.b16 %v51
    %v158 = vunpack.c.l.b16 %v52
    %v159 = vunpack.c.h.b16 %v52
    %v160 = vunpack.c.l.b16 %v53
    %v161 = vunpack.c.h.b16 %v53
    %v162 = vunpack.c.l.b16 %v54
    %v163 = vunpack.c.h.b16 %v54
    %v164 = vunpack.c.l.b16 %v55
    %v165 = vunpack.c.h.b16 %v55
    %v166 = vunpack.c.l.b16 %v56
    %v167 = vunpack.c.h.b16 %v56
    %v168 = vunpack.c.l.b16 %v57
    %v169 = vunpack.c.h.b16 %v57
    %v170 = vunpack.c.l.b16 %v58
    %v171 = vunpack.c.h.b16 %v58
    %v172 = vunpack.c.l.b16 %v59
    %v173 = vunpack.c.h.b16 %v59
    %v174 = vpack.c.b16 %v150, %v146
    %v175 = vpack.c.b16 %v151, %v147
    %v176 = vpack.c.b16 %v152, %v148
    %v177 = vpack.c.b16 %v153, %v149
    %v178 = vpack.c.b16 %v158, %v154
    %v179 = vpack.c.b16 %v159, %v155
    %v180 = vpack.c.b16 %v160, %v156
    %v181 = vpack.c.b16 %v161, %v157
    %v182 = vpack.c.b16 %v166, %v162
    %v183 = vpack.c.b16 %v167, %v163
    %v184 = vpack.c.b16 %v168, %v164
    %v185 = vpack.c.b16 %v169, %v165
    %v186 = vpack.c.b16 %v170, %v170
    %v187 = vpack.c.b16 %v171, %v171
    %v188 = vpack.c.b16 %v172, %v172
    %v189 = vpack.c.b16 %v173, %v173
    %v262 = vunpack.c.l.b16 %v60
    %v263 = vunpack.c.h.b16 %v60
    %v264 = vunpack.c.l.b16 %v61
    %v265 = vunpack.c.h.b16 %v61
    %v266 = vunpack.c.l.b16 %v62
    %v267 = vunpack.c.h.b16 %v62
    %v268 = vunpack.c.l.b16 %v63
    %v269 = vunpack.c.h.b16 %v63
    %v270 = vunpack.c.l.b16 %v64
    %v271 = vunpack.c.h.b16 %v64
    %v272 = vunpack.c.l.b16 %v65
    %v273 = vunpack.c.h.b16 %v65
    %v274 = vunpack.c.l.b16 %v66
    %v275 = vunpack.c.h.b16 %v66
    %v276 = vunpack.c.l.b16 %v67
    %v277 = vunpack.c.h.b16 %v67
    %v278 = vunpack.c.l.b16 %v68
    %v279 = vunpack.c.h.b16 %v68
    %v280 = vunpack.c.l.b16 %v69
    %v281 = vunpack.c.h.b16 %v69
    %v282 = vunpack.c.l.b16 %v70
    %v283 = vunpack.c.h.b16 %v70
    %v284 = vunpack.c.l.b16 %v71
    %v285 = vunpack.c.h.b16 %v71
    %v286 = vunpack.c.l.b16 %v72
    %v287 = vunpack.c.h.b16 %v72
    %v288 = vunpack.c.l.b16 %v73
    %v289 = vunpack.c.h.b16 %v73
    %v290 = vunpack.c.l.b16 %v74
    %v291 = vunpack.c.h.b16 %v74
    %v292 = vunpack.c.l.b16 %v75
    %v293 = vunpack.c.h.b16 %v75
    %v294 = vunpack.c.l.b16 %v76
    %v295 = vunpack.c.h.b16 %v76
    %v296 = vunpack.c.l.b16 %v77
    %v297 = vunpack.c.h.b16 %v77
    %v298 = vunpack.c.l.b16 %v78
    %v299 = vunpack.c.h.b16 %v78
    %v300 = vunpack.c.l.b16 %v79
    %v301 = vunpack.c.h.b16 %v79
    %v302 = vunpack.c.l.b16 %v80
    %v303 = vunpack.c.h.b16 %v80
    %v304 = vunpack.c.l.b16 %v81
    %v305 = vunpack.c.h.b16 %v81
    %v306 = vunpack.c.l.b16 %v82
    %v307 = vunpack.c.h.b16 %v82
    %v308 = vunpack.c.l.b16 %v83
    %v309 = vunpack.c.h.b16 %v83
    %v310 = vunpack.c.l.b16 %v84
    %v311 = vunpack.c.h.b16 %v84
    %v312 = vunpack.c.l.b16 %v85
    %v313 = vunpack.c.h.b16 %v85
    %v314 = vunpack.c.l.b16 %v86
    %v315 = vunpack.c.h.b16 %v86
    %v316 = vunpack.c.l.b16 %v87
    %v317 = vunpack.c.h.b16 %v87
    %v318 = vunpack.c.l.b16 %v88
    %v319 = vunpack.c.h.b16 %v88
    %v320 = vunpack.c.l.b16 %v89
    %v321 = vunpack.c.h.b16 %v89
    %v322 = vunpack.c.l.b16 %v90
    %v323 = vunpack.c.h.b16 %v90
    %v324 = vunpack.c.l.b16 %v91
    %v325 = vunpack.c.h.b16 %v91
    %v326 = vunpack.c.l.b16 %v92
    %v327 = vunpack.c.h.b16 %v92
    %v328 = vunpack.c.l.b16 %v93
    %v329 = vunpack.c.h.b16 %v93
    %v330 = vunpack.c.l.b16 %v94
    %v331 = vunpack.c.h.b16 %v94
    %v332 = vunpack.c.l.b16 %v95
    %v333 = vunpack.c.h.b16 %v95
    %v334 = vunpack.c.l.b16 %v96
    %v335 = vunpack.c.h.b16 %v96
    %v336 = vunpack.c.l.b16 %v97
    %v337 = vunpack.c.h.b16 %v97
    %v338 = vunpack.c.l.b16 %v98
    %v339 = vunpack.c.h.b16 %v98
    %v340 = vunpack.c.l.b16 %v99
    %v341 = vunpack.c.h.b16 %v99
    %v342 = vunpack.c.l.b16 %v100
    %v343 = vunpack.c.h.b16 %v100
    %v344 = vunpack.c.l.b16 %v101
    %v345 = vunpack.c.h.b16 %v101
    %v346 = vunpack.c.l.b16 %v102
    %v347 = vunpack.c.h.b16 %v102
    %v348 = vunpack.c.l.b16 %v103
    %v349 = vunpack.c.h.b16 %v103
    %v350 = vunpack.c.l.b16 %v104
    %v351 = vunpack.c.h.b16 %v104
    %v352 = vunpack.c.l.b16 %v105
    %v353 = vunpack.c.h.b16 %v105
    %v354 = vunpack.c.l.b16 %v106
    %v355 = vunpack.c.h.b16 %v106
    %v356 = vunpack.c.l.b16 %v107
    %v357 = vunpack.c.h.b16 %v107
    %v358 = vunpack.c.l.b16 %v108
    %v359 = vunpack.c.h.b16 %v108
    %v360 = vunpack.c.l.b16 %v109
    %v361 = vunpack.c.h.b16 %v109
    %v362 = vunpack.c.l.b16 %v110
    %v363 = vunpack.c.h.b16 %v110
    %v364 = vunpack.c.l.b16 %v111
    %v365 = vunpack.c.h.b16 %v111
    %v366 = vunpack.c.l.b16 %v112
    %v367 = vunpack.c.h.b16 %v112
    %v368 = vunpack.c.l.b16 %v113
    %v369 = vunpack.c.h.b16 %v113
    %v370 = vunpack.c.l.b16 %v114
    %v371 = vunpack.c.h.b16 %v114
    %v372 = vunpack.c.l.b16 %v115
    %v373 = vunpack.c.h.b16 %v115
    %v374 = vunpack.c.l.b16 %v116
    %v375 = vunpack.c.h.b16 %v116
    %v376 = vunpack.c.l.b16 %v117
    %v377 = vunpack.c.h.b16 %v117
    %v378 = vunpack.c.l.b16 %v118
    %v379 = vunpack.c.h.b16 %v118
    %v380 = vunpack.c.l.b16 %v119
    %v381 = vunpack.c.h.b16 %v119
    %v382 = vpack.c.b16 %v264, %v262
    %v383 = vpack.c.b16 %v265, %v263
    %v384 = vpack.c.b16 %v268, %v266
    %v385 = vpack.c.b16 %v269, %v267
    %v386 = vpack.c.b16 %v272, %v270
    %v387 = vpack.c.b16 %v273, %v271
    %v388 = vpack.c.b16 %v276, %v274
    %v389 = vpack.c.b16 %v277, %v275
    %v390 = vpack.c.b16 %v280, %v278
    %v391 = vpack.c.b16 %v281, %v279
    %v392 = vpack.c.b16 %v284, %v282
    %v393 = vpack.c.b16 %v285, %v283
    %v394 = vpack.c.b16 %v288, %v286
    %v395 = vpack.c.b16 %v289, %v287
    %v396 = vpack.c.b16 %v292, %v290
    %v397 = vpack.c.b16 %v293, %v291
    %v398 = vpack.c.b16 %v296, %v294
    %v399 = vpack.c.b16 %v297, %v295
    %v400 = vpack.c.b16 %v300, %v298
    %v401 = vpack.c.b16 %v301, %v299
    %v402 = vpack.c.b16 %v304, %v302
    %v403 = vpack.c.b16 %v305, %v303
    %v404 = vpack.c.b16 %v308, %v306
    %v405 = vpack.c.b16 %v309, %v307
    %v406 = vpack.c.b16 %v312, %v310
    %v407 = vpack.c.b16 %v313, %v311
    %v408 = vpack.c.b16 %v316, %v314
    %v409 = vpack.c.b16 %v317, %v315
    %v410 = vpack.c.b16 %v320, %v318
    %v411 = vpack.c.b16 %v321, %v319
    %v412 = vpack.c.b16 %v324, %v322
    %v413 = vpack.c.b16 %v325, %v323
    %v414 = vpack.c.b16 %v328, %v326
    %v415 = vpack.c.b16 %v329, %v327
    %v416 = vpack.c.b16 %v332, %v330
    %v417 = vpack.c.b16 %v333, %v331
    %v418 = vpack.c.b16 %v336, %v334
    %v419 = vpack.c.b16 %v337, %v335
    %v420 = vpack.c.b16 %v340, %v338
    %v421 = vpack.c.b16 %v341, %v339
    %v422 = vpack.c.b16 %v344, %v342
    %v423 = vpack.c.b16 %v345, %v343
    %v424 = vpack.c.b16 %v348, %v346
    %v425 = vpack.c.b16 %v349, %v347
    %v426 = vpack.c.b16 %v352, %v350
    %v427 = vpack.c.b16 %v353, %v351
    %v428 = vpack.c.b16 %v356, %v354
    %v429 = vpack.c.b16 %v357, %v355
    %v430 = vpack.c.b16 %v360, %v358
    %v431 = vpack.c.b16 %v361, %v359
    %v432 = vpack.c.b16 %v364, %v362
    %v433 = vpack.c.b16 %v365, %v363
    %v434 = vpack.c.b16 %v368, %v366
    %v435 = vpack.c.b16 %v369, %v367
    %v436 = vpack.c.b16 %v372, %v370
    %v437 = vpack.c.b16 %v373, %v371
    %v438 = vpack.c.b16 %v376, %v374
    %v439 = vpack.c.b16 %v377, %v375
    %v440 = vpack.c.b16 %v380, %v378
    %v441 = vpack.c.b16 %v381, %v379
    %vm502 = vcmask 785408
    %v504 = vsel %vm502, %v177, 0
    %v507 = vsel %vm502, %v181, 0
    %v510 = vsel %vm502, %v185, 0
    %v513 = vsel %vm502, %v189, 0
    %515 = vmatprep.subr.bf16.mxu0 %v397
    %516 = vmatpush1.bf16.msra.mxu0 %v396
    %517 = vmatprep.subr.bf16.mxu0 %v395
    %518 = vmatpush1.bf16.msra.mxu0 %v394
    %519 = vmatprep.subr.bf16.mxu0 %v393
    %520 = vmatpush1.bf16.msra.mxu0 %v392
    %521 = vmatprep.subr.bf16.mxu0 %v391
    %522 = vmatpush1.bf16.msra.mxu0 %v390
    %523 = vmatprep.subr.bf16.mxu0 %v389
    %524 = vmatpush1.bf16.msra.mxu0 %v388
    %525 = vmatprep.subr.bf16.mxu0 %v387
    %526 = vmatpush1.bf16.msra.mxu0 %v386
    %527 = vmatprep.subr.bf16.mxu0 %v385
    %528 = vmatpush1.bf16.msra.mxu0 %v384
    %529 = vmatprep.subr.bf16.mxu0 %v383
    %530 = vmatpush1.bf16.msra.mxu0 %v382
    %531 = vmatprep.subr.bf16.mxu0 %v413
    %532 = vmatpush2.bf16.msra.mxu0 %v412
    %533 = vmatprep.subr.bf16.mxu0 %v411
    %534 = vmatpush2.bf16.msra.mxu0 %v410
    %535 = vmatprep.subr.bf16.mxu0 %v409
    %536 = vmatpush2.bf16.msra.mxu0 %v408
    %537 = vmatprep.subr.bf16.mxu0 %v407
    %538 = vmatpush2.bf16.msra.mxu0 %v406
    %539 = vmatprep.subr.bf16.mxu0 %v405
    %540 = vmatpush2.bf16.msra.mxu0 %v404
    %541 = vmatprep.subr.bf16.mxu0 %v403
    %542 = vmatpush2.bf16.msra.mxu0 %v402
    %543 = vmatprep.subr.bf16.mxu0 %v401
    %544 = vmatpush2.bf16.msra.mxu0 %v400
    %545 = vmatprep.subr.bf16.mxu0 %v399
    %546 = vmatpush2.bf16.msra.mxu0 %v398
    %547 = vmatprep.mubr.bf16.mxu0 %v175
    %548 = vmatmul.mubr.bf16.gmra.mxu0 %v174
    %v549 = vpop.f32.mrf.mxu0
    %v550 = vadd.f32 %v125, %v549
    %v551 = vpop.f32.mrf.mxu0
    %v552 = vadd.f32 %v129, %v551
    %v553 = vpop.f32.mrf.mxu0
    %v554 = vadd.f32 %v125, %v553
    %v555 = vpop.f32.mrf.mxu0
    %v556 = vadd.f32 %v129, %v555
    %557 = vmatprep.mubr.bf16.mxu0 %v179
    %558 = vmatmul.mubr.bf16.gmra.mxu0 %v178
    %v559 = vpop.f32.mrf.mxu0
    %v560 = vadd.f32 %v125, %v559
    %v561 = vpop.f32.mrf.mxu0
    %v562 = vadd.f32 %v129, %v561
    %v563 = vpop.f32.mrf.mxu0
    %v564 = vadd.f32 %v125, %v563
    %v565 = vpop.f32.mrf.mxu0
    %v566 = vadd.f32 %v129, %v565
    %567 = vmatprep.mubr.bf16.mxu0 %v183
    %568 = vmatmul.mubr.bf16.gmra.mxu0 %v182
    %v569 = vpop.f32.mrf.mxu0
    %v570 = vadd.f32 %v125, %v569
    %v571 = vpop.f32.mrf.mxu0
    %v572 = vadd.f32 %v129, %v571
    %v573 = vpop.f32.mrf.mxu0
    %v574 = vadd.f32 %v125, %v573
    %v575 = vpop.f32.mrf.mxu0
    %v576 = vadd.f32 %v129, %v575
    %577 = vmatprep.mubr.bf16.mxu0 %v187
    %578 = vmatmul.mubr.bf16.gmra.mxu0 %v186
    %v579 = vpop.f32.mrf.mxu0
    %v580 = vadd.f32 %v125, %v579
    %v581 = vpop.f32.mrf.mxu0
    %v582 = vadd.f32 %v129, %v581
    %v583 = vpop.f32.mrf.mxu0
    %v584 = vpop.f32.mrf.mxu0
    %585 = vdwg.mxu0
    %586 = vmatprep.subr.bf16.mxu0 %v429
    %587 = vmatpush1.bf16.msra.mxu0 %v428
    %588 = vmatprep.subr.bf16.mxu0 %v427
    %589 = vmatpush1.bf16.msra.mxu0 %v426
    %590 = vmatprep.subr.bf16.mxu0 %v425
    %591 = vmatpush1.bf16.msra.mxu0 %v424
    %592 = vmatprep.subr.bf16.mxu0 %v423
    %593 = vmatpush1.bf16.msra.mxu0 %v422
    %594 = vmatprep.subr.bf16.mxu0 %v421
    %595 = vmatpush1.bf16.msra.mxu0 %v420
    %596 = vmatprep.subr.bf16.mxu0 %v419
    %597 = vmatpush1.bf16.msra.mxu0 %v418
    %598 = vmatprep.subr.bf16.mxu0 %v417
    %599 = vmatpush1.bf16.msra.mxu0 %v416
    %600 = vmatprep.subr.bf16.mxu0 %v415
    %601 = vmatpush1.bf16.msra.mxu0 %v414
    %602 = vmatprep.subr.bf16.mxu0 0
    %603 = vmatpush2.bf16.msra.mxu0 0
    %604 = vmatprep.subr.bf16.mxu0 0
    %605 = vmatpush2.bf16.msra.mxu0 0
    %606 = vmatprep.subr.bf16.mxu0 %v441
    %607 = vmatpush2.bf16.msra.mxu0 %v440
    %608 = vmatprep.subr.bf16.mxu0 %v439
    %609 = vmatpush2.bf16.msra.mxu0 %v438
    %610 = vmatprep.subr.bf16.mxu0 %v437
    %611 = vmatpush2.bf16.msra.mxu0 %v436
    %612 = vmatprep.subr.bf16.mxu0 %v435
    %613 = vmatpush2.bf16.msra.mxu0 %v434
    %614 = vmatprep.subr.bf16.mxu0 %v433
    %615 = vmatpush2.bf16.msra.mxu0 %v432
    %616 = vmatprep.subr.bf16.mxu0 %v431
    %617 = vmatpush2.bf16.msra.mxu0 %v430
    %618 = vmatprep.mubr.bf16.mxu0 %v504
    %619 = vmatmul.mubr.bf16.gmra.mxu0 %v176
    %v620 = vpop.f32.mrf.mxu0
    %v621 = vadd.f32 %v550, %v620
    %v622 = vpop.f32.mrf.mxu0
    %v623 = vadd.f32 %v552, %v622
    %v624 = vpop.f32.mrf.mxu0
    %v625 = vadd.f32 %v554, %v624
    %v626 = vpop.f32.mrf.mxu0
    %v627 = vadd.f32 %v556, %v626
    %628 = vmatprep.mubr.bf16.mxu0 %v507
    %629 = vmatmul.mubr.bf16.gmra.mxu0 %v180
    %v630 = vpop.f32.mrf.mxu0
    %v631 = vadd.f32 %v560, %v630
    %v632 = vpop.f32.mrf.mxu0
    %v633 = vadd.f32 %v562, %v632
    %v634 = vpop.f32.mrf.mxu0
    %v635 = vadd.f32 %v564, %v634
    %v636 = vpop.f32.mrf.mxu0
    %v637 = vadd.f32 %v566, %v636
    %638 = vmatprep.mubr.bf16.mxu0 %v510
    %639 = vmatmul.mubr.bf16.gmra.mxu0 %v184
    %v640 = vpop.f32.mrf.mxu0
    %v641 = vadd.f32 %v570, %v640
    %v642 = vpop.f32.mrf.mxu0
    %v643 = vadd.f32 %v572, %v642
    %v644 = vpop.f32.mrf.mxu0
    %v645 = vadd.f32 %v574, %v644
    %v646 = vpop.f32.mrf.mxu0
    %v647 = vadd.f32 %v576, %v646
    %648 = vmatprep.mubr.bf16.mxu0 %v513
    %649 = vmatmul.mubr.bf16.gmra.mxu0 %v188
    %v650 = vpop.f32.mrf.mxu0
    %v651 = vadd.f32 %v580, %v650
    %v652 = vpop.f32.mrf.mxu0
    %v653 = vadd.f32 %v582, %v652
    %v654 = vpop.f32.mrf.mxu0
    %v655 = vpop.f32.mrf.mxu0
    %656 = vdwg.mxu0
    %v657 = vmax.f32 %v621, 0.0
    %v658 = vmax.f32 %v623, 0.0
    %v659 = vmax.f32 %v625, 0.0
    %v660 = vmax.f32 %v627, 0.0
    %v661 = vmax.f32 %v631, 0.0
    %v662 = vmax.f32 %v633, 0.0
    %v663 = vmax.f32 %v635, 0.0
    %v664 = vmax.f32 %v637, 0.0
    %v665 = vmax.f32 %v641, 0.0
    %v666 = vmax.f32 %v643, 0.0
    %v667 = vmax.f32 %v645, 0.0
    %v668 = vmax.f32 %v647, 0.0
    %v669 = vmax.f32 %v651, 0.0
    %v670 = vmax.f32 %v653, 0.0
    %v685 = vcombine.low %v657, %v658
    %v686 = vcombine.high %v657, %v658
    %v688 = vunpack.c.l.s4 1983009808
    %v689 = vunpack.c.0.s8 %v688
    %v690 = vlaneseq
    %v691 = vshrl.u32 %v690, 7
    %v692 = vsub.s32 %v689, %v691
    %v693 = vrot.slane %v685, %v692
    %v695 = vunpack.c.l.s4 1983009808
    %v696 = vunpack.c.0.s8 %v695
    %v697 = vlaneseq
    %v698 = vshrl.u32 %v697, 7
    %v699 = vsub.s32 %v696, %v698
    %v700 = vrot.slane %v686, %v699
    %v701 = vcombine.high %v693, %v693
    %v702 = vcombine.high %v700, %v700
    %v703 = vcombine.low %v659, %v660
    %v704 = vcombine.high %v659, %v660
    %v706 = vunpack.c.l.s4 1983009808
    %v707 = vunpack.c.0.s8 %v706
    %v708 = vlaneseq
    %v709 = vshrl.u32 %v708, 7
    %v710 = vsub.s32 %v707, %v709
    %v711 = vrot.slane %v703, %v710
    %v713 = vunpack.c.l.s4 1983009808
    %v714 = vunpack.c.0.s8 %v713
    %v715 = vlaneseq
    %v716 = vshrl.u32 %v715, 7
    %v717 = vsub.s32 %v714, %v716
    %v718 = vrot.slane %v704, %v717
    %v719 = vcombine.high %v711, %v711
    %v720 = vcombine.high %v718, %v718
    %v721 = vcombine.low %v661, %v662
    %v722 = vcombine.high %v661, %v662
    %v724 = vunpack.c.l.s4 1983009808
    %v725 = vunpack.c.0.s8 %v724
    %v726 = vlaneseq
    %v727 = vshrl.u32 %v726, 7
    %v728 = vsub.s32 %v725, %v727
    %v729 = vrot.slane %v721, %v728
    %v731 = vunpack.c.l.s4 1983009808
    %v732 = vunpack.c.0.s8 %v731
    %v733 = vlaneseq
    %v734 = vshrl.u32 %v733, 7
    %v735 = vsub.s32 %v732, %v734
    %v736 = vrot.slane %v722, %v735
    %v737 = vcombine.high %v729, %v729
    %v738 = vcombine.high %v736, %v736
    %v739 = vcombine.low %v663, %v664
    %v740 = vcombine.high %v663, %v664
    %v742 = vunpack.c.l.s4 1983009808
    %v743 = vunpack.c.0.s8 %v742
    %v744 = vlaneseq
    %v745 = vshrl.u32 %v744, 7
    %v746 = vsub.s32 %v743, %v745
    %v747 = vrot.slane %v739, %v746
    %v749 = vunpack.c.l.s4 1983009808
    %v750 = vunpack.c.0.s8 %v749
    %v751 = vlaneseq
    %v752 = vshrl.u32 %v751, 7
    %v753 = vsub.s32 %v750, %v752
    %v754 = vrot.slane %v740, %v753
    %v755 = vcombine.high %v747, %v747
    %v756 = vcombine.high %v754, %v754
    %v757 = vcombine.low %v665, %v666
    %v758 = vcombine.high %v665, %v666
    %v760 = vunpack.c.l.s4 1983009808
    %v761 = vunpack.c.0.s8 %v760
    %v762 = vlaneseq
    %v763 = vshrl.u32 %v762, 7
    %v764 = vsub.s32 %v761, %v763
    %v765 = vrot.slane %v757, %v764
    %v767 = vunpack.c.l.s4 1983009808
    %v768 = vunpack.c.0.s8 %v767
    %v769 = vlaneseq
    %v770 = vshrl.u32 %v769, 7
    %v771 = vsub.s32 %v768, %v770
    %v772 = vrot.slane %v758, %v771
    %v773 = vcombine.high %v765, %v765
    %v774 = vcombine.high %v772, %v772
    %v775 = vcombine.low %v667, %v668
    %v776 = vcombine.high %v667, %v668
    %v778 = vunpack.c.l.s4 1983009808
    %v779 = vunpack.c.0.s8 %v778
    %v780 = vlaneseq
    %v781 = vshrl.u32 %v780, 7
    %v782 = vsub.s32 %v779, %v781
    %v783 = vrot.slane %v775, %v782
    %v785 = vunpack.c.l.s4 1983009808
    %v786 = vunpack.c.0.s8 %v785
    %v787 = vlaneseq
    %v788 = vshrl.u32 %v787, 7
    %v789 = vsub.s32 %v786, %v788
    %v790 = vrot.slane %v776, %v789
    %v791 = vcombine.high %v783, %v783
    %v792 = vcombine.high %v790, %v790
    %v793 = vcombine.low %v669, %v670
    %v794 = vcombine.high %v669, %v670
    %v796 = vunpack.c.l.s4 1983009808
    %v797 = vunpack.c.0.s8 %v796
    %v798 = vlaneseq
    %v799 = vshrl.u32 %v798, 7
    %v800 = vsub.s32 %v797, %v799
    %v801 = vrot.slane %v793, %v800
    %v803 = vunpack.c.l.s4 1983009808
    %v804 = vunpack.c.0.s8 %v803
    %v805 = vlaneseq
    %v806 = vshrl.u32 %v805, 7
    %v807 = vsub.s32 %v804, %v806
    %v808 = vrot.slane %v794, %v807
    %v809 = vcombine.high %v801, %v801
    %v810 = vcombine.high %v808, %v808
    %v812 = vunpack.c.l.s4 1983009808
    %v813 = vunpack.c.0.s8 %v812
    %v814 = vlaneseq
    %v815 = vshrl.u32 %v814, 7
    %v816 = vsub.s32 %v813, %v815
    %v817 = vrot.slane %v693, %v816
    %v818 = vcombine.high %v817, %v817
    %v820 = vunpack.c.l.s4 1983009808
    %v821 = vunpack.c.0.s8 %v820
    %v822 = vlaneseq
    %v823 = vshrl.u32 %v822, 7
    %v824 = vsub.s32 %v821, %v823
    %v825 = vrot.slane %v701, %v824
    %v826 = vcombine.high %v825, %v825
    %v828 = vunpack.c.l.s4 1983009808
    %v829 = vunpack.c.0.s8 %v828
    %v830 = vlaneseq
    %v831 = vshrl.u32 %v830, 7
    %v832 = vsub.s32 %v829, %v831
    %v833 = vrot.slane %v700, %v832
    %v834 = vcombine.high %v833, %v833
    %v836 = vunpack.c.l.s4 1983009808
    %v837 = vunpack.c.0.s8 %v836
    %v838 = vlaneseq
    %v839 = vshrl.u32 %v838, 7
    %v840 = vsub.s32 %v837, %v839
    %v841 = vrot.slane %v702, %v840
    %v842 = vcombine.high %v841, %v841
    %v844 = vunpack.c.l.s4 1983009808
    %v845 = vunpack.c.0.s8 %v844
    %v846 = vlaneseq
    %v847 = vshrl.u32 %v846, 7
    %v848 = vsub.s32 %v845, %v847
    %v849 = vrot.slane %v711, %v848
    %v850 = vcombine.high %v849, %v849
    %v852 = vunpack.c.l.s4 1983009808
    %v853 = vunpack.c.0.s8 %v852
    %v854 = vlaneseq
    %v855 = vshrl.u32 %v854, 7
    %v856 = vsub.s32 %v853, %v855
    %v857 = vrot.slane %v719, %v856
    %v858 = vcombine.high %v857, %v857
    %v860 = vunpack.c.l.s4 1983009808
    %v861 = vunpack.c.0.s8 %v860
    %v862 = vlaneseq
    %v863 = vshrl.u32 %v862, 7
    %v864 = vsub.s32 %v861, %v863
    %v865 = vrot.slane %v718, %v864
    %v866 = vcombine.high %v865, %v865
    %v868 = vunpack.c.l.s4 1983009808
    %v869 = vunpack.c.0.s8 %v868
    %v870 = vlaneseq
    %v871 = vshrl.u32 %v870, 7
    %v872 = vsub.s32 %v869, %v871
    %v873 = vrot.slane %v720, %v872
    %v874 = vcombine.high %v873, %v873
    %v876 = vunpack.c.l.s4 1983009808
    %v877 = vunpack.c.0.s8 %v876
    %v878 = vlaneseq
    %v879 = vshrl.u32 %v878, 7
    %v880 = vsub.s32 %v877, %v879
    %v881 = vrot.slane %v729, %v880
    %v882 = vcombine.high %v881, %v881
    %v884 = vunpack.c.l.s4 1983009808
    %v885 = vunpack.c.0.s8 %v884
    %v886 = vlaneseq
    %v887 = vshrl.u32 %v886, 7
    %v888 = vsub.s32 %v885, %v887
    %v889 = vrot.slane %v737, %v888
    %v890 = vcombine.high %v889, %v889
    %v892 = vunpack.c.l.s4 1983009808
    %v893 = vunpack.c.0.s8 %v892
    %v894 = vlaneseq
    %v895 = vshrl.u32 %v894, 7
    %v896 = vsub.s32 %v893, %v895
    %v897 = vrot.slane %v736, %v896
    %v898 = vcombine.high %v897, %v897
    %v900 = vunpack.c.l.s4 1983009808
    %v901 = vunpack.c.0.s8 %v900
    %v902 = vlaneseq
    %v903 = vshrl.u32 %v902, 7
    %v904 = vsub.s32 %v901, %v903
    %v905 = vrot.slane %v738, %v904
    %v906 = vcombine.high %v905, %v905
    %v908 = vunpack.c.l.s4 1983009808
    %v909 = vunpack.c.0.s8 %v908
    %v910 = vlaneseq
    %v911 = vshrl.u32 %v910, 7
    %v912 = vsub.s32 %v909, %v911
    %v913 = vrot.slane %v747, %v912
    %v914 = vcombine.high %v913, %v913
    %v916 = vunpack.c.l.s4 1983009808
    %v917 = vunpack.c.0.s8 %v916
    %v918 = vlaneseq
    %v919 = vshrl.u32 %v918, 7
    %v920 = vsub.s32 %v917, %v919
    %v921 = vrot.slane %v755, %v920
    %v922 = vcombine.high %v921, %v921
    %v924 = vunpack.c.l.s4 1983009808
    %v925 = vunpack.c.0.s8 %v924
    %v926 = vlaneseq
    %v927 = vshrl.u32 %v926, 7
    %v928 = vsub.s32 %v925, %v927
    %v929 = vrot.slane %v754, %v928
    %v930 = vcombine.high %v929, %v929
    %v932 = vunpack.c.l.s4 1983009808
    %v933 = vunpack.c.0.s8 %v932
    %v934 = vlaneseq
    %v935 = vshrl.u32 %v934, 7
    %v936 = vsub.s32 %v933, %v935
    %v937 = vrot.slane %v756, %v936
    %v938 = vcombine.high %v937, %v937
    %v940 = vunpack.c.l.s4 1983009808
    %v941 = vunpack.c.0.s8 %v940
    %v942 = vlaneseq
    %v943 = vshrl.u32 %v942, 7
    %v944 = vsub.s32 %v941, %v943
    %v945 = vrot.slane %v765, %v944
    %v946 = vcombine.high %v945, %v945
    %v948 = vunpack.c.l.s4 1983009808
    %v949 = vunpack.c.0.s8 %v948
    %v950 = vlaneseq
    %v951 = vshrl.u32 %v950, 7
    %v952 = vsub.s32 %v949, %v951
    %v953 = vrot.slane %v773, %v952
    %v954 = vcombine.high %v953, %v953
    %v956 = vunpack.c.l.s4 1983009808
    %v957 = vunpack.c.0.s8 %v956
    %v958 = vlaneseq
    %v959 = vshrl.u32 %v958, 7
    %v960 = vsub.s32 %v957, %v959
    %v961 = vrot.slane %v772, %v960
    %v962 = vcombine.high %v961, %v961
    %v964 = vunpack.c.l.s4 1983009808
    %v965 = vunpack.c.0.s8 %v964
    %v966 = vlaneseq
    %v967 = vshrl.u32 %v966, 7
    %v968 = vsub.s32 %v965, %v967
    %v969 = vrot.slane %v774, %v968
    %v970 = vcombine.high %v969, %v969
    %v972 = vunpack.c.l.s4 1983009808
    %v973 = vunpack.c.0.s8 %v972
    %v974 = vlaneseq
    %v975 = vshrl.u32 %v974, 7
    %v976 = vsub.s32 %v973, %v975
    %v977 = vrot.slane %v783, %v976
    %v978 = vcombine.high %v977, %v977
    %v980 = vunpack.c.l.s4 1983009808
    %v981 = vunpack.c.0.s8 %v980
    %v982 = vlaneseq
    %v983 = vshrl.u32 %v982, 7
    %v984 = vsub.s32 %v981, %v983
    %v985 = vrot.slane %v791, %v984
    %v986 = vcombine.high %v985, %v985
    %v988 = vunpack.c.l.s4 1983009808
    %v989 = vunpack.c.0.s8 %v988
    %v990 = vlaneseq
    %v991 = vshrl.u32 %v990, 7
    %v992 = vsub.s32 %v989, %v991
    %v993 = vrot.slane %v790, %v992
    %v994 = vcombine.high %v993, %v993
    %v996 = vunpack.c.l.s4 1983009808
    %v997 = vunpack.c.0.s8 %v996
    %v998 = vlaneseq
    %v999 = vshrl.u32 %v998, 7
    %v1000 = vsub.s32 %v997, %v999
    %v1001 = vrot.slane %v792, %v1000
    %v1002 = vcombine.high %v1001, %v1001
    %v1004 = vunpack.c.l.s4 1983009808
    %v1005 = vunpack.c.0.s8 %v1004
    %v1006 = vlaneseq
    %v1007 = vshrl.u32 %v1006, 7
    %v1008 = vsub.s32 %v1005, %v1007
    %v1009 = vrot.slane %v801, %v1008
    %v1010 = vcombine.high %v1009, %v1009
    %v1012 = vunpack.c.l.s4 1983009808
    %v1013 = vunpack.c.0.s8 %v1012
    %v1014 = vlaneseq
    %v1015 = vshrl.u32 %v1014, 7
    %v1016 = vsub.s32 %v1013, %v1015
    %v1017 = vrot.slane %v809, %v1016
    %v1018 = vcombine.high %v1017, %v1017
    %v1020 = vunpack.c.l.s4 1983009808
    %v1021 = vunpack.c.0.s8 %v1020
    %v1022 = vlaneseq
    %v1023 = vshrl.u32 %v1022, 7
    %v1024 = vsub.s32 %v1021, %v1023
    %v1025 = vrot.slane %v808, %v1024
    %v1026 = vcombine.high %v1025, %v1025
    %v1028 = vunpack.c.l.s4 1983009808
    %v1029 = vunpack.c.0.s8 %v1028
    %v1030 = vlaneseq
    %v1031 = vshrl.u32 %v1030, 7
    %v1032 = vsub.s32 %v1029, %v1031
    %v1033 = vrot.slane %v810, %v1032
    %v1034 = vcombine.high %v1033, %v1033
    %vm1091 = vcmask 1041408
    %v1092 = vsel %vm1091, %v817, -inf
    %v1093 = vrot.slane %v1092, 4
    %v1094 = vmax.f32 %v1092, %v1093
    %v1095 = vrot.slane %v1094, 2
    %v1096 = vmax.f32 %v1094, %v1095
    %v1097 = vrot.slane %v1096, 1
    %v1098 = vmax.f32 %v1096, %v1097
    %v1099 = vsel %vm1091, %v818, -inf
    %v1100 = vrot.slane %v1099, 4
    %v1101 = vmax.f32 %v1099, %v1100
    %v1102 = vrot.slane %v1101, 2
    %v1103 = vmax.f32 %v1101, %v1102
    %v1104 = vrot.slane %v1103, 1
    %v1105 = vmax.f32 %v1103, %v1104
    %v1106 = vsel %vm1091, %v825, -inf
    %v1107 = vrot.slane %v1106, 4
    %v1108 = vmax.f32 %v1106, %v1107
    %v1109 = vrot.slane %v1108, 2
    %v1110 = vmax.f32 %v1108, %v1109
    %v1111 = vrot.slane %v1110, 1
    %v1112 = vmax.f32 %v1110, %v1111
    %v1113 = vsel %vm1091, %v826, -inf
    %v1114 = vrot.slane %v1113, 4
    %v1115 = vmax.f32 %v1113, %v1114
    %v1116 = vrot.slane %v1115, 2
    %v1117 = vmax.f32 %v1115, %v1116
    %v1118 = vrot.slane %v1117, 1
    %v1119 = vmax.f32 %v1117, %v1118
    %v1120 = vsel %vm1091, %v833, -inf
    %v1121 = vrot.slane %v1120, 4
    %v1122 = vmax.f32 %v1120, %v1121
    %v1123 = vrot.slane %v1122, 2
    %v1124 = vmax.f32 %v1122, %v1123
    %v1125 = vrot.slane %v1124, 1
    %v1126 = vmax.f32 %v1124, %v1125
    %v1127 = vsel %vm1091, %v834, -inf
    %v1128 = vrot.slane %v1127, 4
    %v1129 = vmax.f32 %v1127, %v1128
    %v1130 = vrot.slane %v1129, 2
    %v1131 = vmax.f32 %v1129, %v1130
    %v1132 = vrot.slane %v1131, 1
    %v1133 = vmax.f32 %v1131, %v1132
    %v1134 = vsel %vm1091, %v841, -inf
    %v1135 = vrot.slane %v1134, 4
    %v1136 = vmax.f32 %v1134, %v1135
    %v1137 = vrot.slane %v1136, 2
    %v1138 = vmax.f32 %v1136, %v1137
    %v1139 = vrot.slane %v1138, 1
    %v1140 = vmax.f32 %v1138, %v1139
    %v1141 = vsel %vm1091, %v842, -inf
    %v1142 = vrot.slane %v1141, 4
    %v1143 = vmax.f32 %v1141, %v1142
    %v1144 = vrot.slane %v1143, 2
    %v1145 = vmax.f32 %v1143, %v1144
    %v1146 = vrot.slane %v1145, 1
    %v1147 = vmax.f32 %v1145, %v1146
    %v1148 = vsel %vm1091, %v849, -inf
    %v1149 = vrot.slane %v1148, 4
    %v1150 = vmax.f32 %v1148, %v1149
    %v1151 = vrot.slane %v1150, 2
    %v1152 = vmax.f32 %v1150, %v1151
    %v1153 = vrot.slane %v1152, 1
    %v1154 = vmax.f32 %v1152, %v1153
    %v1155 = vsel %vm1091, %v850, -inf
    %v1156 = vrot.slane %v1155, 4
    %v1157 = vmax.f32 %v1155, %v1156
    %v1158 = vrot.slane %v1157, 2
    %v1159 = vmax.f32 %v1157, %v1158
    %v1160 = vrot.slane %v1159, 1
    %v1161 = vmax.f32 %v1159, %v1160
    %v1162 = vsel %vm1091, %v857, -inf
    %v1163 = vrot.slane %v1162, 4
    %v1164 = vmax.f32 %v1162, %v1163
    %v1165 = vrot.slane %v1164, 2
    %v1166 = vmax.f32 %v1164, %v1165
    %v1167 = vrot.slane %v1166, 1
    %v1168 = vmax.f32 %v1166, %v1167
    %v1169 = vsel %vm1091, %v858, -inf
    %v1170 = vrot.slane %v1169, 4
    %v1171 = vmax.f32 %v1169, %v1170
    %v1172 = vrot.slane %v1171, 2
    %v1173 = vmax.f32 %v1171, %v1172
    %v1174 = vrot.slane %v1173, 1
    %v1175 = vmax.f32 %v1173, %v1174
    %v1176 = vsel %vm1091, %v865, -inf
    %v1177 = vrot.slane %v1176, 4
    %v1178 = vmax.f32 %v1176, %v1177
    %v1179 = vrot.slane %v1178, 2
    %v1180 = vmax.f32 %v1178, %v1179
    %v1181 = vrot.slane %v1180, 1
    %v1182 = vmax.f32 %v1180, %v1181
    %v1183 = vsel %vm1091, %v866, -inf
    %v1184 = vrot.slane %v1183, 4
    %v1185 = vmax.f32 %v1183, %v1184
    %v1186 = vrot.slane %v1185, 2
    %v1187 = vmax.f32 %v1185, %v1186
    %v1188 = vrot.slane %v1187, 1
    %v1189 = vmax.f32 %v1187, %v1188
    %v1190 = vsel %vm1091, %v873, -inf
    %v1191 = vrot.slane %v1190, 4
    %v1192 = vmax.f32 %v1190, %v1191
    %v1193 = vrot.slane %v1192, 2
    %v1194 = vmax.f32 %v1192, %v1193
    %v1195 = vrot.slane %v1194, 1
    %v1196 = vmax.f32 %v1194, %v1195
    %v1197 = vsel %vm1091, %v874, -inf
    %v1198 = vrot.slane %v1197, 4
    %v1199 = vmax.f32 %v1197, %v1198
    %v1200 = vrot.slane %v1199, 2
    %v1201 = vmax.f32 %v1199, %v1200
    %v1202 = vrot.slane %v1201, 1
    %v1203 = vmax.f32 %v1201, %v1202
    %v1204 = vsel %vm1091, %v881, -inf
    %v1205 = vrot.slane %v1204, 4
    %v1206 = vmax.f32 %v1204, %v1205
    %v1207 = vrot.slane %v1206, 2
    %v1208 = vmax.f32 %v1206, %v1207
    %v1209 = vrot.slane %v1208, 1
    %v1210 = vmax.f32 %v1208, %v1209
    %v1211 = vsel %vm1091, %v882, -inf
    %v1212 = vrot.slane %v1211, 4
    %v1213 = vmax.f32 %v1211, %v1212
    %v1214 = vrot.slane %v1213, 2
    %v1215 = vmax.f32 %v1213, %v1214
    %v1216 = vrot.slane %v1215, 1
    %v1217 = vmax.f32 %v1215, %v1216
    %v1218 = vsel %vm1091, %v889, -inf
    %v1219 = vrot.slane %v1218, 4
    %v1220 = vmax.f32 %v1218, %v1219
    %v1221 = vrot.slane %v1220, 2
    %v1222 = vmax.f32 %v1220, %v1221
    %v1223 = vrot.slane %v1222, 1
    %v1224 = vmax.f32 %v1222, %v1223
    %v1225 = vsel %vm1091, %v890, -inf
    %v1226 = vrot.slane %v1225, 4
    %v1227 = vmax.f32 %v1225, %v1226
    %v1228 = vrot.slane %v1227, 2
    %v1229 = vmax.f32 %v1227, %v1228
    %v1230 = vrot.slane %v1229, 1
    %v1231 = vmax.f32 %v1229, %v1230
    %v1232 = vsel %vm1091, %v897, -inf
    %v1233 = vrot.slane %v1232, 4
    %v1234 = vmax.f32 %v1232, %v1233
    %v1235 = vrot.slane %v1234, 2
    %v1236 = vmax.f32 %v1234, %v1235
    %v1237 = vrot.slane %v1236, 1
    %v1238 = vmax.f32 %v1236, %v1237
    %v1239 = vsel %vm1091, %v898, -inf
    %v1240 = vrot.slane %v1239, 4
    %v1241 = vmax.f32 %v1239, %v1240
    %v1242 = vrot.slane %v1241, 2
    %v1243 = vmax.f32 %v1241, %v1242
    %v1244 = vrot.slane %v1243, 1
    %v1245 = vmax.f32 %v1243, %v1244
    %v1246 = vsel %vm1091, %v905, -inf
    %v1247 = vrot.slane %v1246, 4
    %v1248 = vmax.f32 %v1246, %v1247
    %v1249 = vrot.slane %v1248, 2
    %v1250 = vmax.f32 %v1248, %v1249
    %v1251 = vrot.slane %v1250, 1
    %v1252 = vmax.f32 %v1250, %v1251
    %v1253 = vsel %vm1091, %v906, -inf
    %v1254 = vrot.slane %v1253, 4
    %v1255 = vmax.f32 %v1253, %v1254
    %v1256 = vrot.slane %v1255, 2
    %v1257 = vmax.f32 %v1255, %v1256
    %v1258 = vrot.slane %v1257, 1
    %v1259 = vmax.f32 %v1257, %v1258
    %v1260 = vsel %vm1091, %v913, -inf
    %v1261 = vrot.slane %v1260, 4
    %v1262 = vmax.f32 %v1260, %v1261
    %v1263 = vrot.slane %v1262, 2
    %v1264 = vmax.f32 %v1262, %v1263
    %v1265 = vrot.slane %v1264, 1
    %v1266 = vmax.f32 %v1264, %v1265
    %v1267 = vsel %vm1091, %v914, -inf
    %v1268 = vrot.slane %v1267, 4
    %v1269 = vmax.f32 %v1267, %v1268
    %v1270 = vrot.slane %v1269, 2
    %v1271 = vmax.f32 %v1269, %v1270
    %v1272 = vrot.slane %v1271, 1
    %v1273 = vmax.f32 %v1271, %v1272
    %v1274 = vsel %vm1091, %v921, -inf
    %v1275 = vrot.slane %v1274, 4
    %v1276 = vmax.f32 %v1274, %v1275
    %v1277 = vrot.slane %v1276, 2
    %v1278 = vmax.f32 %v1276, %v1277
    %v1279 = vrot.slane %v1278, 1
    %v1280 = vmax.f32 %v1278, %v1279
    %v1281 = vsel %vm1091, %v922, -inf
    %v1282 = vrot.slane %v1281, 4
    %v1283 = vmax.f32 %v1281, %v1282
    %v1284 = vrot.slane %v1283, 2
    %v1285 = vmax.f32 %v1283, %v1284
    %v1286 = vrot.slane %v1285, 1
    %v1287 = vmax.f32 %v1285, %v1286
    %v1288 = vsel %vm1091, %v929, -inf
    %v1289 = vrot.slane %v1288, 4
    %v1290 = vmax.f32 %v1288, %v1289
    %v1291 = vrot.slane %v1290, 2
    %v1292 = vmax.f32 %v1290, %v1291
    %v1293 = vrot.slane %v1292, 1
    %v1294 = vmax.f32 %v1292, %v1293
    %v1295 = vsel %vm1091, %v930, -inf
    %v1296 = vrot.slane %v1295, 4
    %v1297 = vmax.f32 %v1295, %v1296
    %v1298 = vrot.slane %v1297, 2
    %v1299 = vmax.f32 %v1297, %v1298
    %v1300 = vrot.slane %v1299, 1
    %v1301 = vmax.f32 %v1299, %v1300
    %v1302 = vsel %vm1091, %v937, -inf
    %v1303 = vrot.slane %v1302, 4
    %v1304 = vmax.f32 %v1302, %v1303
    %v1305 = vrot.slane %v1304, 2
    %v1306 = vmax.f32 %v1304, %v1305
    %v1307 = vrot.slane %v1306, 1
    %v1308 = vmax.f32 %v1306, %v1307
    %v1309 = vsel %vm1091, %v938, -inf
    %v1310 = vrot.slane %v1309, 4
    %v1311 = vmax.f32 %v1309, %v1310
    %v1312 = vrot.slane %v1311, 2
    %v1313 = vmax.f32 %v1311, %v1312
    %v1314 = vrot.slane %v1313, 1
    %v1315 = vmax.f32 %v1313, %v1314
    %v1316 = vsel %vm1091, %v945, -inf
    %v1317 = vrot.slane %v1316, 4
    %v1318 = vmax.f32 %v1316, %v1317
    %v1319 = vrot.slane %v1318, 2
    %v1320 = vmax.f32 %v1318, %v1319
    %v1321 = vrot.slane %v1320, 1
    %v1322 = vmax.f32 %v1320, %v1321
    %v1323 = vsel %vm1091, %v946, -inf
    %v1324 = vrot.slane %v1323, 4
    %v1325 = vmax.f32 %v1323, %v1324
    %v1326 = vrot.slane %v1325, 2
    %v1327 = vmax.f32 %v1325, %v1326
    %v1328 = vrot.slane %v1327, 1
    %v1329 = vmax.f32 %v1327, %v1328
    %v1330 = vsel %vm1091, %v953, -inf
    %v1331 = vrot.slane %v1330, 4
    %v1332 = vmax.f32 %v1330, %v1331
    %v1333 = vrot.slane %v1332, 2
    %v1334 = vmax.f32 %v1332, %v1333
    %v1335 = vrot.slane %v1334, 1
    %v1336 = vmax.f32 %v1334, %v1335
    %v1337 = vsel %vm1091, %v954, -inf
    %v1338 = vrot.slane %v1337, 4
    %v1339 = vmax.f32 %v1337, %v1338
    %v1340 = vrot.slane %v1339, 2
    %v1341 = vmax.f32 %v1339, %v1340
    %v1342 = vrot.slane %v1341, 1
    %v1343 = vmax.f32 %v1341, %v1342
    %v1344 = vsel %vm1091, %v961, -inf
    %v1345 = vrot.slane %v1344, 4
    %v1346 = vmax.f32 %v1344, %v1345
    %v1347 = vrot.slane %v1346, 2
    %v1348 = vmax.f32 %v1346, %v1347
    %v1349 = vrot.slane %v1348, 1
    %v1350 = vmax.f32 %v1348, %v1349
    %v1351 = vsel %vm1091, %v962, -inf
    %v1352 = vrot.slane %v1351, 4
    %v1353 = vmax.f32 %v1351, %v1352
    %v1354 = vrot.slane %v1353, 2
    %v1355 = vmax.f32 %v1353, %v1354
    %v1356 = vrot.slane %v1355, 1
    %v1357 = vmax.f32 %v1355, %v1356
    %v1358 = vsel %vm1091, %v969, -inf
    %v1359 = vrot.slane %v1358, 4
    %v1360 = vmax.f32 %v1358, %v1359
    %v1361 = vrot.slane %v1360, 2
    %v1362 = vmax.f32 %v1360, %v1361
    %v1363 = vrot.slane %v1362, 1
    %v1364 = vmax.f32 %v1362, %v1363
    %v1365 = vsel %vm1091, %v970, -inf
    %v1366 = vrot.slane %v1365, 4
    %v1367 = vmax.f32 %v1365, %v1366
    %v1368 = vrot.slane %v1367, 2
    %v1369 = vmax.f32 %v1367, %v1368
    %v1370 = vrot.slane %v1369, 1
    %v1371 = vmax.f32 %v1369, %v1370
    %v1372 = vsel %vm1091, %v977, -inf
    %v1373 = vrot.slane %v1372, 4
    %v1374 = vmax.f32 %v1372, %v1373
    %v1375 = vrot.slane %v1374, 2
    %v1376 = vmax.f32 %v1374, %v1375
    %v1377 = vrot.slane %v1376, 1
    %v1378 = vmax.f32 %v1376, %v1377
    %v1379 = vsel %vm1091, %v978, -inf
    %v1380 = vrot.slane %v1379, 4
    %v1381 = vmax.f32 %v1379, %v1380
    %v1382 = vrot.slane %v1381, 2
    %v1383 = vmax.f32 %v1381, %v1382
    %v1384 = vrot.slane %v1383, 1
    %v1385 = vmax.f32 %v1383, %v1384
    %v1386 = vsel %vm1091, %v985, -inf
    %v1387 = vrot.slane %v1386, 4
    %v1388 = vmax.f32 %v1386, %v1387
    %v1389 = vrot.slane %v1388, 2
    %v1390 = vmax.f32 %v1388, %v1389
    %v1391 = vrot.slane %v1390, 1
    %v1392 = vmax.f32 %v1390, %v1391
    %v1393 = vsel %vm1091, %v986, -inf
    %v1394 = vrot.slane %v1393, 4
    %v1395 = vmax.f32 %v1393, %v1394
    %v1396 = vrot.slane %v1395, 2
    %v1397 = vmax.f32 %v1395, %v1396
    %v1398 = vrot.slane %v1397, 1
    %v1399 = vmax.f32 %v1397, %v1398
    %v1400 = vsel %vm1091, %v993, -inf
    %v1401 = vrot.slane %v1400, 4
    %v1402 = vmax.f32 %v1400, %v1401
    %v1403 = vrot.slane %v1402, 2
    %v1404 = vmax.f32 %v1402, %v1403
    %v1405 = vrot.slane %v1404, 1
    %v1406 = vmax.f32 %v1404, %v1405
    %v1407 = vsel %vm1091, %v994, -inf
    %v1408 = vrot.slane %v1407, 4
    %v1409 = vmax.f32 %v1407, %v1408
    %v1410 = vrot.slane %v1409, 2
    %v1411 = vmax.f32 %v1409, %v1410
    %v1412 = vrot.slane %v1411, 1
    %v1413 = vmax.f32 %v1411, %v1412
    %v1414 = vsel %vm1091, %v1001, -inf
    %v1415 = vrot.slane %v1414, 4
    %v1416 = vmax.f32 %v1414, %v1415
    %v1417 = vrot.slane %v1416, 2
    %v1418 = vmax.f32 %v1416, %v1417
    %v1419 = vrot.slane %v1418, 1
    %v1420 = vmax.f32 %v1418, %v1419
    %v1421 = vsel %vm1091, %v1002, -inf
    %v1422 = vrot.slane %v1421, 4
    %v1423 = vmax.f32 %v1421, %v1422
    %v1424 = vrot.slane %v1423, 2
    %v1425 = vmax.f32 %v1423, %v1424
    %v1426 = vrot.slane %v1425, 1
    %v1427 = vmax.f32 %v1425, %v1426
    %v1428 = vsel %vm1091, %v1009, -inf
    %v1429 = vrot.slane %v1428, 4
    %v1430 = vmax.f32 %v1428, %v1429
    %v1431 = vrot.slane %v1430, 2
    %v1432 = vmax.f32 %v1430, %v1431
    %v1433 = vrot.slane %v1432, 1
    %v1434 = vmax.f32 %v1432, %v1433
    %v1435 = vsel %vm1091, %v1010, -inf
    %v1436 = vrot.slane %v1435, 4
    %v1437 = vmax.f32 %v1435, %v1436
    %v1438 = vrot.slane %v1437, 2
    %v1439 = vmax.f32 %v1437, %v1438
    %v1440 = vrot.slane %v1439, 1
    %v1441 = vmax.f32 %v1439, %v1440
    %v1442 = vsel %vm1091, %v1017, -inf
    %v1443 = vrot.slane %v1442, 4
    %v1444 = vmax.f32 %v1442, %v1443
    %v1445 = vrot.slane %v1444, 2
    %v1446 = vmax.f32 %v1444, %v1445
    %v1447 = vrot.slane %v1446, 1
    %v1448 = vmax.f32 %v1446, %v1447
    %v1449 = vsel %vm1091, %v1018, -inf
    %v1450 = vrot.slane %v1449, 4
    %v1451 = vmax.f32 %v1449, %v1450
    %v1452 = vrot.slane %v1451, 2
    %v1453 = vmax.f32 %v1451, %v1452
    %v1454 = vrot.slane %v1453, 1
    %v1455 = vmax.f32 %v1453, %v1454
    %v1456 = vsel %vm1091, %v1025, -inf
    %v1457 = vrot.slane %v1456, 4
    %v1458 = vmax.f32 %v1456, %v1457
    %v1459 = vrot.slane %v1458, 2
    %v1460 = vmax.f32 %v1458, %v1459
    %v1461 = vrot.slane %v1460, 1
    %v1462 = vmax.f32 %v1460, %v1461
    %v1463 = vsel %vm1091, %v1026, -inf
    %v1464 = vrot.slane %v1463, 4
    %v1465 = vmax.f32 %v1463, %v1464
    %v1466 = vrot.slane %v1465, 2
    %v1467 = vmax.f32 %v1465, %v1466
    %v1468 = vrot.slane %v1467, 1
    %v1469 = vmax.f32 %v1467, %v1468
    %v1470 = vsel %vm1091, %v1033, -inf
    %v1471 = vrot.slane %v1470, 4
    %v1472 = vmax.f32 %v1470, %v1471
    %v1473 = vrot.slane %v1472, 2
    %v1474 = vmax.f32 %v1472, %v1473
    %v1475 = vrot.slane %v1474, 1
    %v1476 = vmax.f32 %v1474, %v1475
    %v1477 = vsel %vm1091, %v1034, -inf
    %v1478 = vrot.slane %v1477, 4
    %v1479 = vmax.f32 %v1477, %v1478
    %v1480 = vrot.slane %v1479, 2
    %v1481 = vmax.f32 %v1479, %v1480
    %v1482 = vrot.slane %v1481, 1
    %v1483 = vmax.f32 %v1481, %v1482
    %v1484 = vmax.f32 %v1098, %v1105
    %v1485 = vmax.f32 %v1112, %v1119
    %v1486 = vmax.f32 %v1126, %v1133
    %v1487 = vmax.f32 %v1140, %v1147
    %v1488 = vmax.f32 %v1154, %v1161
    %v1489 = vmax.f32 %v1168, %v1175
    %v1490 = vmax.f32 %v1182, %v1189
    %v1491 = vmax.f32 %v1196, %v1203
    %v1492 = vmax.f32 %v1210, %v1217
    %v1493 = vmax.f32 %v1224, %v1231
    %v1494 = vmax.f32 %v1238, %v1245
    %v1495 = vmax.f32 %v1252, %v1259
    %v1496 = vmax.f32 %v1266, %v1273
    %v1497 = vmax.f32 %v1280, %v1287
    %v1498 = vmax.f32 %v1294, %v1301
    %v1499 = vmax.f32 %v1308, %v1315
    %v1500 = vmax.f32 %v1322, %v1329
    %v1501 = vmax.f32 %v1336, %v1343
    %v1502 = vmax.f32 %v1350, %v1357
    %v1503 = vmax.f32 %v1364, %v1371
    %v1504 = vmax.f32 %v1378, %v1385
    %v1505 = vmax.f32 %v1392, %v1399
    %v1506 = vmax.f32 %v1406, %v1413
    %v1507 = vmax.f32 %v1420, %v1427
    %v1508 = vmax.f32 %v1434, %v1441
    %v1509 = vmax.f32 %v1448, %v1455
    %v1510 = vmax.f32 %v1462, %v1469
    %v1511 = vmax.f32 %v1476, %v1483
    %v1512 = vpack.c.bf16 %v1484, %v1484
    %v1513 = vpack.c.bf16 %v1485, %v1485
    %v1514 = vpack.c.bf16 %v1486, %v1486
    %v1515 = vpack.c.bf16 %v1487, %v1487
    %v1516 = vpack.c.bf16 %v1488, %v1488
    %v1517 = vpack.c.bf16 %v1489, %v1489
    %v1518 = vpack.c.bf16 %v1490, %v1490
    %v1519 = vpack.c.bf16 %v1491, %v1491
    %v1520 = vpack.c.bf16 %v1492, %v1492
    %v1521 = vpack.c.bf16 %v1493, %v1493
    %v1522 = vpack.c.bf16 %v1494, %v1494
    %v1523 = vpack.c.bf16 %v1495, %v1495
    %v1524 = vpack.c.bf16 %v1496, %v1496
    %v1525 = vpack.c.bf16 %v1497, %v1497
    %v1526 = vpack.c.bf16 %v1498, %v1498
    %v1527 = vpack.c.bf16 %v1499, %v1499
    %v1528 = vpack.c.bf16 %v1500, %v1500
    %v1529 = vpack.c.bf16 %v1501, %v1501
    %v1530 = vpack.c.bf16 %v1502, %v1502
    %v1531 = vpack.c.bf16 %v1503, %v1503
    %v1532 = vpack.c.bf16 %v1504, %v1504
    %v1533 = vpack.c.bf16 %v1505, %v1505
    %v1534 = vpack.c.bf16 %v1506, %v1506
    %v1535 = vpack.c.bf16 %v1507, %v1507
    %v1536 = vpack.c.bf16 %v1508, %v1508
    %v1537 = vpack.c.bf16 %v1509, %v1509
    %v1538 = vpack.c.bf16 %v1510, %v1510
    %v1539 = vpack.c.bf16 %v1511, %v1511
    %v1540 = vld [vmem:[%s3] sm:$0xff]
    %v1541 = vld [vmem:[%s3 + $0x8] sm:$0xff]
    %v1542 = vld [vmem:[%s3 + $0x10] sm:$0xff]
    %v1543 = vld [vmem:[%s3 + $0x18] sm:$0xff]
    %v1544 = vld [vmem:[%s3 + $0x20] sm:$0xff]
    %v1545 = vld [vmem:[%s3 + $0x28] sm:$0xff]
    %v1546 = vld [vmem:[%s3 + $0x30] sm:$0xff]
    %v1547 = vld [vmem:[%s3 + $0x38] sm:$0xff]
    %v1548 = vld [vmem:[%s3 + $0x40] sm:$0xff]
    %v1549 = vld [vmem:[%s3 + $0x48] sm:$0xff]
    %v1550 = vld [vmem:[%s3 + $0x50] sm:$0xff]
    %v1551 = vld [vmem:[%s3 + $0x58] sm:$0xff]
    %v1552 = vld [vmem:[%s3 + $0x60] sm:$0xff]
    %v1553 = vld [vmem:[%s3 + $0x68] sm:$0xff]
    %v1554 = vld [vmem:[%s3 + $0x70] sm:$0xff]
    %v1555 = vld [vmem:[%s3 + $0x78] sm:$0xff]
    %s1556 = scalar_lea.vmem %s3, 128
    %v1557 = vld [vmem:[%s1556] sm:$0xff]
    %v1558 = vld [vmem:[%s1556 + $0x8] sm:$0xff]
    %v1559 = vld [vmem:[%s1556 + $0x10] sm:$0xff]
    %v1560 = vld [vmem:[%s1556 + $0x18] sm:$0xff]
    %v1561 = vld [vmem:[%s1556 + $0x20] sm:$0xff]
    %v1562 = vld [vmem:[%s1556 + $0x28] sm:$0xff]
    %v1563 = vld [vmem:[%s1556 + $0x30] sm:$0xff]
    %v1564 = vld [vmem:[%s1556 + $0x38] sm:$0xff]
    %v1565 = vld [vmem:[%s1556 + $0x40] sm:$0xff]
    %v1566 = vld [vmem:[%s1556 + $0x48] sm:$0xff]
    %v1567 = vld [vmem:[%s1556 + $0x50] sm:$0xff]
    %v1568 = vld [vmem:[%s1556 + $0x58] sm:$0xff]
    %v1569 = vld [vmem:[%s1556 + $0x60] sm:$0xff]
    %v1570 = vld [vmem:[%s1556 + $0x68] sm:$0xff]
    %v1571 = vld [vmem:[%s1556 + $0x70] sm:$0xff]
    %v1572 = vld [vmem:[%s1556 + $0x78] sm:$0xff]
    %v1593 = vunpack.c.l.b16 %v1513
    %v1594 = vunpack.c.l.b16 %v1514
    %v1595 = vunpack.c.l.b16 %v1515
    %v1596 = vunpack.c.l.b16 %v1516
    %v1597 = vunpack.c.l.b16 %v1517
    %v1598 = vunpack.c.l.b16 %v1518
    %v1599 = vunpack.c.l.b16 %v1519
    %v1600 = vunpack.c.l.b16 %v1520
    %v1601 = vunpack.c.l.b16 %v1521
    %v1602 = vunpack.c.l.b16 %v1522
    %v1603 = vunpack.c.l.b16 %v1527
    %v1604 = vunpack.c.l.b16 %v1528
    %v1605 = vunpack.c.l.b16 %v1529
    %v1606 = vunpack.c.l.b16 %v1530
    %v1607 = vunpack.c.l.b16 %v1531
    %v1608 = vunpack.c.l.b16 %v1532
    %v1609 = vunpack.c.l.b16 %v1533
    %v1610 = vunpack.c.l.b16 %v1534
    %v1611 = vunpack.c.l.b16 %v1535
    %v1612 = vunpack.c.l.b16 %v1536
    %vm1613 = vcmask 1041409
    %v1614 = vsel %vm1613, %v1594, %v1593
    %vm1615 = vcmask 1042434
    %v1616 = vsel %vm1615, %v1595, %v1614
    %vm1617 = vcmask 1043459
    %v1618 = vsel %vm1617, %v1596, %v1616
    %vm1619 = vcmask 1044484
    %v1620 = vsel %vm1619, %v1597, %v1618
    %vm1621 = vcmask 1045509
    %v1622 = vsel %vm1621, %v1598, %v1620
    %vm1623 = vcmask 1046534
    %v1624 = vsel %vm1623, %v1599, %v1622
    %vm1625 = vcmask 1047559
    %v1626 = vsel %vm1625, %v1600, %v1624
    %v1627 = vsel %vm1613, %v1602, %v1601
    %v1628 = vsel %vm1615, %v1603, %v1627
    %v1629 = vsel %vm1617, %v1604, %v1628
    %v1630 = vsel %vm1619, %v1605, %v1629
    %v1631 = vsel %vm1621, %v1606, %v1630
    %v1632 = vsel %vm1623, %v1607, %v1631
    %v1633 = vsel %vm1625, %v1608, %v1632
    %v1634 = vsel %vm1613, %v1610, %v1609
    %v1635 = vsel %vm1615, %v1611, %v1634
    %v1636 = vsel %vm1617, %v1612, %v1635
    %v1637 = vpack.c.b16 %v1633, %v1626
    %v1638 = vpack.c.b16 %v1636, %v1636
    %v1657 = vunpack.c.l.b16 %v1557
    %v1658 = vunpack.c.h.b16 %v1557
    %v1659 = vunpack.c.l.b16 %v1558
    %v1660 = vunpack.c.h.b16 %v1558
    %v1661 = vunpack.c.l.b16 %v1559
    %v1662 = vunpack.c.h.b16 %v1559
    %v1663 = vunpack.c.l.b16 %v1560
    %v1664 = vunpack.c.h.b16 %v1560
    %v1665 = vunpack.c.l.b16 %v1561
    %v1666 = vunpack.c.h.b16 %v1561
    %v1667 = vunpack.c.l.b16 %v1562
    %v1668 = vunpack.c.h.b16 %v1562
    %v1669 = vunpack.c.l.b16 %v1563
    %v1670 = vunpack.c.h.b16 %v1563
    %v1671 = vunpack.c.l.b16 %v1564
    %v1672 = vunpack.c.h.b16 %v1564
    %v1673 = vunpack.c.l.b16 %v1565
    %v1674 = vunpack.c.h.b16 %v1565
    %v1675 = vunpack.c.l.b16 %v1566
    %v1676 = vunpack.c.h.b16 %v1566
    %v1677 = vunpack.c.l.b16 %v1567
    %v1678 = vunpack.c.h.b16 %v1567
    %v1679 = vunpack.c.l.b16 %v1568
    %v1680 = vunpack.c.h.b16 %v1568
    %v1681 = vunpack.c.l.b16 %v1569
    %v1682 = vunpack.c.h.b16 %v1569
    %v1683 = vunpack.c.l.b16 %v1570
    %v1684 = vunpack.c.h.b16 %v1570
    %v1685 = vunpack.c.l.b16 %v1571
    %v1686 = vunpack.c.h.b16 %v1571
    %v1687 = vunpack.c.l.b16 %v1572
    %v1688 = vunpack.c.h.b16 %v1572
    %v1689 = vpack.c.b16 %v1659, %v1657
    %v1690 = vpack.c.b16 %v1660, %v1658
    %v1691 = vpack.c.b16 %v1663, %v1661
    %v1692 = vpack.c.b16 %v1664, %v1662
    %v1693 = vpack.c.b16 %v1667, %v1665
    %v1694 = vpack.c.b16 %v1668, %v1666
    %v1695 = vpack.c.b16 %v1671, %v1669
    %v1696 = vpack.c.b16 %v1672, %v1670
    %v1697 = vpack.c.b16 %v1675, %v1673
    %v1698 = vpack.c.b16 %v1676, %v1674
    %v1699 = vpack.c.b16 %v1679, %v1677
    %v1700 = vpack.c.b16 %v1680, %v1678
    %v1701 = vpack.c.b16 %v1683, %v1681
    %v1702 = vpack.c.b16 %v1684, %v1682
    %v1703 = vpack.c.b16 %v1687, %v1685
    %v1704 = vpack.c.b16 %v1688, %v1686
    %1721 = vmatprep.subr.bf16.mxu0 %v1704
    %1722 = vmatpush1.bf16.msra.mxu0 %v1703
    %1723 = vmatprep.subr.bf16.mxu0 %v1702
    %1724 = vmatpush1.bf16.msra.mxu0 %v1701
    %1725 = vmatprep.subr.bf16.mxu0 %v1700
    %1726 = vmatpush1.bf16.msra.mxu0 %v1699
    %1727 = vmatprep.subr.bf16.mxu0 %v1698
    %1728 = vmatpush1.bf16.msra.mxu0 %v1697
    %1729 = vmatprep.subr.bf16.mxu0 %v1696
    %1730 = vmatpush1.bf16.msra.mxu0 %v1695
    %1731 = vmatprep.subr.bf16.mxu0 %v1694
    %1732 = vmatpush1.bf16.msra.mxu0 %v1693
    %1733 = vmatprep.subr.bf16.mxu0 %v1692
    %1734 = vmatpush1.bf16.msra.mxu0 %v1691
    %1735 = vmatprep.subr.bf16.mxu0 %v1690
    %1736 = vmatpush1.bf16.msra.mxu0 %v1689
    %1737 = vmatprep.subr.bf16.mxu0 0
    %1738 = vmatpush2.bf16.msra.mxu0 0
    %1739 = vmatprep.subr.bf16.mxu0 0
    %1740 = vmatpush2.bf16.msra.mxu0 0
    %1741 = vmatprep.subr.bf16.mxu0 0
    %1742 = vmatpush2.bf16.msra.mxu0 0
    %1743 = vmatprep.subr.bf16.mxu0 0
    %1744 = vmatpush2.bf16.msra.mxu0 0
    %1745 = vmatprep.subr.bf16.mxu0 0
    %1746 = vmatpush2.bf16.msra.mxu0 0
    %1747 = vmatprep.subr.bf16.mxu0 0
    %1748 = vmatpush2.bf16.msra.mxu0 0
    %1749 = vmatprep.subr.bf16.mxu0 0
    %1750 = vmatpush2.bf16.msra.mxu0 0
    %1751 = vmatprep.subr.bf16.mxu0 0
    %1752 = vmatpush2.bf16.msra.mxu0 0
    %1753 = vmatprep.mubr.bf16.mxu0 0
    %1754 = vmatmul.mubr.bf16.gmra.mxu0 %v1637
    %v1755 = vpop.f32.mrf.mxu0
    %v1756 = vadd.f32 0.0, %v1755
    %v1757 = vpop.f32.mrf.mxu0
    %v1758 = vadd.f32 0.0, %v1757
    %v1759 = vpop.f32.mrf.mxu0
    %v1760 = vadd.f32 0.0, %v1759
    %v1761 = vpop.f32.mrf.mxu0
    %v1762 = vadd.f32 0.0, %v1761
    %1763 = vmatprep.mubr.bf16.mxu0 0
    %1764 = vmatmul.mubr.bf16.gmra.mxu0 %v1638
    %v1765 = vpop.f32.mrf.mxu0
    %v1766 = vadd.f32 0.0, %v1765
    %v1767 = vpop.f32.mrf.mxu0
    %v1768 = vadd.f32 0.0, %v1767
    %v1769 = vpop.f32.mrf.mxu0
    %v1770 = vpop.f32.mrf.mxu0
    %1771 = vdwg.mxu0
    %v1774 = vunpack.c.l.b16 %v1512
    %v1775 = vunpack.c.l.b16 %v1526
    %v1776 = vsel %vm1613, %v1593, %v1774
    %v1777 = vsel %vm1615, %v1594, %v1776
    %v1778 = vsel %vm1617, %v1595, %v1777
    %v1779 = vsel %vm1619, %v1596, %v1778
    %v1780 = vsel %vm1621, %v1597, %v1779
    %v1781 = vsel %vm1623, %v1598, %v1780
    %v1782 = vsel %vm1625, %v1599, %v1781
    %v1783 = vsel %vm1613, %v1601, %v1600
    %v1784 = vsel %vm1615, %v1775, %v1783
    %v1785 = vsel %vm1617, %v1603, %v1784
    %v1786 = vsel %vm1619, %v1604, %v1785
    %v1787 = vsel %vm1621, %v1605, %v1786
    %v1788 = vsel %vm1623, %v1606, %v1787
    %v1789 = vsel %vm1625, %v1607, %v1788
    %v1790 = vsel %vm1613, %v1609, %v1608
    %v1791 = vsel %vm1615, %v1610, %v1790
    %v1792 = vsel %vm1617, %v1611, %v1791
    %v1793 = vpack.c.b16 %v1789, %v1782
    %v1794 = vpack.c.b16 %v1792, %v1792
    %v1813 = vunpack.c.l.b16 %v1540
    %v1814 = vunpack.c.h.b16 %v1540
    %v1815 = vunpack.c.l.b16 %v1541
    %v1816 = vunpack.c.h.b16 %v1541
    %v1817 = vunpack.c.l.b16 %v1542
    %v1818 = vunpack.c.h.b16 %v1542
    %v1819 = vunpack.c.l.b16 %v1543
    %v1820 = vunpack.c.h.b16 %v1543
    %v1821 = vunpack.c.l.b16 %v1544
    %v1822 = vunpack.c.h.b16 %v1544
    %v1823 = vunpack.c.l.b16 %v1545
    %v1824 = vunpack.c.h.b16 %v1545
    %v1825 = vunpack.c.l.b16 %v1546
    %v1826 = vunpack.c.h.b16 %v1546
    %v1827 = vunpack.c.l.b16 %v1547
    %v1828 = vunpack.c.h.b16 %v1547
    %v1829 = vunpack.c.l.b16 %v1548
    %v1830 = vunpack.c.h.b16 %v1548
    %v1831 = vunpack.c.l.b16 %v1549
    %v1832 = vunpack.c.h.b16 %v1549
    %v1833 = vunpack.c.l.b16 %v1550
    %v1834 = vunpack.c.h.b16 %v1550
    %v1835 = vunpack.c.l.b16 %v1551
    %v1836 = vunpack.c.h.b16 %v1551
    %v1837 = vunpack.c.l.b16 %v1552
    %v1838 = vunpack.c.h.b16 %v1552
    %v1839 = vunpack.c.l.b16 %v1553
    %v1840 = vunpack.c.h.b16 %v1553
    %v1841 = vunpack.c.l.b16 %v1554
    %v1842 = vunpack.c.h.b16 %v1554
    %v1843 = vunpack.c.l.b16 %v1555
    %v1844 = vunpack.c.h.b16 %v1555
    %v1845 = vpack.c.b16 %v1815, %v1813
    %v1846 = vpack.c.b16 %v1816, %v1814
    %v1847 = vpack.c.b16 %v1819, %v1817
    %v1848 = vpack.c.b16 %v1820, %v1818
    %v1849 = vpack.c.b16 %v1823, %v1821
    %v1850 = vpack.c.b16 %v1824, %v1822
    %v1851 = vpack.c.b16 %v1827, %v1825
    %v1852 = vpack.c.b16 %v1828, %v1826
    %v1853 = vpack.c.b16 %v1831, %v1829
    %v1854 = vpack.c.b16 %v1832, %v1830
    %v1855 = vpack.c.b16 %v1835, %v1833
    %v1856 = vpack.c.b16 %v1836, %v1834
    %v1857 = vpack.c.b16 %v1839, %v1837
    %v1858 = vpack.c.b16 %v1840, %v1838
    %v1859 = vpack.c.b16 %v1843, %v1841
    %v1860 = vpack.c.b16 %v1844, %v1842
    %1877 = vmatprep.subr.bf16.mxu0 %v1860
    %1878 = vmatpush1.bf16.msra.mxu0 %v1859
    %1879 = vmatprep.subr.bf16.mxu0 %v1858
    %1880 = vmatpush1.bf16.msra.mxu0 %v1857
    %1881 = vmatprep.subr.bf16.mxu0 %v1856
    %1882 = vmatpush1.bf16.msra.mxu0 %v1855
    %1883 = vmatprep.subr.bf16.mxu0 %v1854
    %1884 = vmatpush1.bf16.msra.mxu0 %v1853
    %1885 = vmatprep.subr.bf16.mxu0 %v1852
    %1886 = vmatpush1.bf16.msra.mxu0 %v1851
    %1887 = vmatprep.subr.bf16.mxu0 %v1850
    %1888 = vmatpush1.bf16.msra.mxu0 %v1849
    %1889 = vmatprep.subr.bf16.mxu0 %v1848
    %1890 = vmatpush1.bf16.msra.mxu0 %v1847
    %1891 = vmatprep.subr.bf16.mxu0 %v1846
    %1892 = vmatpush1.bf16.msra.mxu0 %v1845
    %1893 = vmatprep.subr.bf16.mxu0 0
    %1894 = vmatpush2.bf16.msra.mxu0 0
    %1895 = vmatprep.subr.bf16.mxu0 0
    %1896 = vmatpush2.bf16.msra.mxu0 0
    %1897 = vmatprep.subr.bf16.mxu0 0
    %1898 = vmatpush2.bf16.msra.mxu0 0
    %1899 = vmatprep.subr.bf16.mxu0 0
    %1900 = vmatpush2.bf16.msra.mxu0 0
    %1901 = vmatprep.subr.bf16.mxu0 0
    %1902 = vmatpush2.bf16.msra.mxu0 0
    %1903 = vmatprep.subr.bf16.mxu0 0
    %1904 = vmatpush2.bf16.msra.mxu0 0
    %1905 = vmatprep.subr.bf16.mxu0 0
    %1906 = vmatpush2.bf16.msra.mxu0 0
    %1907 = vmatprep.subr.bf16.mxu0 0
    %1908 = vmatpush2.bf16.msra.mxu0 0
    %1909 = vmatprep.mubr.bf16.mxu0 0
    %1910 = vmatmul.mubr.bf16.gmra.mxu0 %v1793
    %v1911 = vpop.f32.mrf.mxu0
    %v1912 = vadd.f32 %v1756, %v1911
    %v1913 = vpop.f32.mrf.mxu0
    %v1914 = vadd.f32 %v1758, %v1913
    %v1915 = vpop.f32.mrf.mxu0
    %v1916 = vadd.f32 %v1760, %v1915
    %v1917 = vpop.f32.mrf.mxu0
    %v1918 = vadd.f32 %v1762, %v1917
    %1919 = vmatprep.mubr.bf16.mxu0 0
    %1920 = vmatmul.mubr.bf16.gmra.mxu0 %v1794
    %v1921 = vpop.f32.mrf.mxu0
    %v1922 = vadd.f32 %v1766, %v1921
    %v1923 = vpop.f32.mrf.mxu0
    %v1924 = vadd.f32 %v1768, %v1923
    %v1925 = vpop.f32.mrf.mxu0
    %v1926 = vpop.f32.mrf.mxu0
    %1927 = vdwg.mxu0
    %s1928 = scalar_lea.vmem %s3, 256
    %v1929 = vld [vmem:[%s1928] sm:$0xff]
    %v1930 = vld [vmem:[%s1928 + $0x8] sm:$0xff]
    %v1931 = vld [vmem:[%s1928 + $0x10] sm:$0xff]
    %v1932 = vld [vmem:[%s1928 + $0x18] sm:$0xff]
    %v1933 = vld [vmem:[%s1928 + $0x20] sm:$0xff]
    %v1934 = vld [vmem:[%s1928 + $0x28] sm:$0xff]
    %v1935 = vld [vmem:[%s1928 + $0x30] sm:$0xff]
    %v1936 = vld [vmem:[%s1928 + $0x38] sm:$0xff]
    %v1937 = vld [vmem:[%s1928 + $0x40] sm:$0xff]
    %v1938 = vld [vmem:[%s1928 + $0x48] sm:$0xff]
    %v1939 = vld [vmem:[%s1928 + $0x50] sm:$0xff]
    %v1940 = vld [vmem:[%s1928 + $0x58] sm:$0xff]
    %v1941 = vld [vmem:[%s1928 + $0x60] sm:$0xff]
    %v1942 = vld [vmem:[%s1928 + $0x68] sm:$0xff]
    %v1943 = vld [vmem:[%s1928 + $0x70] sm:$0xff]
    %v1944 = vld [vmem:[%s1928 + $0x78] sm:$0xff]
    %v1947 = vunpack.c.l.b16 %v1523
    %v1948 = vunpack.c.l.b16 %v1537
    %v1949 = vsel %vm1613, %v1595, %v1594
    %v1950 = vsel %vm1615, %v1596, %v1949
    %v1951 = vsel %vm1617, %v1597, %v1950
    %v1952 = vsel %vm1619, %v1598, %v1951
    %v1953 = vsel %vm1621, %v1599, %v1952
    %v1954 = vsel %vm1623, %v1600, %v1953
    %v1955 = vsel %vm1625, %v1601, %v1954
    %v1956 = vsel %vm1613, %v1947, %v1602
    %v1957 = vsel %vm1615, %v1604, %v1956
    %v1958 = vsel %vm1617, %v1605, %v1957
    %v1959 = vsel %vm1619, %v1606, %v1958
    %v1960 = vsel %vm1621, %v1607, %v1959
    %v1961 = vsel %vm1623, %v1608, %v1960
    %v1962 = vsel %vm1625, %v1609, %v1961
    %v1963 = vsel %vm1613, %v1611, %v1610
    %v1964 = vsel %vm1615, %v1612, %v1963
    %v1965 = vsel %vm1617, %v1948, %v1964
    %v1966 = vpack.c.b16 %v1962, %v1955
    %v1967 = vpack.c.b16 %v1965, %v1965
    %v1986 = vunpack.c.l.b16 %v1929
    %v1987 = vunpack.c.h.b16 %v1929
    %v1988 = vunpack.c.l.b16 %v1930
    %v1989 = vunpack.c.h.b16 %v1930
    %v1990 = vunpack.c.l.b16 %v1931
    %v1991 = vunpack.c.h.b16 %v1931
    %v1992 = vunpack.c.l.b16 %v1932
    %v1993 = vunpack.c.h.b16 %v1932
    %v1994 = vunpack.c.l.b16 %v1933
    %v1995 = vunpack.c.h.b16 %v1933
    %v1996 = vunpack.c.l.b16 %v1934
    %v1997 = vunpack.c.h.b16 %v1934
    %v1998 = vunpack.c.l.b16 %v1935
    %v1999 = vunpack.c.h.b16 %v1935
    %v2000 = vunpack.c.l.b16 %v1936
    %v2001 = vunpack.c.h.b16 %v1936
    %v2002 = vunpack.c.l.b16 %v1937
    %v2003 = vunpack.c.h.b16 %v1937
    %v2004 = vunpack.c.l.b16 %v1938
    %v2005 = vunpack.c.h.b16 %v1938
    %v2006 = vunpack.c.l.b16 %v1939
    %v2007 = vunpack.c.h.b16 %v1939
    %v2008 = vunpack.c.l.b16 %v1940
    %v2009 = vunpack.c.h.b16 %v1940
    %v2010 = vunpack.c.l.b16 %v1941
    %v2011 = vunpack.c.h.b16 %v1941
    %v2012 = vunpack.c.l.b16 %v1942
    %v2013 = vunpack.c.h.b16 %v1942
    %v2014 = vunpack.c.l.b16 %v1943
    %v2015 = vunpack.c.h.b16 %v1943
    %v2016 = vunpack.c.l.b16 %v1944
    %v2017 = vunpack.c.h.b16 %v1944
    %v2018 = vpack.c.b16 %v1988, %v1986
    %v2019 = vpack.c.b16 %v1989, %v1987
    %v2020 = vpack.c.b16 %v1992, %v1990
    %v2021 = vpack.c.b16 %v1993, %v1991
    %v2022 = vpack.c.b16 %v1996, %v1994
    %v2023 = vpack.c.b16 %v1997, %v1995
    %v2024 = vpack.c.b16 %v2000, %v1998
    %v2025 = vpack.c.b16 %v2001, %v1999
    %v2026 = vpack.c.b16 %v2004, %v2002
    %v2027 = vpack.c.b16 %v2005, %v2003
    %v2028 = vpack.c.b16 %v2008, %v2006
    %v2029 = vpack.c.b16 %v2009, %v2007
    %v2030 = vpack.c.b16 %v2012, %v2010
    %v2031 = vpack.c.b16 %v2013, %v2011
    %v2032 = vpack.c.b16 %v2016, %v2014
    %v2033 = vpack.c.b16 %v2017, %v2015
    %2050 = vmatprep.subr.bf16.mxu0 %v2033
    %2051 = vmatpush1.bf16.msra.mxu0 %v2032
    %2052 = vmatprep.subr.bf16.mxu0 %v2031
    %2053 = vmatpush1.bf16.msra.mxu0 %v2030
    %2054 = vmatprep.subr.bf16.mxu0 %v2029
    %2055 = vmatpush1.bf16.msra.mxu0 %v2028
    %2056 = vmatprep.subr.bf16.mxu0 %v2027
    %2057 = vmatpush1.bf16.msra.mxu0 %v2026
    %2058 = vmatprep.subr.bf16.mxu0 %v2025
    %2059 = vmatpush1.bf16.msra.mxu0 %v2024
    %2060 = vmatprep.subr.bf16.mxu0 %v2023
    %2061 = vmatpush1.bf16.msra.mxu0 %v2022
    %2062 = vmatprep.subr.bf16.mxu0 %v2021
    %2063 = vmatpush1.bf16.msra.mxu0 %v2020
    %2064 = vmatprep.subr.bf16.mxu0 %v2019
    %2065 = vmatpush1.bf16.msra.mxu0 %v2018
    %2066 = vmatprep.subr.bf16.mxu0 0
    %2067 = vmatpush2.bf16.msra.mxu0 0
    %2068 = vmatprep.subr.bf16.mxu0 0
    %2069 = vmatpush2.bf16.msra.mxu0 0
    %2070 = vmatprep.subr.bf16.mxu0 0
    %2071 = vmatpush2.bf16.msra.mxu0 0
    %2072 = vmatprep.subr.bf16.mxu0 0
    %2073 = vmatpush2.bf16.msra.mxu0 0
    %2074 = vmatprep.subr.bf16.mxu0 0
    %2075 = vmatpush2.bf16.msra.mxu0 0
    %2076 = vmatprep.subr.bf16.mxu0 0
    %2077 = vmatpush2.bf16.msra.mxu0 0
    %2078 = vmatprep.subr.bf16.mxu0 0
    %2079 = vmatpush2.bf16.msra.mxu0 0
    %2080 = vmatprep.subr.bf16.mxu0 0
    %2081 = vmatpush2.bf16.msra.mxu0 0
    %2082 = vmatprep.mubr.bf16.mxu0 0
    %2083 = vmatmul.mubr.bf16.gmra.mxu0 %v1966
    %v2084 = vpop.f32.mrf.mxu0
    %v2085 = vadd.f32 0.0, %v2084
    %v2086 = vpop.f32.mrf.mxu0
    %v2087 = vadd.f32 0.0, %v2086
    %v2088 = vpop.f32.mrf.mxu0
    %v2089 = vadd.f32 0.0, %v2088
    %v2090 = vpop.f32.mrf.mxu0
    %v2091 = vadd.f32 0.0, %v2090
    %2092 = vmatprep.mubr.bf16.mxu0 0
    %2093 = vmatmul.mubr.bf16.gmra.mxu0 %v1967
    %v2094 = vpop.f32.mrf.mxu0
    %v2095 = vadd.f32 0.0, %v2094
    %v2096 = vpop.f32.mrf.mxu0
    %v2097 = vadd.f32 0.0, %v2096
    %v2098 = vpop.f32.mrf.mxu0
    %v2099 = vpop.f32.mrf.mxu0
    %2100 = vdwg.mxu0
    %v2101 = vadd.f32 %v1912, %v2085
    %v2102 = vadd.f32 %v1914, %v2087
    %v2103 = vadd.f32 %v1916, %v2089
    %v2104 = vadd.f32 %v1918, %v2091
    %v2105 = vadd.f32 %v1922, %v2095
    %v2106 = vadd.f32 %v1924, %v2097
    %s2107 = scalar_lea.vmem %s3, 384
    %v2108 = vld [vmem:[%s2107] sm:$0xff]
    %v2109 = vld [vmem:[%s2107 + $0x8] sm:$0xff]
    %v2110 = vld [vmem:[%s2107 + $0x10] sm:$0xff]
    %v2111 = vld [vmem:[%s2107 + $0x18] sm:$0xff]
    %v2112 = vld [vmem:[%s2107 + $0x20] sm:$0xff]
    %v2113 = vld [vmem:[%s2107 + $0x28] sm:$0xff]
    %v2114 = vld [vmem:[%s2107 + $0x30] sm:$0xff]
    %v2115 = vld [vmem:[%s2107 + $0x38] sm:$0xff]
    %v2116 = vld [vmem:[%s2107 + $0x40] sm:$0xff]
    %v2117 = vld [vmem:[%s2107 + $0x48] sm:$0xff]
    %v2118 = vld [vmem:[%s2107 + $0x50] sm:$0xff]
    %v2119 = vld [vmem:[%s2107 + $0x58] sm:$0xff]
    %v2120 = vld [vmem:[%s2107 + $0x60] sm:$0xff]
    %v2121 = vld [vmem:[%s2107 + $0x68] sm:$0xff]
    %v2122 = vld [vmem:[%s2107 + $0x70] sm:$0xff]
    %v2123 = vld [vmem:[%s2107 + $0x78] sm:$0xff]
    %v2126 = vunpack.c.l.b16 %v1524
    %v2127 = vunpack.c.l.b16 %v1538
    %v2128 = vsel %vm1613, %v1596, %v1595
    %v2129 = vsel %vm1615, %v1597, %v2128
    %v2130 = vsel %vm1617, %v1598, %v2129
    %v2131 = vsel %vm1619, %v1599, %v2130
    %v2132 = vsel %vm1621, %v1600, %v2131
    %v2133 = vsel %vm1623, %v1601, %v2132
    %v2134 = vsel %vm1625, %v1602, %v2133
    %v2135 = vsel %vm1613, %v2126, %v1947
    %v2136 = vsel %vm1615, %v1605, %v2135
    %v2137 = vsel %vm1617, %v1606, %v2136
    %v2138 = vsel %vm1619, %v1607, %v2137
    %v2139 = vsel %vm1621, %v1608, %v2138
    %v2140 = vsel %vm1623, %v1609, %v2139
    %v2141 = vsel %vm1625, %v1610, %v2140
    %v2142 = vsel %vm1613, %v1612, %v1611
    %v2143 = vsel %vm1615, %v1948, %v2142
    %v2144 = vsel %vm1617, %v2127, %v2143
    %v2145 = vpack.c.b16 %v2141, %v2134
    %v2146 = vpack.c.b16 %v2144, %v2144
    %v2165 = vunpack.c.l.b16 %v2108
    %v2166 = vunpack.c.h.b16 %v2108
    %v2167 = vunpack.c.l.b16 %v2109
    %v2168 = vunpack.c.h.b16 %v2109
    %v2169 = vunpack.c.l.b16 %v2110
    %v2170 = vunpack.c.h.b16 %v2110
    %v2171 = vunpack.c.l.b16 %v2111
    %v2172 = vunpack.c.h.b16 %v2111
    %v2173 = vunpack.c.l.b16 %v2112
    %v2174 = vunpack.c.h.b16 %v2112
    %v2175 = vunpack.c.l.b16 %v2113
    %v2176 = vunpack.c.h.b16 %v2113
    %v2177 = vunpack.c.l.b16 %v2114
    %v2178 = vunpack.c.h.b16 %v2114
    %v2179 = vunpack.c.l.b16 %v2115
    %v2180 = vunpack.c.h.b16 %v2115
    %v2181 = vunpack.c.l.b16 %v2116
    %v2182 = vunpack.c.h.b16 %v2116
    %v2183 = vunpack.c.l.b16 %v2117
    %v2184 = vunpack.c.h.b16 %v2117
    %v2185 = vunpack.c.l.b16 %v2118
    %v2186 = vunpack.c.h.b16 %v2118
    %v2187 = vunpack.c.l.b16 %v2119
    %v2188 = vunpack.c.h.b16 %v2119
    %v2189 = vunpack.c.l.b16 %v2120
    %v2190 = vunpack.c.h.b16 %v2120
    %v2191 = vunpack.c.l.b16 %v2121
    %v2192 = vunpack.c.h.b16 %v2121
    %v2193 = vunpack.c.l.b16 %v2122
    %v2194 = vunpack.c.h.b16 %v2122
    %v2195 = vunpack.c.l.b16 %v2123
    %v2196 = vunpack.c.h.b16 %v2123
    %v2197 = vpack.c.b16 %v2167, %v2165
    %v2198 = vpack.c.b16 %v2168, %v2166
    %v2199 = vpack.c.b16 %v2171, %v2169
    %v2200 = vpack.c.b16 %v2172, %v2170
    %v2201 = vpack.c.b16 %v2175, %v2173
    %v2202 = vpack.c.b16 %v2176, %v2174
    %v2203 = vpack.c.b16 %v2179, %v2177
    %v2204 = vpack.c.b16 %v2180, %v2178
    %v2205 = vpack.c.b16 %v2183, %v2181
    %v2206 = vpack.c.b16 %v2184, %v2182
    %v2207 = vpack.c.b16 %v2187, %v2185
    %v2208 = vpack.c.b16 %v2188, %v2186
    %v2209 = vpack.c.b16 %v2191, %v2189
    %v2210 = vpack.c.b16 %v2192, %v2190
    %v2211 = vpack.c.b16 %v2195, %v2193
    %v2212 = vpack.c.b16 %v2196, %v2194
    %2229 = vmatprep.subr.bf16.mxu0 %v2212
    %2230 = vmatpush1.bf16.msra.mxu0 %v2211
    %2231 = vmatprep.subr.bf16.mxu0 %v2210
    %2232 = vmatpush1.bf16.msra.mxu0 %v2209
    %2233 = vmatprep.subr.bf16.mxu0 %v2208
    %2234 = vmatpush1.bf16.msra.mxu0 %v2207
    %2235 = vmatprep.subr.bf16.mxu0 %v2206
    %2236 = vmatpush1.bf16.msra.mxu0 %v2205
    %2237 = vmatprep.subr.bf16.mxu0 %v2204
    %2238 = vmatpush1.bf16.msra.mxu0 %v2203
    %2239 = vmatprep.subr.bf16.mxu0 %v2202
    %2240 = vmatpush1.bf16.msra.mxu0 %v2201
    %2241 = vmatprep.subr.bf16.mxu0 %v2200
    %2242 = vmatpush1.bf16.msra.mxu0 %v2199
    %2243 = vmatprep.subr.bf16.mxu0 %v2198
    %2244 = vmatpush1.bf16.msra.mxu0 %v2197
    %2245 = vmatprep.subr.bf16.mxu0 0
    %2246 = vmatpush2.bf16.msra.mxu0 0
    %2247 = vmatprep.subr.bf16.mxu0 0
    %2248 = vmatpush2.bf16.msra.mxu0 0
    %2249 = vmatprep.subr.bf16.mxu0 0
    %2250 = vmatpush2.bf16.msra.mxu0 0
    %2251 = vmatprep.subr.bf16.mxu0 0
    %2252 = vmatpush2.bf16.msra.mxu0 0
    %2253 = vmatprep.subr.bf16.mxu0 0
    %2254 = vmatpush2.bf16.msra.mxu0 0
    %2255 = vmatprep.subr.bf16.mxu0 0
    %2256 = vmatpush2.bf16.msra.mxu0 0
    %2257 = vmatprep.subr.bf16.mxu0 0
    %2258 = vmatpush2.bf16.msra.mxu0 0
    %2259 = vmatprep.subr.bf16.mxu0 0
    %2260 = vmatpush2.bf16.msra.mxu0 0
    %2261 = vmatprep.mubr.bf16.mxu0 0
    %2262 = vmatmul.mubr.bf16.gmra.mxu0 %v2145
    %v2263 = vpop.f32.mrf.mxu0
    %v2264 = vadd.f32 0.0, %v2263
    %v2265 = vpop.f32.mrf.mxu0
    %v2266 = vadd.f32 0.0, %v2265
    %v2267 = vpop.f32.mrf.mxu0
    %v2268 = vadd.f32 0.0, %v2267
    %v2269 = vpop.f32.mrf.mxu0
    %v2270 = vadd.f32 0.0, %v2269
    %2271 = vmatprep.mubr.bf16.mxu0 0
    %2272 = vmatmul.mubr.bf16.gmra.mxu0 %v2146
    %v2273 = vpop.f32.mrf.mxu0
    %v2274 = vadd.f32 0.0, %v2273
    %v2275 = vpop.f32.mrf.mxu0
    %v2276 = vadd.f32 0.0, %v2275
    %v2277 = vpop.f32.mrf.mxu0
    %v2278 = vpop.f32.mrf.mxu0
    %2279 = vdwg.mxu0
    %v2280 = vadd.f32 %v2101, %v2264
    %v2281 = vadd.f32 %v2102, %v2266
    %v2282 = vadd.f32 %v2103, %v2268
    %v2283 = vadd.f32 %v2104, %v2270
    %v2284 = vadd.f32 %v2105, %v2274
    %v2285 = vadd.f32 %v2106, %v2276
    %s2286 = scalar_lea.vmem %s3, 512
    %v2287 = vld [vmem:[%s2286] sm:$0xff]
    %v2288 = vld [vmem:[%s2286 + $0x8] sm:$0xff]
    %v2289 = vld [vmem:[%s2286 + $0x10] sm:$0xff]
    %v2290 = vld [vmem:[%s2286 + $0x18] sm:$0xff]
    %v2291 = vld [vmem:[%s2286 + $0x20] sm:$0xff]
    %v2292 = vld [vmem:[%s2286 + $0x28] sm:$0xff]
    %v2293 = vld [vmem:[%s2286 + $0x30] sm:$0xff]
    %v2294 = vld [vmem:[%s2286 + $0x38] sm:$0xff]
    %v2295 = vld [vmem:[%s2286 + $0x40] sm:$0xff]
    %v2296 = vld [vmem:[%s2286 + $0x48] sm:$0xff]
    %v2297 = vld [vmem:[%s2286 + $0x50] sm:$0xff]
    %v2298 = vld [vmem:[%s2286 + $0x58] sm:$0xff]
    %v2299 = vld [vmem:[%s2286 + $0x60] sm:$0xff]
    %v2300 = vld [vmem:[%s2286 + $0x68] sm:$0xff]
    %v2301 = vld [vmem:[%s2286 + $0x70] sm:$0xff]
    %v2302 = vld [vmem:[%s2286 + $0x78] sm:$0xff]
    %v2305 = vunpack.c.l.b16 %v1525
    %v2306 = vunpack.c.l.b16 %v1539
    %v2307 = vsel %vm1613, %v1597, %v1596
    %v2308 = vsel %vm1615, %v1598, %v2307
    %v2309 = vsel %vm1617, %v1599, %v2308
    %v2310 = vsel %vm1619, %v1600, %v2309
    %v2311 = vsel %vm1621, %v1601, %v2310
    %v2312 = vsel %vm1623, %v1602, %v2311
    %v2313 = vsel %vm1625, %v1947, %v2312
    %v2314 = vsel %vm1613, %v2305, %v2126
    %v2315 = vsel %vm1615, %v1606, %v2314
    %v2316 = vsel %vm1617, %v1607, %v2315
    %v2317 = vsel %vm1619, %v1608, %v2316
    %v2318 = vsel %vm1621, %v1609, %v2317
    %v2319 = vsel %vm1623, %v1610, %v2318
    %v2320 = vsel %vm1625, %v1611, %v2319
    %v2321 = vsel %vm1613, %v1948, %v1612
    %v2322 = vsel %vm1615, %v2127, %v2321
    %v2323 = vsel %vm1617, %v2306, %v2322
    %v2324 = vpack.c.b16 %v2320, %v2313
    %v2325 = vpack.c.b16 %v2323, %v2323
    %v2344 = vunpack.c.l.b16 %v2287
    %v2345 = vunpack.c.h.b16 %v2287
    %v2346 = vunpack.c.l.b16 %v2288
    %v2347 = vunpack.c.h.b16 %v2288
    %v2348 = vunpack.c.l.b16 %v2289
    %v2349 = vunpack.c.h.b16 %v2289
    %v2350 = vunpack.c.l.b16 %v2290
    %v2351 = vunpack.c.h.b16 %v2290
    %v2352 = vunpack.c.l.b16 %v2291
    %v2353 = vunpack.c.h.b16 %v2291
    %v2354 = vunpack.c.l.b16 %v2292
    %v2355 = vunpack.c.h.b16 %v2292
    %v2356 = vunpack.c.l.b16 %v2293
    %v2357 = vunpack.c.h.b16 %v2293
    %v2358 = vunpack.c.l.b16 %v2294
    %v2359 = vunpack.c.h.b16 %v2294
    %v2360 = vunpack.c.l.b16 %v2295
    %v2361 = vunpack.c.h.b16 %v2295
    %v2362 = vunpack.c.l.b16 %v2296
    %v2363 = vunpack.c.h.b16 %v2296
    %v2364 = vunpack.c.l.b16 %v2297
    %v2365 = vunpack.c.h.b16 %v2297
    %v2366 = vunpack.c.l.b16 %v2298
    %v2367 = vunpack.c.h.b16 %v2298
    %v2368 = vunpack.c.l.b16 %v2299
    %v2369 = vunpack.c.h.b16 %v2299
    %v2370 = vunpack.c.l.b16 %v2300
    %v2371 = vunpack.c.h.b16 %v2300
    %v2372 = vunpack.c.l.b16 %v2301
    %v2373 = vunpack.c.h.b16 %v2301
    %v2374 = vunpack.c.l.b16 %v2302
    %v2375 = vunpack.c.h.b16 %v2302
    %v2376 = vpack.c.b16 %v2346, %v2344
    %v2377 = vpack.c.b16 %v2347, %v2345
    %v2378 = vpack.c.b16 %v2350, %v2348
    %v2379 = vpack.c.b16 %v2351, %v2349
    %v2380 = vpack.c.b16 %v2354, %v2352
    %v2381 = vpack.c.b16 %v2355, %v2353
    %v2382 = vpack.c.b16 %v2358, %v2356
    %v2383 = vpack.c.b16 %v2359, %v2357
    %v2384 = vpack.c.b16 %v2362, %v2360
    %v2385 = vpack.c.b16 %v2363, %v2361
    %v2386 = vpack.c.b16 %v2366, %v2364
    %v2387 = vpack.c.b16 %v2367, %v2365
    %v2388 = vpack.c.b16 %v2370, %v2368
    %v2389 = vpack.c.b16 %v2371, %v2369
    %v2390 = vpack.c.b16 %v2374, %v2372
    %v2391 = vpack.c.b16 %v2375, %v2373
    %2408 = vmatprep.subr.bf16.mxu0 %v2391
    %2409 = vmatpush1.bf16.msra.mxu0 %v2390
    %2410 = vmatprep.subr.bf16.mxu0 %v2389
    %2411 = vmatpush1.bf16.msra.mxu0 %v2388
    %2412 = vmatprep.subr.bf16.mxu0 %v2387
    %2413 = vmatpush1.bf16.msra.mxu0 %v2386
    %2414 = vmatprep.subr.bf16.mxu0 %v2385
    %2415 = vmatpush1.bf16.msra.mxu0 %v2384
    %2416 = vmatprep.subr.bf16.mxu0 %v2383
    %2417 = vmatpush1.bf16.msra.mxu0 %v2382
    %2418 = vmatprep.subr.bf16.mxu0 %v2381
    %2419 = vmatpush1.bf16.msra.mxu0 %v2380
    %2420 = vmatprep.subr.bf16.mxu0 %v2379
    %2421 = vmatpush1.bf16.msra.mxu0 %v2378
    %2422 = vmatprep.subr.bf16.mxu0 %v2377
    %2423 = vmatpush1.bf16.msra.mxu0 %v2376
    %2424 = vmatprep.subr.bf16.mxu0 0
    %2425 = vmatpush2.bf16.msra.mxu0 0
    %2426 = vmatprep.subr.bf16.mxu0 0
    %2427 = vmatpush2.bf16.msra.mxu0 0
    %2428 = vmatprep.subr.bf16.mxu0 0
    %2429 = vmatpush2.bf16.msra.mxu0 0
    %2430 = vmatprep.subr.bf16.mxu0 0
    %2431 = vmatpush2.bf16.msra.mxu0 0
    %2432 = vmatprep.subr.bf16.mxu0 0
    %2433 = vmatpush2.bf16.msra.mxu0 0
    %2434 = vmatprep.subr.bf16.mxu0 0
    %2435 = vmatpush2.bf16.msra.mxu0 0
    %2436 = vmatprep.subr.bf16.mxu0 0
    %2437 = vmatpush2.bf16.msra.mxu0 0
    %2438 = vmatprep.subr.bf16.mxu0 0
    %2439 = vmatpush2.bf16.msra.mxu0 0
    %2440 = vmatprep.mubr.bf16.mxu0 0
    %2441 = vmatmul.mubr.bf16.gmra.mxu0 %v2324
    %v2442 = vpop.f32.mrf.mxu0
    %v2443 = vadd.f32 0.0, %v2442
    %v2444 = vpop.f32.mrf.mxu0
    %v2445 = vadd.f32 0.0, %v2444
    %v2446 = vpop.f32.mrf.mxu0
    %v2447 = vadd.f32 0.0, %v2446
    %v2448 = vpop.f32.mrf.mxu0
    %v2449 = vadd.f32 0.0, %v2448
    %2450 = vmatprep.mubr.bf16.mxu0 0
    %2451 = vmatmul.mubr.bf16.gmra.mxu0 %v2325
    %v2452 = vpop.f32.mrf.mxu0
    %v2453 = vadd.f32 0.0, %v2452
    %v2454 = vpop.f32.mrf.mxu0
    %v2455 = vadd.f32 0.0, %v2454
    %v2456 = vpop.f32.mrf.mxu0
    %v2457 = vpop.f32.mrf.mxu0
    %2458 = vdwg.mxu0
    %v2459 = vadd.f32 %v2280, %v2443
    %v2460 = vadd.f32 %v2281, %v2445
    %v2461 = vadd.f32 %v2282, %v2447
    %v2462 = vadd.f32 %v2283, %v2449
    %v2463 = vadd.f32 %v2284, %v2453
    %v2464 = vadd.f32 %v2285, %v2455
    %v2465 = vld [vmem:[%s4] sm:$0x3]
    %v2467 = vlaneseq
    %v2468 = vshrl.u32 %v2467, 7
    %v2469 = vsub.s32 0, %v2468
    %v2470 = vrot.slane %v2465, %v2469
    %v2471 = vlaneseq
    %v2472 = vshrl.u32 %v2471, 7
    %v2473 = vsub.s32 1, %v2472
    %v2474 = vrot.slane %v2465, %v2473
    %v2477 = vadd.f32 %v2459, %v2470
    %v2478 = vadd.f32 %v2460, %v2474
    %v2479 = vadd.f32 %v2461, %v2470
    %v2480 = vadd.f32 %v2462, %v2474
    %v2481 = vadd.f32 %v2463, %v2470
    %v2482 = vadd.f32 %v2464, %v2474
    %v2483 = vmax.f32 %v2477, 0.0
    %v2484 = vmax.f32 %v2478, 0.0
    %v2485 = vmax.f32 %v2479, 0.0
    %v2486 = vmax.f32 %v2480, 0.0
    %v2487 = vmax.f32 %v2481, 0.0
    %v2488 = vmax.f32 %v2482, 0.0
    %v2489 = vpack.c.bf16 %v2485, %v2483
    %v2490 = vpack.c.bf16 %v2486, %v2484
    %v2491 = vpack.c.bf16 %v2487, %v2487
    %v2492 = vpack.c.bf16 %v2488, %v2488
    %v2497 = vcombine.low %v2489, %v2490
    %v2498 = vcombine.high %v2489, %v2490
    %v2500 = vunpack.c.l.s4 1966171168
    %v2501 = vunpack.c.0.s8 %v2500
    %v2502 = vlaneseq
    %v2503 = vshrl.u32 %v2502, 7
    %v2504 = vsub.s32 %v2501, %v2503
    %v2505 = vrot.slane %v2497, %v2504
    %v2507 = vunpack.c.l.s4 1966171168
    %v2508 = vunpack.c.0.s8 %v2507
    %v2509 = vlaneseq
    %v2510 = vshrl.u32 %v2509, 7
    %v2511 = vsub.s32 %v2508, %v2510
    %v2512 = vrot.slane %v2498, %v2511
    %v2513 = vcombine.high %v2505, %v2505
    %v2514 = vcombine.high %v2512, %v2512
    %v2516 = vunpack.c.l.s4 1966171168
    %v2517 = vunpack.c.0.s8 %v2516
    %v2518 = vlaneseq
    %v2519 = vshrl.u32 %v2518, 7
    %v2520 = vsub.s32 %v2517, %v2519
    %v2521 = vrot.slane %v2505, %v2520
    %v2523 = vunpack.c.l.s4 1966171168
    %v2524 = vunpack.c.0.s8 %v2523
    %v2525 = vlaneseq
    %v2526 = vshrl.u32 %v2525, 7
    %v2527 = vsub.s32 %v2524, %v2526
    %v2528 = vrot.slane %v2512, %v2527
    %v2530 = vunpack.c.l.s4 1966171168
    %v2531 = vunpack.c.0.s8 %v2530
    %v2532 = vlaneseq
    %v2533 = vshrl.u32 %v2532, 7
    %v2534 = vsub.s32 %v2531, %v2533
    %v2535 = vrot.slane %v2513, %v2534
    %v2537 = vunpack.c.l.s4 1966171168
    %v2538 = vunpack.c.0.s8 %v2537
    %v2539 = vlaneseq
    %v2540 = vshrl.u32 %v2539, 7
    %v2541 = vsub.s32 %v2538, %v2540
    %v2542 = vrot.slane %v2514, %v2541
    %v2543 = vcombine.high %v2521, %v2521
    %v2544 = vcombine.high %v2528, %v2528
    %v2545 = vcombine.high %v2535, %v2535
    %v2546 = vcombine.high %v2542, %v2542
    %v2547 = vcombine.low %v2491, %v2492
    %v2549 = vunpack.c.l.s4 1966171168
    %v2550 = vunpack.c.0.s8 %v2549
    %v2551 = vlaneseq
    %v2552 = vshrl.u32 %v2551, 7
    %v2553 = vsub.s32 %v2550, %v2552
    %v2554 = vrot.slane %v2547, %v2553
    %v2555 = vcombine.high %v2554, %v2554
    %v2557 = vunpack.c.l.s4 1966171168
    %v2558 = vunpack.c.0.s8 %v2557
    %v2559 = vlaneseq
    %v2560 = vshrl.u32 %v2559, 7
    %v2561 = vsub.s32 %v2558, %v2560
    %v2562 = vrot.slane %v2554, %v2561
    %v2564 = vunpack.c.l.s4 1966171168
    %v2565 = vunpack.c.0.s8 %v2564
    %v2566 = vlaneseq
    %v2567 = vshrl.u32 %v2566, 7
    %v2568 = vsub.s32 %v2565, %v2567
    %v2569 = vrot.slane %v2555, %v2568
    %v2570 = vld [vmem:[%s5] sm:$0xff]
    %v2571 = vld [vmem:[%s5 + $0x8] sm:$0xff]
    %v2572 = vld [vmem:[%s5 + $0x10] sm:$0xff]
    %v2573 = vld [vmem:[%s5 + $0x18] sm:$0xff]
    %v2574 = vld [vmem:[%s5 + $0x20] sm:$0xff]
    %v2575 = vld [vmem:[%s5 + $0x28] sm:$0xff]
    %v2576 = vld [vmem:[%s5 + $0x30] sm:$0xff]
    %v2577 = vld [vmem:[%s5 + $0x38] sm:$0xff]
    %v2578 = vld [vmem:[%s5 + $0x40] sm:$0xff]
    %v2579 = vld [vmem:[%s5 + $0x48] sm:$0xff]
    %v2580 = vld [vmem:[%s5 + $0x50] sm:$0xff]
    %v2581 = vld [vmem:[%s5 + $0x58] sm:$0xff]
    %v2582 = vld [vmem:[%s5 + $0x60] sm:$0xff]
    %v2583 = vld [vmem:[%s5 + $0x68] sm:$0xff]
    %v2584 = vld [vmem:[%s5 + $0x70] sm:$0xff]
    %v2585 = vld [vmem:[%s5 + $0x78] sm:$0xff]
    %v2586 = vld [vmem:[%s5 + $0x80] sm:$0xff]
    %v2587 = vld [vmem:[%s5 + $0x88] sm:$0xff]
    %v2588 = vld [vmem:[%s5 + $0x90] sm:$0xff]
    %v2589 = vld [vmem:[%s5 + $0x98] sm:$0xff]
    %v2590 = vld [vmem:[%s5 + $0xa0] sm:$0xff]
    %v2591 = vld [vmem:[%s5 + $0xa8] sm:$0xff]
    %v2592 = vld [vmem:[%s5 + $0xb0] sm:$0xff]
    %v2593 = vld [vmem:[%s5 + $0xb8] sm:$0xff]
    %v2594 = vld [vmem:[%s5 + $0xc0] sm:$0xff]
    %v2595 = vld [vmem:[%s5 + $0xc8] sm:$0xff]
    %v2596 = vld [vmem:[%s5 + $0xd0] sm:$0xff]
    %v2597 = vld [vmem:[%s5 + $0xd8] sm:$0xff]
    %v2598 = vld [vmem:[%s5 + $0xe0] sm:$0xff]
    %v2599 = vld [vmem:[%s5 + $0xe8] sm:$0xff]
    %v2600 = vld [vmem:[%s5 + $0xf0] sm:$0xff]
    %v2601 = vld [vmem:[%s5 + $0xf8] sm:$0xff]
    %s2602 = scalar_lea.vmem %s5, 256
    %v2603 = vld [vmem:[%s2602] sm:$0xff]
    %v2604 = vld [vmem:[%s2602 + $0x8] sm:$0xff]
    %v2605 = vld [vmem:[%s2602 + $0x10] sm:$0xff]
    %v2606 = vld [vmem:[%s2602 + $0x18] sm:$0xff]
    %v2607 = vld [vmem:[%s2602 + $0x20] sm:$0xff]
    %v2608 = vld [vmem:[%s2602 + $0x28] sm:$0xff]
    %v2609 = vld [vmem:[%s2602 + $0x30] sm:$0xff]
    %v2610 = vld [vmem:[%s2602 + $0x38] sm:$0xff]
    %v2611 = vld [vmem:[%s2602 + $0x40] sm:$0xff]
    %v2612 = vld [vmem:[%s2602 + $0x48] sm:$0xff]
    %v2613 = vld [vmem:[%s2602 + $0x50] sm:$0xff]
    %v2614 = vld [vmem:[%s2602 + $0x58] sm:$0xff]
    %v2615 = vld [vmem:[%s2602 + $0x60] sm:$0xff]
    %v2616 = vld [vmem:[%s2602 + $0x68] sm:$0xff]
    %v2617 = vld [vmem:[%s2602 + $0x70] sm:$0xff]
    %v2618 = vld [vmem:[%s2602 + $0x78] sm:$0xff]
    %v2619 = vld [vmem:[%s2602 + $0x80] sm:$0xff]
    %v2620 = vld [vmem:[%s2602 + $0x88] sm:$0xff]
    %v2621 = vld [vmem:[%s2602 + $0x90] sm:$0xff]
    %v2622 = vld [vmem:[%s2602 + $0x98] sm:$0xff]
    %v2623 = vld [vmem:[%s2602 + $0xa0] sm:$0xff]
    %v2624 = vld [vmem:[%s2602 + $0xa8] sm:$0xff]
    %v2625 = vld [vmem:[%s2602 + $0xb0] sm:$0xff]
    %v2626 = vld [vmem:[%s2602 + $0xb8] sm:$0xff]
    %v2627 = vld [vmem:[%s2602 + $0xc0] sm:$0xff]
    %v2628 = vld [vmem:[%s2602 + $0xc8] sm:$0xff]
    %v2629 = vld [vmem:[%s2602 + $0xd0] sm:$0xff]
    %v2630 = vld [vmem:[%s2602 + $0xd8] sm:$0xff]
    %v2631 = vld [vmem:[%s2602 + $0xe0] sm:$0xff]
    %v2632 = vld [vmem:[%s2602 + $0xe8] sm:$0xff]
    %v2633 = vld [vmem:[%s2602 + $0xf0] sm:$0xff]
    %v2634 = vld [vmem:[%s2602 + $0xf8] sm:$0xff]
    %v2636 = vunpack.c.l.s4 1966171168
    %v2637 = vunpack.c.0.s8 %v2636
    %v2638 = vlaneseq
    %v2639 = vshrl.u32 %v2638, 7
    %v2640 = vsub.s32 %v2637, %v2639
    %v2641 = vrot.slane %v2521, %v2640
    %v2642 = vcombine.high %v2641, %v2641
    %v2644 = vunpack.c.l.s4 1966171168
    %v2645 = vunpack.c.0.s8 %v2644
    %v2646 = vlaneseq
    %v2647 = vshrl.u32 %v2646, 7
    %v2648 = vsub.s32 %v2645, %v2647
    %v2649 = vrot.slane %v2641, %v2648
    %v2651 = vunpack.c.l.s4 1966171168
    %v2652 = vunpack.c.0.s8 %v2651
    %v2653 = vlaneseq
    %v2654 = vshrl.u32 %v2653, 7
    %v2655 = vsub.s32 %v2652, %v2654
    %v2656 = vrot.slane %v2642, %v2655
    %v2658 = vunpack.c.l.s4 1966171168
    %v2659 = vunpack.c.0.s8 %v2658
    %v2660 = vlaneseq
    %v2661 = vshrl.u32 %v2660, 7
    %v2662 = vsub.s32 %v2659, %v2661
    %v2663 = vrot.slane %v2542, %v2662
    %v2664 = vcombine.high %v2663, %v2663
    %v2666 = vunpack.c.l.s4 1966171168
    %v2667 = vunpack.c.0.s8 %v2666
    %v2668 = vlaneseq
    %v2669 = vshrl.u32 %v2668, 7
    %v2670 = vsub.s32 %v2667, %v2669
    %v2671 = vrot.slane %v2663, %v2670
    %v2673 = vunpack.c.l.s4 1966171168
    %v2674 = vunpack.c.0.s8 %v2673
    %v2675 = vlaneseq
    %v2676 = vshrl.u32 %v2675, 7
    %v2677 = vsub.s32 %v2674, %v2676
    %v2678 = vrot.slane %v2664, %v2677
    %v2679 = vunpack.c.l.b16 %v2649
    %v2680 = vunpack.c.l.b16 %v2656
    %v2681 = vunpack.c.l.b16 %v2671
    %v2682 = vunpack.c.l.b16 %v2678
    %v2683 = vrot.slane %v2679, 1
    %v2684 = vsel %vm1613, %v2681, %v2683
    %v2685 = vrot.slane %v2680, 1
    %v2686 = vsel %vm1613, %v2682, %v2685
    %v2687 = vpack.c.b16 %v2684, %v2684
    %v2688 = vpack.c.b16 %v2686, %v2686
    %v2723 = vunpack.c.l.b16 %v2603
    %v2724 = vunpack.c.h.b16 %v2603
    %v2725 = vunpack.c.l.b16 %v2604
    %v2726 = vunpack.c.h.b16 %v2604
    %v2727 = vunpack.c.l.b16 %v2605
    %v2728 = vunpack.c.h.b16 %v2605
    %v2729 = vunpack.c.l.b16 %v2606
    %v2730 = vunpack.c.h.b16 %v2606
    %v2731 = vunpack.c.l.b16 %v2607
    %v2732 = vunpack.c.h.b16 %v2607
    %v2733 = vunpack.c.l.b16 %v2608
    %v2734 = vunpack.c.h.b16 %v2608
    %v2735 = vunpack.c.l.b16 %v2609
    %v2736 = vunpack.c.h.b16 %v2609
    %v2737 = vunpack.c.l.b16 %v2610
    %v2738 = vunpack.c.h.b16 %v2610
    %v2739 = vunpack.c.l.b16 %v2611
    %v2740 = vunpack.c.h.b16 %v2611
    %v2741 = vunpack.c.l.b16 %v2612
    %v2742 = vunpack.c.h.b16 %v2612
    %v2743 = vunpack.c.l.b16 %v2613
    %v2744 = vunpack.c.h.b16 %v2613
    %v2745 = vunpack.c.l.b16 %v2614
    %v2746 = vunpack.c.h.b16 %v2614
    %v2747 = vunpack.c.l.b16 %v2615
    %v2748 = vunpack.c.h.b16 %v2615
    %v2749 = vunpack.c.l.b16 %v2616
    %v2750 = vunpack.c.h.b16 %v2616
    %v2751 = vunpack.c.l.b16 %v2617
    %v2752 = vunpack.c.h.b16 %v2617
    %v2753 = vunpack.c.l.b16 %v2618
    %v2754 = vunpack.c.h.b16 %v2618
    %v2755 = vunpack.c.l.b16 %v2619
    %v2756 = vunpack.c.h.b16 %v2619
    %v2757 = vunpack.c.l.b16 %v2620
    %v2758 = vunpack.c.h.b16 %v2620
    %v2759 = vunpack.c.l.b16 %v2621
    %v2760 = vunpack.c.h.b16 %v2621
    %v2761 = vunpack.c.l.b16 %v2622
    %v2762 = vunpack.c.h.b16 %v2622
    %v2763 = vunpack.c.l.b16 %v2623
    %v2764 = vunpack.c.h.b16 %v2623
    %v2765 = vunpack.c.l.b16 %v2624
    %v2766 = vunpack.c.h.b16 %v2624
    %v2767 = vunpack.c.l.b16 %v2625
    %v2768 = vunpack.c.h.b16 %v2625
    %v2769 = vunpack.c.l.b16 %v2626
    %v2770 = vunpack.c.h.b16 %v2626
    %v2771 = vunpack.c.l.b16 %v2627
    %v2772 = vunpack.c.h.b16 %v2627
    %v2773 = vunpack.c.l.b16 %v2628
    %v2774 = vunpack.c.h.b16 %v2628
    %v2775 = vunpack.c.l.b16 %v2629
    %v2776 = vunpack.c.h.b16 %v2629
    %v2777 = vunpack.c.l.b16 %v2630
    %v2778 = vunpack.c.h.b16 %v2630
    %v2779 = vunpack.c.l.b16 %v2631
    %v2780 = vunpack.c.h.b16 %v2631
    %v2781 = vunpack.c.l.b16 %v2632
    %v2782 = vunpack.c.h.b16 %v2632
    %v2783 = vunpack.c.l.b16 %v2633
    %v2784 = vunpack.c.h.b16 %v2633
    %v2785 = vunpack.c.l.b16 %v2634
    %v2786 = vunpack.c.h.b16 %v2634
    %v2787 = vpack.c.b16 %v2725, %v2723
    %v2788 = vpack.c.b16 %v2726, %v2724
    %v2789 = vpack.c.b16 %v2729, %v2727
    %v2790 = vpack.c.b16 %v2730, %v2728
    %v2791 = vpack.c.b16 %v2733, %v2731
    %v2792 = vpack.c.b16 %v2734, %v2732
    %v2793 = vpack.c.b16 %v2737, %v2735
    %v2794 = vpack.c.b16 %v2738, %v2736
    %v2795 = vpack.c.b16 %v2741, %v2739
    %v2796 = vpack.c.b16 %v2742, %v2740
    %v2797 = vpack.c.b16 %v2745, %v2743
    %v2798 = vpack.c.b16 %v2746, %v2744
    %v2799 = vpack.c.b16 %v2749, %v2747
    %v2800 = vpack.c.b16 %v2750, %v2748
    %v2801 = vpack.c.b16 %v2753, %v2751
    %v2802 = vpack.c.b16 %v2754, %v2752
    %v2803 = vpack.c.b16 %v2757, %v2755
    %v2804 = vpack.c.b16 %v2758, %v2756
    %v2805 = vpack.c.b16 %v2761, %v2759
    %v2806 = vpack.c.b16 %v2762, %v2760
    %v2807 = vpack.c.b16 %v2765, %v2763
    %v2808 = vpack.c.b16 %v2766, %v2764
    %v2809 = vpack.c.b16 %v2769, %v2767
    %v2810 = vpack.c.b16 %v2770, %v2768
    %v2811 = vpack.c.b16 %v2773, %v2771
    %v2812 = vpack.c.b16 %v2774, %v2772
    %v2813 = vpack.c.b16 %v2777, %v2775
    %v2814 = vpack.c.b16 %v2778, %v2776
    %v2815 = vpack.c.b16 %v2781, %v2779
    %v2816 = vpack.c.b16 %v2782, %v2780
    %v2817 = vpack.c.b16 %v2785, %v2783
    %v2818 = vpack.c.b16 %v2786, %v2784
    %2851 = vmatprep.subr.bf16.mxu0 %v2802
    %2852 = vmatpush1.bf16.msra.mxu0 %v2801
    %2853 = vmatprep.subr.bf16.mxu0 %v2800
    %2854 = vmatpush1.bf16.msra.mxu0 %v2799
    %2855 = vmatprep.subr.bf16.mxu0 %v2798
    %2856 = vmatpush1.bf16.msra.mxu0 %v2797
    %2857 = vmatprep.subr.bf16.mxu0 %v2796
    %2858 = vmatpush1.bf16.msra.mxu0 %v2795
    %2859 = vmatprep.subr.bf16.mxu0 %v2794
    %2860 = vmatpush1.bf16.msra.mxu0 %v2793
    %2861 = vmatprep.subr.bf16.mxu0 %v2792
    %2862 = vmatpush1.bf16.msra.mxu0 %v2791
    %2863 = vmatprep.subr.bf16.mxu0 %v2790
    %2864 = vmatpush1.bf16.msra.mxu0 %v2789
    %2865 = vmatprep.subr.bf16.mxu0 %v2788
    %2866 = vmatpush1.bf16.msra.mxu0 %v2787
    %2867 = vmatprep.subr.bf16.mxu0 %v2818
    %2868 = vmatpush2.bf16.msra.mxu0 %v2817
    %2869 = vmatprep.subr.bf16.mxu0 %v2816
    %2870 = vmatpush2.bf16.msra.mxu0 %v2815
    %2871 = vmatprep.subr.bf16.mxu0 %v2814
    %2872 = vmatpush2.bf16.msra.mxu0 %v2813
    %2873 = vmatprep.subr.bf16.mxu0 %v2812
    %2874 = vmatpush2.bf16.msra.mxu0 %v2811
    %2875 = vmatprep.subr.bf16.mxu0 %v2810
    %2876 = vmatpush2.bf16.msra.mxu0 %v2809
    %2877 = vmatprep.subr.bf16.mxu0 %v2808
    %2878 = vmatpush2.bf16.msra.mxu0 %v2807
    %2879 = vmatprep.subr.bf16.mxu0 %v2806
    %2880 = vmatpush2.bf16.msra.mxu0 %v2805
    %2881 = vmatprep.subr.bf16.mxu0 %v2804
    %2882 = vmatpush2.bf16.msra.mxu0 %v2803
    %2883 = vmatprep.mubr.bf16.mxu0 %v2688
    %2884 = vmatmul.mubr.bf16.gmra.mxu0 %v2687
    %v2885 = vpop.f32.mrf.mxu0
    %v2886 = vadd.f32 0.0, %v2885
    %v2887 = vpop.f32.mrf.mxu0
    %v2888 = vadd.f32 0.0, %v2887
    %v2889 = vpop.f32.mrf.mxu0
    %v2890 = vpop.f32.mrf.mxu0
    %2891 = vdwg.mxu0
    %v2892 = vrot.slane %v2681, 7
    %v2893 = vsel %vm1613, %v2892, %v2679
    %v2894 = vrot.slane %v2682, 7
    %v2895 = vsel %vm1613, %v2894, %v2680
    %v2896 = vpack.c.b16 %v2893, %v2893
    %v2897 = vpack.c.b16 %v2895, %v2895
    %v2932 = vunpack.c.l.b16 %v2570
    %v2933 = vunpack.c.h.b16 %v2570
    %v2934 = vunpack.c.l.b16 %v2571
    %v2935 = vunpack.c.h.b16 %v2571
    %v2936 = vunpack.c.l.b16 %v2572
    %v2937 = vunpack.c.h.b16 %v2572
    %v2938 = vunpack.c.l.b16 %v2573
    %v2939 = vunpack.c.h.b16 %v2573
    %v2940 = vunpack.c.l.b16 %v2574
    %v2941 = vunpack.c.h.b16 %v2574
    %v2942 = vunpack.c.l.b16 %v2575
    %v2943 = vunpack.c.h.b16 %v2575
    %v2944 = vunpack.c.l.b16 %v2576
    %v2945 = vunpack.c.h.b16 %v2576
    %v2946 = vunpack.c.l.b16 %v2577
    %v2947 = vunpack.c.h.b16 %v2577
    %v2948 = vunpack.c.l.b16 %v2578
    %v2949 = vunpack.c.h.b16 %v2578
    %v2950 = vunpack.c.l.b16 %v2579
    %v2951 = vunpack.c.h.b16 %v2579
    %v2952 = vunpack.c.l.b16 %v2580
    %v2953 = vunpack.c.h.b16 %v2580
    %v2954 = vunpack.c.l.b16 %v2581
    %v2955 = vunpack.c.h.b16 %v2581
    %v2956 = vunpack.c.l.b16 %v2582
    %v2957 = vunpack.c.h.b16 %v2582
    %v2958 = vunpack.c.l.b16 %v2583
    %v2959 = vunpack.c.h.b16 %v2583
    %v2960 = vunpack.c.l.b16 %v2584
    %v2961 = vunpack.c.h.b16 %v2584
    %v2962 = vunpack.c.l.b16 %v2585
    %v2963 = vunpack.c.h.b16 %v2585
    %v2964 = vunpack.c.l.b16 %v2586
    %v2965 = vunpack.c.h.b16 %v2586
    %v2966 = vunpack.c.l.b16 %v2587
    %v2967 = vunpack.c.h.b16 %v2587
    %v2968 = vunpack.c.l.b16 %v2588
    %v2969 = vunpack.c.h.b16 %v2588
    %v2970 = vunpack.c.l.b16 %v2589
    %v2971 = vunpack.c.h.b16 %v2589
    %v2972 = vunpack.c.l.b16 %v2590
    %v2973 = vunpack.c.h.b16 %v2590
    %v2974 = vunpack.c.l.b16 %v2591
    %v2975 = vunpack.c.h.b16 %v2591
    %v2976 = vunpack.c.l.b16 %v2592
    %v2977 = vunpack.c.h.b16 %v2592
    %v2978 = vunpack.c.l.b16 %v2593
    %v2979 = vunpack.c.h.b16 %v2593
    %v2980 = vunpack.c.l.b16 %v2594
    %v2981 = vunpack.c.h.b16 %v2594
    %v2982 = vunpack.c.l.b16 %v2595
    %v2983 = vunpack.c.h.b16 %v2595
    %v2984 = vunpack.c.l.b16 %v2596
    %v2985 = vunpack.c.h.b16 %v2596
    %v2986 = vunpack.c.l.b16 %v2597
    %v2987 = vunpack.c.h.b16 %v2597
    %v2988 = vunpack.c.l.b16 %v2598
    %v2989 = vunpack.c.h.b16 %v2598
    %v2990 = vunpack.c.l.b16 %v2599
    %v2991 = vunpack.c.h.b16 %v2599
    %v2992 = vunpack.c.l.b16 %v2600
    %v2993 = vunpack.c.h.b16 %v2600
    %v2994 = vunpack.c.l.b16 %v2601
    %v2995 = vunpack.c.h.b16 %v2601
    %v2996 = vpack.c.b16 %v2934, %v2932
    %v2997 = vpack.c.b16 %v2935, %v2933
    %v2998 = vpack.c.b16 %v2938, %v2936
    %v2999 = vpack.c.b16 %v2939, %v2937
    %v3000 = vpack.c.b16 %v2942, %v2940
    %v3001 = vpack.c.b16 %v2943, %v2941
    %v3002 = vpack.c.b16 %v2946, %v2944
    %v3003 = vpack.c.b16 %v2947, %v2945
    %v3004 = vpack.c.b16 %v2950, %v2948
    %v3005 = vpack.c.b16 %v2951, %v2949
    %v3006 = vpack.c.b16 %v2954, %v2952
    %v3007 = vpack.c.b16 %v2955, %v2953
    %v3008 = vpack.c.b16 %v2958, %v2956
    %v3009 = vpack.c.b16 %v2959, %v2957
    %v3010 = vpack.c.b16 %v2962, %v2960
    %v3011 = vpack.c.b16 %v2963, %v2961
    %v3012 = vpack.c.b16 %v2966, %v2964
    %v3013 = vpack.c.b16 %v2967, %v2965
    %v3014 = vpack.c.b16 %v2970, %v2968
    %v3015 = vpack.c.b16 %v2971, %v2969
    %v3016 = vpack.c.b16 %v2974, %v2972
    %v3017 = vpack.c.b16 %v2975, %v2973
    %v3018 = vpack.c.b16 %v2978, %v2976
    %v3019 = vpack.c.b16 %v2979, %v2977
    %v3020 = vpack.c.b16 %v2982, %v2980
    %v3021 = vpack.c.b16 %v2983, %v2981
    %v3022 = vpack.c.b16 %v2986, %v2984
    %v3023 = vpack.c.b16 %v2987, %v2985
    %v3024 = vpack.c.b16 %v2990, %v2988
    %v3025 = vpack.c.b16 %v2991, %v2989
    %v3026 = vpack.c.b16 %v2994, %v2992
    %v3027 = vpack.c.b16 %v2995, %v2993
    %3060 = vmatprep.subr.bf16.mxu0 %v3011
    %3061 = vmatpush1.bf16.msra.mxu0 %v3010
    %3062 = vmatprep.subr.bf16.mxu0 %v3009
    %3063 = vmatpush1.bf16.msra.mxu0 %v3008
    %3064 = vmatprep.subr.bf16.mxu0 %v3007
    %3065 = vmatpush1.bf16.msra.mxu0 %v3006
    %3066 = vmatprep.subr.bf16.mxu0 %v3005
    %3067 = vmatpush1.bf16.msra.mxu0 %v3004
    %3068 = vmatprep.subr.bf16.mxu0 %v3003
    %3069 = vmatpush1.bf16.msra.mxu0 %v3002
    %3070 = vmatprep.subr.bf16.mxu0 %v3001
    %3071 = vmatpush1.bf16.msra.mxu0 %v3000
    %3072 = vmatprep.subr.bf16.mxu0 %v2999
    %3073 = vmatpush1.bf16.msra.mxu0 %v2998
    %3074 = vmatprep.subr.bf16.mxu0 %v2997
    %3075 = vmatpush1.bf16.msra.mxu0 %v2996
    %3076 = vmatprep.subr.bf16.mxu0 %v3027
    %3077 = vmatpush2.bf16.msra.mxu0 %v3026
    %3078 = vmatprep.subr.bf16.mxu0 %v3025
    %3079 = vmatpush2.bf16.msra.mxu0 %v3024
    %3080 = vmatprep.subr.bf16.mxu0 %v3023
    %3081 = vmatpush2.bf16.msra.mxu0 %v3022
    %3082 = vmatprep.subr.bf16.mxu0 %v3021
    %3083 = vmatpush2.bf16.msra.mxu0 %v3020
    %3084 = vmatprep.subr.bf16.mxu0 %v3019
    %3085 = vmatpush2.bf16.msra.mxu0 %v3018
    %3086 = vmatprep.subr.bf16.mxu0 %v3017
    %3087 = vmatpush2.bf16.msra.mxu0 %v3016
    %3088 = vmatprep.subr.bf16.mxu0 %v3015
    %3089 = vmatpush2.bf16.msra.mxu0 %v3014
    %3090 = vmatprep.subr.bf16.mxu0 %v3013
    %3091 = vmatpush2.bf16.msra.mxu0 %v3012
    %3092 = vmatprep.mubr.bf16.mxu0 %v2897
    %3093 = vmatmul.mubr.bf16.gmra.mxu0 %v2896
    %v3094 = vpop.f32.mrf.mxu0
    %v3095 = vadd.f32 %v2886, %v3094
    %v3096 = vpop.f32.mrf.mxu0
    %v3097 = vadd.f32 %v2888, %v3096
    %v3098 = vpop.f32.mrf.mxu0
    %v3099 = vpop.f32.mrf.mxu0
    %3100 = vdwg.mxu0
    %s3101 = scalar_lea.vmem %s5, 512
    %v3102 = vld [vmem:[%s3101] sm:$0xff]
    %v3103 = vld [vmem:[%s3101 + $0x8] sm:$0xff]
    %v3104 = vld [vmem:[%s3101 + $0x10] sm:$0xff]
    %v3105 = vld [vmem:[%s3101 + $0x18] sm:$0xff]
    %v3106 = vld [vmem:[%s3101 + $0x20] sm:$0xff]
    %v3107 = vld [vmem:[%s3101 + $0x28] sm:$0xff]
    %v3108 = vld [vmem:[%s3101 + $0x30] sm:$0xff]
    %v3109 = vld [vmem:[%s3101 + $0x38] sm:$0xff]
    %v3110 = vld [vmem:[%s3101 + $0x40] sm:$0xff]
    %v3111 = vld [vmem:[%s3101 + $0x48] sm:$0xff]
    %v3112 = vld [vmem:[%s3101 + $0x50] sm:$0xff]
    %v3113 = vld [vmem:[%s3101 + $0x58] sm:$0xff]
    %v3114 = vld [vmem:[%s3101 + $0x60] sm:$0xff]
    %v3115 = vld [vmem:[%s3101 + $0x68] sm:$0xff]
    %v3116 = vld [vmem:[%s3101 + $0x70] sm:$0xff]
    %v3117 = vld [vmem:[%s3101 + $0x78] sm:$0xff]
    %v3118 = vld [vmem:[%s3101 + $0x80] sm:$0xff]
    %v3119 = vld [vmem:[%s3101 + $0x88] sm:$0xff]
    %v3120 = vld [vmem:[%s3101 + $0x90] sm:$0xff]
    %v3121 = vld [vmem:[%s3101 + $0x98] sm:$0xff]
    %v3122 = vld [vmem:[%s3101 + $0xa0] sm:$0xff]
    %v3123 = vld [vmem:[%s3101 + $0xa8] sm:$0xff]
    %v3124 = vld [vmem:[%s3101 + $0xb0] sm:$0xff]
    %v3125 = vld [vmem:[%s3101 + $0xb8] sm:$0xff]
    %v3126 = vld [vmem:[%s3101 + $0xc0] sm:$0xff]
    %v3127 = vld [vmem:[%s3101 + $0xc8] sm:$0xff]
    %v3128 = vld [vmem:[%s3101 + $0xd0] sm:$0xff]
    %v3129 = vld [vmem:[%s3101 + $0xd8] sm:$0xff]
    %v3130 = vld [vmem:[%s3101 + $0xe0] sm:$0xff]
    %v3131 = vld [vmem:[%s3101 + $0xe8] sm:$0xff]
    %v3132 = vld [vmem:[%s3101 + $0xf0] sm:$0xff]
    %v3133 = vld [vmem:[%s3101 + $0xf8] sm:$0xff]
    %v3135 = vunpack.c.l.s4 1966171168
    %v3136 = vunpack.c.0.s8 %v3135
    %v3137 = vlaneseq
    %v3138 = vshrl.u32 %v3137, 7
    %v3139 = vsub.s32 %v3136, %v3138
    %v3140 = vrot.slane %v2535, %v3139
    %v3141 = vcombine.high %v3140, %v3140
    %v3143 = vunpack.c.l.s4 1966171168
    %v3144 = vunpack.c.0.s8 %v3143
    %v3145 = vlaneseq
    %v3146 = vshrl.u32 %v3145, 7
    %v3147 = vsub.s32 %v3144, %v3146
    %v3148 = vrot.slane %v3140, %v3147
    %v3150 = vunpack.c.l.s4 1966171168
    %v3151 = vunpack.c.0.s8 %v3150
    %v3152 = vlaneseq
    %v3153 = vshrl.u32 %v3152, 7
    %v3154 = vsub.s32 %v3151, %v3153
    %v3155 = vrot.slane %v3141, %v3154
    %v3157 = vunpack.c.l.s4 1966171168
    %v3158 = vunpack.c.0.s8 %v3157
    %v3159 = vlaneseq
    %v3160 = vshrl.u32 %v3159, 7
    %v3161 = vsub.s32 %v3158, %v3160
    %v3162 = vrot.slane %v2544, %v3161
    %v3163 = vcombine.high %v3162, %v3162
    %v3165 = vunpack.c.l.s4 1966171168
    %v3166 = vunpack.c.0.s8 %v3165
    %v3167 = vlaneseq
    %v3168 = vshrl.u32 %v3167, 7
    %v3169 = vsub.s32 %v3166, %v3168
    %v3170 = vrot.slane %v3162, %v3169
    %v3172 = vunpack.c.l.s4 1966171168
    %v3173 = vunpack.c.0.s8 %v3172
    %v3174 = vlaneseq
    %v3175 = vshrl.u32 %v3174, 7
    %v3176 = vsub.s32 %v3173, %v3175
    %v3177 = vrot.slane %v3163, %v3176
    %v3178 = vunpack.c.l.b16 %v3148
    %v3179 = vunpack.c.l.b16 %v3155
    %v3180 = vunpack.c.l.b16 %v3170
    %v3181 = vunpack.c.l.b16 %v3177
    %v3182 = vrot.slane %v3180, 7
    %v3183 = vsel %vm1613, %v3182, %v3178
    %v3184 = vrot.slane %v3181, 7
    %v3185 = vsel %vm1613, %v3184, %v3179
    %v3186 = vpack.c.b16 %v3183, %v3183
    %v3187 = vpack.c.b16 %v3185, %v3185
    %v3222 = vunpack.c.l.b16 %v3102
    %v3223 = vunpack.c.h.b16 %v3102
    %v3224 = vunpack.c.l.b16 %v3103
    %v3225 = vunpack.c.h.b16 %v3103
    %v3226 = vunpack.c.l.b16 %v3104
    %v3227 = vunpack.c.h.b16 %v3104
    %v3228 = vunpack.c.l.b16 %v3105
    %v3229 = vunpack.c.h.b16 %v3105
    %v3230 = vunpack.c.l.b16 %v3106
    %v3231 = vunpack.c.h.b16 %v3106
    %v3232 = vunpack.c.l.b16 %v3107
    %v3233 = vunpack.c.h.b16 %v3107
    %v3234 = vunpack.c.l.b16 %v3108
    %v3235 = vunpack.c.h.b16 %v3108
    %v3236 = vunpack.c.l.b16 %v3109
    %v3237 = vunpack.c.h.b16 %v3109
    %v3238 = vunpack.c.l.b16 %v3110
    %v3239 = vunpack.c.h.b16 %v3110
    %v3240 = vunpack.c.l.b16 %v3111
    %v3241 = vunpack.c.h.b16 %v3111
    %v3242 = vunpack.c.l.b16 %v3112
    %v3243 = vunpack.c.h.b16 %v3112
    %v3244 = vunpack.c.l.b16 %v3113
    %v3245 = vunpack.c.h.b16 %v3113
    %v3246 = vunpack.c.l.b16 %v3114
    %v3247 = vunpack.c.h.b16 %v3114
    %v3248 = vunpack.c.l.b16 %v3115
    %v3249 = vunpack.c.h.b16 %v3115
    %v3250 = vunpack.c.l.b16 %v3116
    %v3251 = vunpack.c.h.b16 %v3116
    %v3252 = vunpack.c.l.b16 %v3117
    %v3253 = vunpack.c.h.b16 %v3117
    %v3254 = vunpack.c.l.b16 %v3118
    %v3255 = vunpack.c.h.b16 %v3118
    %v3256 = vunpack.c.l.b16 %v3119
    %v3257 = vunpack.c.h.b16 %v3119
    %v3258 = vunpack.c.l.b16 %v3120
    %v3259 = vunpack.c.h.b16 %v3120
    %v3260 = vunpack.c.l.b16 %v3121
    %v3261 = vunpack.c.h.b16 %v3121
    %v3262 = vunpack.c.l.b16 %v3122
    %v3263 = vunpack.c.h.b16 %v3122
    %v3264 = vunpack.c.l.b16 %v3123
    %v3265 = vunpack.c.h.b16 %v3123
    %v3266 = vunpack.c.l.b16 %v3124
    %v3267 = vunpack.c.h.b16 %v3124
    %v3268 = vunpack.c.l.b16 %v3125
    %v3269 = vunpack.c.h.b16 %v3125
    %v3270 = vunpack.c.l.b16 %v3126
    %v3271 = vunpack.c.h.b16 %v3126
    %v3272 = vunpack.c.l.b16 %v3127
    %v3273 = vunpack.c.h.b16 %v3127
    %v3274 = vunpack.c.l.b16 %v3128
    %v3275 = vunpack.c.h.b16 %v3128
    %v3276 = vunpack.c.l.b16 %v3129
    %v3277 = vunpack.c.h.b16 %v3129
    %v3278 = vunpack.c.l.b16 %v3130
    %v3279 = vunpack.c.h.b16 %v3130
    %v3280 = vunpack.c.l.b16 %v3131
    %v3281 = vunpack.c.h.b16 %v3131
    %v3282 = vunpack.c.l.b16 %v3132
    %v3283 = vunpack.c.h.b16 %v3132
    %v3284 = vunpack.c.l.b16 %v3133
    %v3285 = vunpack.c.h.b16 %v3133
    %v3286 = vpack.c.b16 %v3224, %v3222
    %v3287 = vpack.c.b16 %v3225, %v3223
    %v3288 = vpack.c.b16 %v3228, %v3226
    %v3289 = vpack.c.b16 %v3229, %v3227
    %v3290 = vpack.c.b16 %v3232, %v3230
    %v3291 = vpack.c.b16 %v3233, %v3231
    %v3292 = vpack.c.b16 %v3236, %v3234
    %v3293 = vpack.c.b16 %v3237, %v3235
    %v3294 = vpack.c.b16 %v3240, %v3238
    %v3295 = vpack.c.b16 %v3241, %v3239
    %v3296 = vpack.c.b16 %v3244, %v3242
    %v3297 = vpack.c.b16 %v3245, %v3243
    %v3298 = vpack.c.b16 %v3248, %v3246
    %v3299 = vpack.c.b16 %v3249, %v3247
    %v3300 = vpack.c.b16 %v3252, %v3250
    %v3301 = vpack.c.b16 %v3253, %v3251
    %v3302 = vpack.c.b16 %v3256, %v3254
    %v3303 = vpack.c.b16 %v3257, %v3255
    %v3304 = vpack.c.b16 %v3260, %v3258
    %v3305 = vpack.c.b16 %v3261, %v3259
    %v3306 = vpack.c.b16 %v3264, %v3262
    %v3307 = vpack.c.b16 %v3265, %v3263
    %v3308 = vpack.c.b16 %v3268, %v3266
    %v3309 = vpack.c.b16 %v3269, %v3267
    %v3310 = vpack.c.b16 %v3272, %v3270
    %v3311 = vpack.c.b16 %v3273, %v3271
    %v3312 = vpack.c.b16 %v3276, %v3274
    %v3313 = vpack.c.b16 %v3277, %v3275
    %v3314 = vpack.c.b16 %v3280, %v3278
    %v3315 = vpack.c.b16 %v3281, %v3279
    %v3316 = vpack.c.b16 %v3284, %v3282
    %v3317 = vpack.c.b16 %v3285, %v3283
    %3350 = vmatprep.subr.bf16.mxu0 %v3301
    %3351 = vmatpush1.bf16.msra.mxu0 %v3300
    %3352 = vmatprep.subr.bf16.mxu0 %v3299
    %3353 = vmatpush1.bf16.msra.mxu0 %v3298
    %3354 = vmatprep.subr.bf16.mxu0 %v3297
    %3355 = vmatpush1.bf16.msra.mxu0 %v3296
    %3356 = vmatprep.subr.bf16.mxu0 %v3295
    %3357 = vmatpush1.bf16.msra.mxu0 %v3294
    %3358 = vmatprep.subr.bf16.mxu0 %v3293
    %3359 = vmatpush1.bf16.msra.mxu0 %v3292
    %3360 = vmatprep.subr.bf16.mxu0 %v3291
    %3361 = vmatpush1.bf16.msra.mxu0 %v3290
    %3362 = vmatprep.subr.bf16.mxu0 %v3289
    %3363 = vmatpush1.bf16.msra.mxu0 %v3288
    %3364 = vmatprep.subr.bf16.mxu0 %v3287
    %3365 = vmatpush1.bf16.msra.mxu0 %v3286
    %3366 = vmatprep.subr.bf16.mxu0 %v3317
    %3367 = vmatpush2.bf16.msra.mxu0 %v3316
    %3368 = vmatprep.subr.bf16.mxu0 %v3315
    %3369 = vmatpush2.bf16.msra.mxu0 %v3314
    %3370 = vmatprep.subr.bf16.mxu0 %v3313
    %3371 = vmatpush2.bf16.msra.mxu0 %v3312
    %3372 = vmatprep.subr.bf16.mxu0 %v3311
    %3373 = vmatpush2.bf16.msra.mxu0 %v3310
    %3374 = vmatprep.subr.bf16.mxu0 %v3309
    %3375 = vmatpush2.bf16.msra.mxu0 %v3308
    %3376 = vmatprep.subr.bf16.mxu0 %v3307
    %3377 = vmatpush2.bf16.msra.mxu0 %v3306
    %3378 = vmatprep.subr.bf16.mxu0 %v3305
    %3379 = vmatpush2.bf16.msra.mxu0 %v3304
    %3380 = vmatprep.subr.bf16.mxu0 %v3303
    %3381 = vmatpush2.bf16.msra.mxu0 %v3302
    %3382 = vmatprep.mubr.bf16.mxu0 %v3187
    %3383 = vmatmul.mubr.bf16.gmra.mxu0 %v3186
    %v3384 = vpop.f32.mrf.mxu0
    %v3385 = vadd.f32 0.0, %v3384
    %v3386 = vpop.f32.mrf.mxu0
    %v3387 = vadd.f32 0.0, %v3386
    %v3388 = vpop.f32.mrf.mxu0
    %v3389 = vpop.f32.mrf.mxu0
    %3390 = vdwg.mxu0
    %v3391 = vadd.f32 %v3095, %v3385
    %v3392 = vadd.f32 %v3097, %v3387
    %s3393 = scalar_lea.vmem %s5, 768
    %v3394 = vld [vmem:[%s3393] sm:$0xff]
    %v3395 = vld [vmem:[%s3393 + $0x8] sm:$0xff]
    %v3396 = vld [vmem:[%s3393 + $0x10] sm:$0xff]
    %v3397 = vld [vmem:[%s3393 + $0x18] sm:$0xff]
    %v3398 = vld [vmem:[%s3393 + $0x20] sm:$0xff]
    %v3399 = vld [vmem:[%s3393 + $0x28] sm:$0xff]
    %v3400 = vld [vmem:[%s3393 + $0x30] sm:$0xff]
    %v3401 = vld [vmem:[%s3393 + $0x38] sm:$0xff]
    %v3402 = vld [vmem:[%s3393 + $0x40] sm:$0xff]
    %v3403 = vld [vmem:[%s3393 + $0x48] sm:$0xff]
    %v3404 = vld [vmem:[%s3393 + $0x50] sm:$0xff]
    %v3405 = vld [vmem:[%s3393 + $0x58] sm:$0xff]
    %v3406 = vld [vmem:[%s3393 + $0x60] sm:$0xff]
    %v3407 = vld [vmem:[%s3393 + $0x68] sm:$0xff]
    %v3408 = vld [vmem:[%s3393 + $0x70] sm:$0xff]
    %v3409 = vld [vmem:[%s3393 + $0x78] sm:$0xff]
    %v3410 = vld [vmem:[%s3393 + $0x80] sm:$0xff]
    %v3411 = vld [vmem:[%s3393 + $0x88] sm:$0xff]
    %v3412 = vld [vmem:[%s3393 + $0x90] sm:$0xff]
    %v3413 = vld [vmem:[%s3393 + $0x98] sm:$0xff]
    %v3414 = vld [vmem:[%s3393 + $0xa0] sm:$0xff]
    %v3415 = vld [vmem:[%s3393 + $0xa8] sm:$0xff]
    %v3416 = vld [vmem:[%s3393 + $0xb0] sm:$0xff]
    %v3417 = vld [vmem:[%s3393 + $0xb8] sm:$0xff]
    %v3418 = vld [vmem:[%s3393 + $0xc0] sm:$0xff]
    %v3419 = vld [vmem:[%s3393 + $0xc8] sm:$0xff]
    %v3420 = vld [vmem:[%s3393 + $0xd0] sm:$0xff]
    %v3421 = vld [vmem:[%s3393 + $0xd8] sm:$0xff]
    %v3422 = vld [vmem:[%s3393 + $0xe0] sm:$0xff]
    %v3423 = vld [vmem:[%s3393 + $0xe8] sm:$0xff]
    %v3424 = vld [vmem:[%s3393 + $0xf0] sm:$0xff]
    %v3425 = vld [vmem:[%s3393 + $0xf8] sm:$0xff]
    %v3426 = vrot.slane %v3178, 1
    %v3427 = vsel %vm1613, %v3180, %v3426
    %v3428 = vrot.slane %v3179, 1
    %v3429 = vsel %vm1613, %v3181, %v3428
    %v3430 = vpack.c.b16 %v3427, %v3427
    %v3431 = vpack.c.b16 %v3429, %v3429
    %v3466 = vunpack.c.l.b16 %v3394
    %v3467 = vunpack.c.h.b16 %v3394
    %v3468 = vunpack.c.l.b16 %v3395
    %v3469 = vunpack.c.h.b16 %v3395
    %v3470 = vunpack.c.l.b16 %v3396
    %v3471 = vunpack.c.h.b16 %v3396
    %v3472 = vunpack.c.l.b16 %v3397
    %v3473 = vunpack.c.h.b16 %v3397
    %v3474 = vunpack.c.l.b16 %v3398
    %v3475 = vunpack.c.h.b16 %v3398
    %v3476 = vunpack.c.l.b16 %v3399
    %v3477 = vunpack.c.h.b16 %v3399
    %v3478 = vunpack.c.l.b16 %v3400
    %v3479 = vunpack.c.h.b16 %v3400
    %v3480 = vunpack.c.l.b16 %v3401
    %v3481 = vunpack.c.h.b16 %v3401
    %v3482 = vunpack.c.l.b16 %v3402
    %v3483 = vunpack.c.h.b16 %v3402
    %v3484 = vunpack.c.l.b16 %v3403
    %v3485 = vunpack.c.h.b16 %v3403
    %v3486 = vunpack.c.l.b16 %v3404
    %v3487 = vunpack.c.h.b16 %v3404
    %v3488 = vunpack.c.l.b16 %v3405
    %v3489 = vunpack.c.h.b16 %v3405
    %v3490 = vunpack.c.l.b16 %v3406
    %v3491 = vunpack.c.h.b16 %v3406
    %v3492 = vunpack.c.l.b16 %v3407
    %v3493 = vunpack.c.h.b16 %v3407
    %v3494 = vunpack.c.l.b16 %v3408
    %v3495 = vunpack.c.h.b16 %v3408
    %v3496 = vunpack.c.l.b16 %v3409
    %v3497 = vunpack.c.h.b16 %v3409
    %v3498 = vunpack.c.l.b16 %v3410
    %v3499 = vunpack.c.h.b16 %v3410
    %v3500 = vunpack.c.l.b16 %v3411
    %v3501 = vunpack.c.h.b16 %v3411
    %v3502 = vunpack.c.l.b16 %v3412
    %v3503 = vunpack.c.h.b16 %v3412
    %v3504 = vunpack.c.l.b16 %v3413
    %v3505 = vunpack.c.h.b16 %v3413
    %v3506 = vunpack.c.l.b16 %v3414
    %v3507 = vunpack.c.h.b16 %v3414
    %v3508 = vunpack.c.l.b16 %v3415
    %v3509 = vunpack.c.h.b16 %v3415
    %v3510 = vunpack.c.l.b16 %v3416
    %v3511 = vunpack.c.h.b16 %v3416
    %v3512 = vunpack.c.l.b16 %v3417
    %v3513 = vunpack.c.h.b16 %v3417
    %v3514 = vunpack.c.l.b16 %v3418
    %v3515 = vunpack.c.h.b16 %v3418
    %v3516 = vunpack.c.l.b16 %v3419
    %v3517 = vunpack.c.h.b16 %v3419
    %v3518 = vunpack.c.l.b16 %v3420
    %v3519 = vunpack.c.h.b16 %v3420
    %v3520 = vunpack.c.l.b16 %v3421
    %v3521 = vunpack.c.h.b16 %v3421
    %v3522 = vunpack.c.l.b16 %v3422
    %v3523 = vunpack.c.h.b16 %v3422
    %v3524 = vunpack.c.l.b16 %v3423
    %v3525 = vunpack.c.h.b16 %v3423
    %v3526 = vunpack.c.l.b16 %v3424
    %v3527 = vunpack.c.h.b16 %v3424
    %v3528 = vunpack.c.l.b16 %v3425
    %v3529 = vunpack.c.h.b16 %v3425
    %v3530 = vpack.c.b16 %v3468, %v3466
    %v3531 = vpack.c.b16 %v3469, %v3467
    %v3532 = vpack.c.b16 %v3472, %v3470
    %v3533 = vpack.c.b16 %v3473, %v3471
    %v3534 = vpack.c.b16 %v3476, %v3474
    %v3535 = vpack.c.b16 %v3477, %v3475
    %v3536 = vpack.c.b16 %v3480, %v3478
    %v3537 = vpack.c.b16 %v3481, %v3479
    %v3538 = vpack.c.b16 %v3484, %v3482
    %v3539 = vpack.c.b16 %v3485, %v3483
    %v3540 = vpack.c.b16 %v3488, %v3486
    %v3541 = vpack.c.b16 %v3489, %v3487
    %v3542 = vpack.c.b16 %v3492, %v3490
    %v3543 = vpack.c.b16 %v3493, %v3491
    %v3544 = vpack.c.b16 %v3496, %v3494
    %v3545 = vpack.c.b16 %v3497, %v3495
    %v3546 = vpack.c.b16 %v3500, %v3498
    %v3547 = vpack.c.b16 %v3501, %v3499
    %v3548 = vpack.c.b16 %v3504, %v3502
    %v3549 = vpack.c.b16 %v3505, %v3503
    %v3550 = vpack.c.b16 %v3508, %v3506
    %v3551 = vpack.c.b16 %v3509, %v3507
    %v3552 = vpack.c.b16 %v3512, %v3510
    %v3553 = vpack.c.b16 %v3513, %v3511
    %v3554 = vpack.c.b16 %v3516, %v3514
    %v3555 = vpack.c.b16 %v3517, %v3515
    %v3556 = vpack.c.b16 %v3520, %v3518
    %v3557 = vpack.c.b16 %v3521, %v3519
    %v3558 = vpack.c.b16 %v3524, %v3522
    %v3559 = vpack.c.b16 %v3525, %v3523
    %v3560 = vpack.c.b16 %v3528, %v3526
    %v3561 = vpack.c.b16 %v3529, %v3527
    %3594 = vmatprep.subr.bf16.mxu0 %v3545
    %3595 = vmatpush1.bf16.msra.mxu0 %v3544
    %3596 = vmatprep.subr.bf16.mxu0 %v3543
    %3597 = vmatpush1.bf16.msra.mxu0 %v3542
    %3598 = vmatprep.subr.bf16.mxu0 %v3541
    %3599 = vmatpush1.bf16.msra.mxu0 %v3540
    %3600 = vmatprep.subr.bf16.mxu0 %v3539
    %3601 = vmatpush1.bf16.msra.mxu0 %v3538
    %3602 = vmatprep.subr.bf16.mxu0 %v3537
    %3603 = vmatpush1.bf16.msra.mxu0 %v3536
    %3604 = vmatprep.subr.bf16.mxu0 %v3535
    %3605 = vmatpush1.bf16.msra.mxu0 %v3534
    %3606 = vmatprep.subr.bf16.mxu0 %v3533
    %3607 = vmatpush1.bf16.msra.mxu0 %v3532
    %3608 = vmatprep.subr.bf16.mxu0 %v3531
    %3609 = vmatpush1.bf16.msra.mxu0 %v3530
    %3610 = vmatprep.subr.bf16.mxu0 %v3561
    %3611 = vmatpush2.bf16.msra.mxu0 %v3560
    %3612 = vmatprep.subr.bf16.mxu0 %v3559
    %3613 = vmatpush2.bf16.msra.mxu0 %v3558
    %3614 = vmatprep.subr.bf16.mxu0 %v3557
    %3615 = vmatpush2.bf16.msra.mxu0 %v3556
    %3616 = vmatprep.subr.bf16.mxu0 %v3555
    %3617 = vmatpush2.bf16.msra.mxu0 %v3554
    %3618 = vmatprep.subr.bf16.mxu0 %v3553
    %3619 = vmatpush2.bf16.msra.mxu0 %v3552
    %3620 = vmatprep.subr.bf16.mxu0 %v3551
    %3621 = vmatpush2.bf16.msra.mxu0 %v3550
    %3622 = vmatprep.subr.bf16.mxu0 %v3549
    %3623 = vmatpush2.bf16.msra.mxu0 %v3548
    %3624 = vmatprep.subr.bf16.mxu0 %v3547
    %3625 = vmatpush2.bf16.msra.mxu0 %v3546
    %3626 = vmatprep.mubr.bf16.mxu0 %v3431
    %3627 = vmatmul.mubr.bf16.gmra.mxu0 %v3430
    %v3628 = vpop.f32.mrf.mxu0
    %v3629 = vadd.f32 0.0, %v3628
    %v3630 = vpop.f32.mrf.mxu0
    %v3631 = vadd.f32 0.0, %v3630
    %v3632 = vpop.f32.mrf.mxu0
    %v3633 = vpop.f32.mrf.mxu0
    %3634 = vdwg.mxu0
    %v3635 = vadd.f32 %v3391, %v3629
    %v3636 = vadd.f32 %v3392, %v3631
    %s3637 = scalar_lea.vmem %s5, 1024
    %v3638 = vld [vmem:[%s3637] sm:$0xff]
    %v3639 = vld [vmem:[%s3637 + $0x8] sm:$0xff]
    %v3640 = vld [vmem:[%s3637 + $0x10] sm:$0xff]
    %v3641 = vld [vmem:[%s3637 + $0x18] sm:$0xff]
    %v3642 = vld [vmem:[%s3637 + $0x20] sm:$0xff]
    %v3643 = vld [vmem:[%s3637 + $0x28] sm:$0xff]
    %v3644 = vld [vmem:[%s3637 + $0x30] sm:$0xff]
    %v3645 = vld [vmem:[%s3637 + $0x38] sm:$0xff]
    %v3646 = vld [vmem:[%s3637 + $0x40] sm:$0xff]
    %v3647 = vld [vmem:[%s3637 + $0x48] sm:$0xff]
    %v3648 = vld [vmem:[%s3637 + $0x50] sm:$0xff]
    %v3649 = vld [vmem:[%s3637 + $0x58] sm:$0xff]
    %v3650 = vld [vmem:[%s3637 + $0x60] sm:$0xff]
    %v3651 = vld [vmem:[%s3637 + $0x68] sm:$0xff]
    %v3652 = vld [vmem:[%s3637 + $0x70] sm:$0xff]
    %v3653 = vld [vmem:[%s3637 + $0x78] sm:$0xff]
    %v3654 = vld [vmem:[%s3637 + $0x80] sm:$0xff]
    %v3655 = vld [vmem:[%s3637 + $0x88] sm:$0xff]
    %v3656 = vld [vmem:[%s3637 + $0x90] sm:$0xff]
    %v3657 = vld [vmem:[%s3637 + $0x98] sm:$0xff]
    %v3658 = vld [vmem:[%s3637 + $0xa0] sm:$0xff]
    %v3659 = vld [vmem:[%s3637 + $0xa8] sm:$0xff]
    %v3660 = vld [vmem:[%s3637 + $0xb0] sm:$0xff]
    %v3661 = vld [vmem:[%s3637 + $0xb8] sm:$0xff]
    %v3662 = vld [vmem:[%s3637 + $0xc0] sm:$0xff]
    %v3663 = vld [vmem:[%s3637 + $0xc8] sm:$0xff]
    %v3664 = vld [vmem:[%s3637 + $0xd0] sm:$0xff]
    %v3665 = vld [vmem:[%s3637 + $0xd8] sm:$0xff]
    %v3666 = vld [vmem:[%s3637 + $0xe0] sm:$0xff]
    %v3667 = vld [vmem:[%s3637 + $0xe8] sm:$0xff]
    %v3668 = vld [vmem:[%s3637 + $0xf0] sm:$0xff]
    %v3669 = vld [vmem:[%s3637 + $0xf8] sm:$0xff]
    %v3671 = vunpack.c.l.s4 1966171168
    %v3672 = vunpack.c.0.s8 %v3671
    %v3673 = vlaneseq
    %v3674 = vshrl.u32 %v3673, 7
    %v3675 = vsub.s32 %v3672, %v3674
    %v3676 = vrot.slane %v2543, %v3675
    %v3677 = vcombine.high %v3676, %v3676
    %v3679 = vunpack.c.l.s4 1966171168
    %v3680 = vunpack.c.0.s8 %v3679
    %v3681 = vlaneseq
    %v3682 = vshrl.u32 %v3681, 7
    %v3683 = vsub.s32 %v3680, %v3682
    %v3684 = vrot.slane %v3676, %v3683
    %v3686 = vunpack.c.l.s4 1966171168
    %v3687 = vunpack.c.0.s8 %v3686
    %v3688 = vlaneseq
    %v3689 = vshrl.u32 %v3688, 7
    %v3690 = vsub.s32 %v3687, %v3689
    %v3691 = vrot.slane %v3677, %v3690
    %v3693 = vunpack.c.l.s4 1966171168
    %v3694 = vunpack.c.0.s8 %v3693
    %v3695 = vlaneseq
    %v3696 = vshrl.u32 %v3695, 7
    %v3697 = vsub.s32 %v3694, %v3696
    %v3698 = vrot.slane %v2546, %v3697
    %v3699 = vcombine.high %v3698, %v3698
    %v3701 = vunpack.c.l.s4 1966171168
    %v3702 = vunpack.c.0.s8 %v3701
    %v3703 = vlaneseq
    %v3704 = vshrl.u32 %v3703, 7
    %v3705 = vsub.s32 %v3702, %v3704
    %v3706 = vrot.slane %v3698, %v3705
    %v3708 = vunpack.c.l.s4 1966171168
    %v3709 = vunpack.c.0.s8 %v3708
    %v3710 = vlaneseq
    %v3711 = vshrl.u32 %v3710, 7
    %v3712 = vsub.s32 %v3709, %v3711
    %v3713 = vrot.slane %v3699, %v3712
    %v3714 = vunpack.c.l.b16 %v3684
    %v3715 = vunpack.c.l.b16 %v3691
    %v3716 = vunpack.c.l.b16 %v3706
    %v3717 = vunpack.c.l.b16 %v3713
    %v3718 = vrot.slane %v3716, 7
    %v3719 = vsel %vm1613, %v3718, %v3714
    %v3720 = vrot.slane %v3717, 7
    %v3721 = vsel %vm1613, %v3720, %v3715
    %v3722 = vpack.c.b16 %v3719, %v3719
    %v3723 = vpack.c.b16 %v3721, %v3721
    %v3758 = vunpack.c.l.b16 %v3638
    %v3759 = vunpack.c.h.b16 %v3638
    %v3760 = vunpack.c.l.b16 %v3639
    %v3761 = vunpack.c.h.b16 %v3639
    %v3762 = vunpack.c.l.b16 %v3640
    %v3763 = vunpack.c.h.b16 %v3640
    %v3764 = vunpack.c.l.b16 %v3641
    %v3765 = vunpack.c.h.b16 %v3641
    %v3766 = vunpack.c.l.b16 %v3642
    %v3767 = vunpack.c.h.b16 %v3642
    %v3768 = vunpack.c.l.b16 %v3643
    %v3769 = vunpack.c.h.b16 %v3643
    %v3770 = vunpack.c.l.b16 %v3644
    %v3771 = vunpack.c.h.b16 %v3644
    %v3772 = vunpack.c.l.b16 %v3645
    %v3773 = vunpack.c.h.b16 %v3645
    %v3774 = vunpack.c.l.b16 %v3646
    %v3775 = vunpack.c.h.b16 %v3646
    %v3776 = vunpack.c.l.b16 %v3647
    %v3777 = vunpack.c.h.b16 %v3647
    %v3778 = vunpack.c.l.b16 %v3648
    %v3779 = vunpack.c.h.b16 %v3648
    %v3780 = vunpack.c.l.b16 %v3649
    %v3781 = vunpack.c.h.b16 %v3649
    %v3782 = vunpack.c.l.b16 %v3650
    %v3783 = vunpack.c.h.b16 %v3650
    %v3784 = vunpack.c.l.b16 %v3651
    %v3785 = vunpack.c.h.b16 %v3651
    %v3786 = vunpack.c.l.b16 %v3652
    %v3787 = vunpack.c.h.b16 %v3652
    %v3788 = vunpack.c.l.b16 %v3653
    %v3789 = vunpack.c.h.b16 %v3653
    %v3790 = vunpack.c.l.b16 %v3654
    %v3791 = vunpack.c.h.b16 %v3654
    %v3792 = vunpack.c.l.b16 %v3655
    %v3793 = vunpack.c.h.b16 %v3655
    %v3794 = vunpack.c.l.b16 %v3656
    %v3795 = vunpack.c.h.b16 %v3656
    %v3796 = vunpack.c.l.b16 %v3657
    %v3797 = vunpack.c.h.b16 %v3657
    %v3798 = vunpack.c.l.b16 %v3658
    %v3799 = vunpack.c.h.b16 %v3658
    %v3800 = vunpack.c.l.b16 %v3659
    %v3801 = vunpack.c.h.b16 %v3659
    %v3802 = vunpack.c.l.b16 %v3660
    %v3803 = vunpack.c.h.b16 %v3660
    %v3804 = vunpack.c.l.b16 %v3661
    %v3805 = vunpack.c.h.b16 %v3661
    %v3806 = vunpack.c.l.b16 %v3662
    %v3807 = vunpack.c.h.b16 %v3662
    %v3808 = vunpack.c.l.b16 %v3663
    %v3809 = vunpack.c.h.b16 %v3663
    %v3810 = vunpack.c.l.b16 %v3664
    %v3811 = vunpack.c.h.b16 %v3664
    %v3812 = vunpack.c.l.b16 %v3665
    %v3813 = vunpack.c.h.b16 %v3665
    %v3814 = vunpack.c.l.b16 %v3666
    %v3815 = vunpack.c.h.b16 %v3666
    %v3816 = vunpack.c.l.b16 %v3667
    %v3817 = vunpack.c.h.b16 %v3667
    %v3818 = vunpack.c.l.b16 %v3668
    %v3819 = vunpack.c.h.b16 %v3668
    %v3820 = vunpack.c.l.b16 %v3669
    %v3821 = vunpack.c.h.b16 %v3669
    %v3822 = vpack.c.b16 %v3760, %v3758
    %v3823 = vpack.c.b16 %v3761, %v3759
    %v3824 = vpack.c.b16 %v3764, %v3762
    %v3825 = vpack.c.b16 %v3765, %v3763
    %v3826 = vpack.c.b16 %v3768, %v3766
    %v3827 = vpack.c.b16 %v3769, %v3767
    %v3828 = vpack.c.b16 %v3772, %v3770
    %v3829 = vpack.c.b16 %v3773, %v3771
    %v3830 = vpack.c.b16 %v3776, %v3774
    %v3831 = vpack.c.b16 %v3777, %v3775
    %v3832 = vpack.c.b16 %v3780, %v3778
    %v3833 = vpack.c.b16 %v3781, %v3779
    %v3834 = vpack.c.b16 %v3784, %v3782
    %v3835 = vpack.c.b16 %v3785, %v3783
    %v3836 = vpack.c.b16 %v3788, %v3786
    %v3837 = vpack.c.b16 %v3789, %v3787
    %v3838 = vpack.c.b16 %v3792, %v3790
    %v3839 = vpack.c.b16 %v3793, %v3791
    %v3840 = vpack.c.b16 %v3796, %v3794
    %v3841 = vpack.c.b16 %v3797, %v3795
    %v3842 = vpack.c.b16 %v3800, %v3798
    %v3843 = vpack.c.b16 %v3801, %v3799
    %v3844 = vpack.c.b16 %v3804, %v3802
    %v3845 = vpack.c.b16 %v3805, %v3803
    %v3846 = vpack.c.b16 %v3808, %v3806
    %v3847 = vpack.c.b16 %v3809, %v3807
    %v3848 = vpack.c.b16 %v3812, %v3810
    %v3849 = vpack.c.b16 %v3813, %v3811
    %v3850 = vpack.c.b16 %v3816, %v3814
    %v3851 = vpack.c.b16 %v3817, %v3815
    %v3852 = vpack.c.b16 %v3820, %v3818
    %v3853 = vpack.c.b16 %v3821, %v3819
    %3886 = vmatprep.subr.bf16.mxu0 %v3837
    %3887 = vmatpush1.bf16.msra.mxu0 %v3836
    %3888 = vmatprep.subr.bf16.mxu0 %v3835
    %3889 = vmatpush1.bf16.msra.mxu0 %v3834
    %3890 = vmatprep.subr.bf16.mxu0 %v3833
    %3891 = vmatpush1.bf16.msra.mxu0 %v3832
    %3892 = vmatprep.subr.bf16.mxu0 %v3831
    %3893 = vmatpush1.bf16.msra.mxu0 %v3830
    %3894 = vmatprep.subr.bf16.mxu0 %v3829
    %3895 = vmatpush1.bf16.msra.mxu0 %v3828
    %3896 = vmatprep.subr.bf16.mxu0 %v3827
    %3897 = vmatpush1.bf16.msra.mxu0 %v3826
    %3898 = vmatprep.subr.bf16.mxu0 %v3825
    %3899 = vmatpush1.bf16.msra.mxu0 %v3824
    %3900 = vmatprep.subr.bf16.mxu0 %v3823
    %3901 = vmatpush1.bf16.msra.mxu0 %v3822
    %3902 = vmatprep.subr.bf16.mxu0 %v3853
    %3903 = vmatpush2.bf16.msra.mxu0 %v3852
    %3904 = vmatprep.subr.bf16.mxu0 %v3851
    %3905 = vmatpush2.bf16.msra.mxu0 %v3850
    %3906 = vmatprep.subr.bf16.mxu0 %v3849
    %3907 = vmatpush2.bf16.msra.mxu0 %v3848
    %3908 = vmatprep.subr.bf16.mxu0 %v3847
    %3909 = vmatpush2.bf16.msra.mxu0 %v3846
    %3910 = vmatprep.subr.bf16.mxu0 %v3845
    %3911 = vmatpush2.bf16.msra.mxu0 %v3844
    %3912 = vmatprep.subr.bf16.mxu0 %v3843
    %3913 = vmatpush2.bf16.msra.mxu0 %v3842
    %3914 = vmatprep.subr.bf16.mxu0 %v3841
    %3915 = vmatpush2.bf16.msra.mxu0 %v3840
    %3916 = vmatprep.subr.bf16.mxu0 %v3839
    %3917 = vmatpush2.bf16.msra.mxu0 %v3838
    %3918 = vmatprep.mubr.bf16.mxu0 %v3723
    %3919 = vmatmul.mubr.bf16.gmra.mxu0 %v3722
    %v3920 = vpop.f32.mrf.mxu0
    %v3921 = vadd.f32 0.0, %v3920
    %v3922 = vpop.f32.mrf.mxu0
    %v3923 = vadd.f32 0.0, %v3922
    %v3924 = vpop.f32.mrf.mxu0
    %v3925 = vpop.f32.mrf.mxu0
    %3926 = vdwg.mxu0
    %v3927 = vadd.f32 %v3635, %v3921
    %v3928 = vadd.f32 %v3636, %v3923
    %s3929 = scalar_lea.vmem %s5, 1280
    %v3930 = vld [vmem:[%s3929] sm:$0xff]
    %v3931 = vld [vmem:[%s3929 + $0x8] sm:$0xff]
    %v3932 = vld [vmem:[%s3929 + $0x10] sm:$0xff]
    %v3933 = vld [vmem:[%s3929 + $0x18] sm:$0xff]
    %v3934 = vld [vmem:[%s3929 + $0x20] sm:$0xff]
    %v3935 = vld [vmem:[%s3929 + $0x28] sm:$0xff]
    %v3936 = vld [vmem:[%s3929 + $0x30] sm:$0xff]
    %v3937 = vld [vmem:[%s3929 + $0x38] sm:$0xff]
    %v3938 = vld [vmem:[%s3929 + $0x40] sm:$0xff]
    %v3939 = vld [vmem:[%s3929 + $0x48] sm:$0xff]
    %v3940 = vld [vmem:[%s3929 + $0x50] sm:$0xff]
    %v3941 = vld [vmem:[%s3929 + $0x58] sm:$0xff]
    %v3942 = vld [vmem:[%s3929 + $0x60] sm:$0xff]
    %v3943 = vld [vmem:[%s3929 + $0x68] sm:$0xff]
    %v3944 = vld [vmem:[%s3929 + $0x70] sm:$0xff]
    %v3945 = vld [vmem:[%s3929 + $0x78] sm:$0xff]
    %v3946 = vld [vmem:[%s3929 + $0x80] sm:$0xff]
    %v3947 = vld [vmem:[%s3929 + $0x88] sm:$0xff]
    %v3948 = vld [vmem:[%s3929 + $0x90] sm:$0xff]
    %v3949 = vld [vmem:[%s3929 + $0x98] sm:$0xff]
    %v3950 = vld [vmem:[%s3929 + $0xa0] sm:$0xff]
    %v3951 = vld [vmem:[%s3929 + $0xa8] sm:$0xff]
    %v3952 = vld [vmem:[%s3929 + $0xb0] sm:$0xff]
    %v3953 = vld [vmem:[%s3929 + $0xb8] sm:$0xff]
    %v3954 = vld [vmem:[%s3929 + $0xc0] sm:$0xff]
    %v3955 = vld [vmem:[%s3929 + $0xc8] sm:$0xff]
    %v3956 = vld [vmem:[%s3929 + $0xd0] sm:$0xff]
    %v3957 = vld [vmem:[%s3929 + $0xd8] sm:$0xff]
    %v3958 = vld [vmem:[%s3929 + $0xe0] sm:$0xff]
    %v3959 = vld [vmem:[%s3929 + $0xe8] sm:$0xff]
    %v3960 = vld [vmem:[%s3929 + $0xf0] sm:$0xff]
    %v3961 = vld [vmem:[%s3929 + $0xf8] sm:$0xff]
    %v3962 = vrot.slane %v3714, 1
    %v3963 = vsel %vm1613, %v3716, %v3962
    %v3964 = vrot.slane %v3715, 1
    %v3965 = vsel %vm1613, %v3717, %v3964
    %v3966 = vpack.c.b16 %v3963, %v3963
    %v3967 = vpack.c.b16 %v3965, %v3965
    %v4002 = vunpack.c.l.b16 %v3930
    %v4003 = vunpack.c.h.b16 %v3930
    %v4004 = vunpack.c.l.b16 %v3931
    %v4005 = vunpack.c.h.b16 %v3931
    %v4006 = vunpack.c.l.b16 %v3932
    %v4007 = vunpack.c.h.b16 %v3932
    %v4008 = vunpack.c.l.b16 %v3933
    %v4009 = vunpack.c.h.b16 %v3933
    %v4010 = vunpack.c.l.b16 %v3934
    %v4011 = vunpack.c.h.b16 %v3934
    %v4012 = vunpack.c.l.b16 %v3935
    %v4013 = vunpack.c.h.b16 %v3935
    %v4014 = vunpack.c.l.b16 %v3936
    %v4015 = vunpack.c.h.b16 %v3936
    %v4016 = vunpack.c.l.b16 %v3937
    %v4017 = vunpack.c.h.b16 %v3937
    %v4018 = vunpack.c.l.b16 %v3938
    %v4019 = vunpack.c.h.b16 %v3938
    %v4020 = vunpack.c.l.b16 %v3939
    %v4021 = vunpack.c.h.b16 %v3939
    %v4022 = vunpack.c.l.b16 %v3940
    %v4023 = vunpack.c.h.b16 %v3940
    %v4024 = vunpack.c.l.b16 %v3941
    %v4025 = vunpack.c.h.b16 %v3941
    %v4026 = vunpack.c.l.b16 %v3942
    %v4027 = vunpack.c.h.b16 %v3942
    %v4028 = vunpack.c.l.b16 %v3943
    %v4029 = vunpack.c.h.b16 %v3943
    %v4030 = vunpack.c.l.b16 %v3944
    %v4031 = vunpack.c.h.b16 %v3944
    %v4032 = vunpack.c.l.b16 %v3945
    %v4033 = vunpack.c.h.b16 %v3945
    %v4034 = vunpack.c.l.b16 %v3946
    %v4035 = vunpack.c.h.b16 %v3946
    %v4036 = vunpack.c.l.b16 %v3947
    %v4037 = vunpack.c.h.b16 %v3947
    %v4038 = vunpack.c.l.b16 %v3948
    %v4039 = vunpack.c.h.b16 %v3948
    %v4040 = vunpack.c.l.b16 %v3949
    %v4041 = vunpack.c.h.b16 %v3949
    %v4042 = vunpack.c.l.b16 %v3950
    %v4043 = vunpack.c.h.b16 %v3950
    %v4044 = vunpack.c.l.b16 %v3951
    %v4045 = vunpack.c.h.b16 %v3951
    %v4046 = vunpack.c.l.b16 %v3952
    %v4047 = vunpack.c.h.b16 %v3952
    %v4048 = vunpack.c.l.b16 %v3953
    %v4049 = vunpack.c.h.b16 %v3953
    %v4050 = vunpack.c.l.b16 %v3954
    %v4051 = vunpack.c.h.b16 %v3954
    %v4052 = vunpack.c.l.b16 %v3955
    %v4053 = vunpack.c.h.b16 %v3955
    %v4054 = vunpack.c.l.b16 %v3956
    %v4055 = vunpack.c.h.b16 %v3956
    %v4056 = vunpack.c.l.b16 %v3957
    %v4057 = vunpack.c.h.b16 %v3957
    %v4058 = vunpack.c.l.b16 %v3958
    %v4059 = vunpack.c.h.b16 %v3958
    %v4060 = vunpack.c.l.b16 %v3959
    %v4061 = vunpack.c.h.b16 %v3959
    %v4062 = vunpack.c.l.b16 %v3960
    %v4063 = vunpack.c.h.b16 %v3960
    %v4064 = vunpack.c.l.b16 %v3961
    %v4065 = vunpack.c.h.b16 %v3961
    %v4066 = vpack.c.b16 %v4004, %v4002
    %v4067 = vpack.c.b16 %v4005, %v4003
    %v4068 = vpack.c.b16 %v4008, %v4006
    %v4069 = vpack.c.b16 %v4009, %v4007
    %v4070 = vpack.c.b16 %v4012, %v4010
    %v4071 = vpack.c.b16 %v4013, %v4011
    %v4072 = vpack.c.b16 %v4016, %v4014
    %v4073 = vpack.c.b16 %v4017, %v4015
    %v4074 = vpack.c.b16 %v4020, %v4018
    %v4075 = vpack.c.b16 %v4021, %v4019
    %v4076 = vpack.c.b16 %v4024, %v4022
    %v4077 = vpack.c.b16 %v4025, %v4023
    %v4078 = vpack.c.b16 %v4028, %v4026
    %v4079 = vpack.c.b16 %v4029, %v4027
    %v4080 = vpack.c.b16 %v4032, %v4030
    %v4081 = vpack.c.b16 %v4033, %v4031
    %v4082 = vpack.c.b16 %v4036, %v4034
    %v4083 = vpack.c.b16 %v4037, %v4035
    %v4084 = vpack.c.b16 %v4040, %v4038
    %v4085 = vpack.c.b16 %v4041, %v4039
    %v4086 = vpack.c.b16 %v4044, %v4042
    %v4087 = vpack.c.b16 %v4045, %v4043
    %v4088 = vpack.c.b16 %v4048, %v4046
    %v4089 = vpack.c.b16 %v4049, %v4047
    %v4090 = vpack.c.b16 %v4052, %v4050
    %v4091 = vpack.c.b16 %v4053, %v4051
    %v4092 = vpack.c.b16 %v4056, %v4054
    %v4093 = vpack.c.b16 %v4057, %v4055
    %v4094 = vpack.c.b16 %v4060, %v4058
    %v4095 = vpack.c.b16 %v4061, %v4059
    %v4096 = vpack.c.b16 %v4064, %v4062
    %v4097 = vpack.c.b16 %v4065, %v4063
    %4130 = vmatprep.subr.bf16.mxu0 %v4081
    %4131 = vmatpush1.bf16.msra.mxu0 %v4080
    %4132 = vmatprep.subr.bf16.mxu0 %v4079
    %4133 = vmatpush1.bf16.msra.mxu0 %v4078
    %4134 = vmatprep.subr.bf16.mxu0 %v4077
    %4135 = vmatpush1.bf16.msra.mxu0 %v4076
    %4136 = vmatprep.subr.bf16.mxu0 %v4075
    %4137 = vmatpush1.bf16.msra.mxu0 %v4074
    %4138 = vmatprep.subr.bf16.mxu0 %v4073
    %4139 = vmatpush1.bf16.msra.mxu0 %v4072
    %4140 = vmatprep.subr.bf16.mxu0 %v4071
    %4141 = vmatpush1.bf16.msra.mxu0 %v4070
    %4142 = vmatprep.subr.bf16.mxu0 %v4069
    %4143 = vmatpush1.bf16.msra.mxu0 %v4068
    %4144 = vmatprep.subr.bf16.mxu0 %v4067
    %4145 = vmatpush1.bf16.msra.mxu0 %v4066
    %4146 = vmatprep.subr.bf16.mxu0 %v4097
    %4147 = vmatpush2.bf16.msra.mxu0 %v4096
    %4148 = vmatprep.subr.bf16.mxu0 %v4095
    %4149 = vmatpush2.bf16.msra.mxu0 %v4094
    %4150 = vmatprep.subr.bf16.mxu0 %v4093
    %4151 = vmatpush2.bf16.msra.mxu0 %v4092
    %4152 = vmatprep.subr.bf16.mxu0 %v4091
    %4153 = vmatpush2.bf16.msra.mxu0 %v4090
    %4154 = vmatprep.subr.bf16.mxu0 %v4089
    %4155 = vmatpush2.bf16.msra.mxu0 %v4088
    %4156 = vmatprep.subr.bf16.mxu0 %v4087
    %4157 = vmatpush2.bf16.msra.mxu0 %v4086
    %4158 = vmatprep.subr.bf16.mxu0 %v4085
    %4159 = vmatpush2.bf16.msra.mxu0 %v4084
    %4160 = vmatprep.subr.bf16.mxu0 %v4083
    %4161 = vmatpush2.bf16.msra.mxu0 %v4082
    %4162 = vmatprep.mubr.bf16.mxu0 %v3967
    %4163 = vmatmul.mubr.bf16.gmra.mxu0 %v3966
    %v4164 = vpop.f32.mrf.mxu0
    %v4165 = vadd.f32 0.0, %v4164
    %v4166 = vpop.f32.mrf.mxu0
    %v4167 = vadd.f32 0.0, %v4166
    %v4168 = vpop.f32.mrf.mxu0
    %v4169 = vpop.f32.mrf.mxu0
    %4170 = vdwg.mxu0
    %v4171 = vadd.f32 %v3927, %v4165
    %v4172 = vadd.f32 %v3928, %v4167
    %s4173 = scalar_lea.vmem %s5, 1536
    %v4174 = vld [vmem:[%s4173] sm:$0xff]
    %v4175 = vld [vmem:[%s4173 + $0x8] sm:$0xff]
    %v4176 = vld [vmem:[%s4173 + $0x10] sm:$0xff]
    %v4177 = vld [vmem:[%s4173 + $0x18] sm:$0xff]
    %v4178 = vld [vmem:[%s4173 + $0x20] sm:$0xff]
    %v4179 = vld [vmem:[%s4173 + $0x28] sm:$0xff]
    %v4180 = vld [vmem:[%s4173 + $0x30] sm:$0xff]
    %v4181 = vld [vmem:[%s4173 + $0x38] sm:$0xff]
    %v4182 = vld [vmem:[%s4173 + $0x40] sm:$0xff]
    %v4183 = vld [vmem:[%s4173 + $0x48] sm:$0xff]
    %v4184 = vld [vmem:[%s4173 + $0x50] sm:$0xff]
    %v4185 = vld [vmem:[%s4173 + $0x58] sm:$0xff]
    %v4186 = vld [vmem:[%s4173 + $0x60] sm:$0xff]
    %v4187 = vld [vmem:[%s4173 + $0x68] sm:$0xff]
    %v4188 = vld [vmem:[%s4173 + $0x70] sm:$0xff]
    %v4189 = vld [vmem:[%s4173 + $0x78] sm:$0xff]
    %v4190 = vld [vmem:[%s4173 + $0x80] sm:$0xff]
    %v4191 = vld [vmem:[%s4173 + $0x88] sm:$0xff]
    %v4192 = vld [vmem:[%s4173 + $0x90] sm:$0xff]
    %v4193 = vld [vmem:[%s4173 + $0x98] sm:$0xff]
    %v4194 = vld [vmem:[%s4173 + $0xa0] sm:$0xff]
    %v4195 = vld [vmem:[%s4173 + $0xa8] sm:$0xff]
    %v4196 = vld [vmem:[%s4173 + $0xb0] sm:$0xff]
    %v4197 = vld [vmem:[%s4173 + $0xb8] sm:$0xff]
    %v4198 = vld [vmem:[%s4173 + $0xc0] sm:$0xff]
    %v4199 = vld [vmem:[%s4173 + $0xc8] sm:$0xff]
    %v4200 = vld [vmem:[%s4173 + $0xd0] sm:$0xff]
    %v4201 = vld [vmem:[%s4173 + $0xd8] sm:$0xff]
    %v4202 = vld [vmem:[%s4173 + $0xe0] sm:$0xff]
    %v4203 = vld [vmem:[%s4173 + $0xe8] sm:$0xff]
    %v4204 = vld [vmem:[%s4173 + $0xf0] sm:$0xff]
    %v4205 = vld [vmem:[%s4173 + $0xf8] sm:$0xff]
    %v4207 = vunpack.c.l.s4 1966171168
    %v4208 = vunpack.c.0.s8 %v4207
    %v4209 = vlaneseq
    %v4210 = vshrl.u32 %v4209, 7
    %v4211 = vsub.s32 %v4208, %v4210
    %v4212 = vrot.slane %v2545, %v4211
    %v4213 = vcombine.high %v4212, %v4212
    %v4215 = vunpack.c.l.s4 1966171168
    %v4216 = vunpack.c.0.s8 %v4215
    %v4217 = vlaneseq
    %v4218 = vshrl.u32 %v4217, 7
    %v4219 = vsub.s32 %v4216, %v4218
    %v4220 = vrot.slane %v4212, %v4219
    %v4222 = vunpack.c.l.s4 1966171168
    %v4223 = vunpack.c.0.s8 %v4222
    %v4224 = vlaneseq
    %v4225 = vshrl.u32 %v4224, 7
    %v4226 = vsub.s32 %v4223, %v4225
    %v4227 = vrot.slane %v4213, %v4226
    %v4229 = vunpack.c.l.s4 1966171168
    %v4230 = vunpack.c.0.s8 %v4229
    %v4231 = vlaneseq
    %v4232 = vshrl.u32 %v4231, 7
    %v4233 = vsub.s32 %v4230, %v4232
    %v4234 = vrot.slane %v2562, %v4233
    %v4235 = vcombine.high %v4234, %v4234
    %v4237 = vunpack.c.l.s4 1966171168
    %v4238 = vunpack.c.0.s8 %v4237
    %v4239 = vlaneseq
    %v4240 = vshrl.u32 %v4239, 7
    %v4241 = vsub.s32 %v4238, %v4240
    %v4242 = vrot.slane %v4234, %v4241
    %v4244 = vunpack.c.l.s4 1966171168
    %v4245 = vunpack.c.0.s8 %v4244
    %v4246 = vlaneseq
    %v4247 = vshrl.u32 %v4246, 7
    %v4248 = vsub.s32 %v4245, %v4247
    %v4249 = vrot.slane %v4235, %v4248
    %v4250 = vunpack.c.l.b16 %v4220
    %v4251 = vunpack.c.l.b16 %v4227
    %v4252 = vunpack.c.l.b16 %v4242
    %v4253 = vunpack.c.l.b16 %v4249
    %v4254 = vrot.slane %v4252, 7
    %v4255 = vsel %vm1613, %v4254, %v4250
    %v4256 = vrot.slane %v4253, 7
    %v4257 = vsel %vm1613, %v4256, %v4251
    %v4258 = vpack.c.b16 %v4255, %v4255
    %v4259 = vpack.c.b16 %v4257, %v4257
    %v4294 = vunpack.c.l.b16 %v4174
    %v4295 = vunpack.c.h.b16 %v4174
    %v4296 = vunpack.c.l.b16 %v4175
    %v4297 = vunpack.c.h.b16 %v4175
    %v4298 = vunpack.c.l.b16 %v4176
    %v4299 = vunpack.c.h.b16 %v4176
    %v4300 = vunpack.c.l.b16 %v4177
    %v4301 = vunpack.c.h.b16 %v4177
    %v4302 = vunpack.c.l.b16 %v4178
    %v4303 = vunpack.c.h.b16 %v4178
    %v4304 = vunpack.c.l.b16 %v4179
    %v4305 = vunpack.c.h.b16 %v4179
    %v4306 = vunpack.c.l.b16 %v4180
    %v4307 = vunpack.c.h.b16 %v4180
    %v4308 = vunpack.c.l.b16 %v4181
    %v4309 = vunpack.c.h.b16 %v4181
    %v4310 = vunpack.c.l.b16 %v4182
    %v4311 = vunpack.c.h.b16 %v4182
    %v4312 = vunpack.c.l.b16 %v4183
    %v4313 = vunpack.c.h.b16 %v4183
    %v4314 = vunpack.c.l.b16 %v4184
    %v4315 = vunpack.c.h.b16 %v4184
    %v4316 = vunpack.c.l.b16 %v4185
    %v4317 = vunpack.c.h.b16 %v4185
    %v4318 = vunpack.c.l.b16 %v4186
    %v4319 = vunpack.c.h.b16 %v4186
    %v4320 = vunpack.c.l.b16 %v4187
    %v4321 = vunpack.c.h.b16 %v4187
    %v4322 = vunpack.c.l.b16 %v4188
    %v4323 = vunpack.c.h.b16 %v4188
    %v4324 = vunpack.c.l.b16 %v4189
    %v4325 = vunpack.c.h.b16 %v4189
    %v4326 = vunpack.c.l.b16 %v4190
    %v4327 = vunpack.c.h.b16 %v4190
    %v4328 = vunpack.c.l.b16 %v4191
    %v4329 = vunpack.c.h.b16 %v4191
    %v4330 = vunpack.c.l.b16 %v4192
    %v4331 = vunpack.c.h.b16 %v4192
    %v4332 = vunpack.c.l.b16 %v4193
    %v4333 = vunpack.c.h.b16 %v4193
    %v4334 = vunpack.c.l.b16 %v4194
    %v4335 = vunpack.c.h.b16 %v4194
    %v4336 = vunpack.c.l.b16 %v4195
    %v4337 = vunpack.c.h.b16 %v4195
    %v4338 = vunpack.c.l.b16 %v4196
    %v4339 = vunpack.c.h.b16 %v4196
    %v4340 = vunpack.c.l.b16 %v4197
    %v4341 = vunpack.c.h.b16 %v4197
    %v4342 = vunpack.c.l.b16 %v4198
    %v4343 = vunpack.c.h.b16 %v4198
    %v4344 = vunpack.c.l.b16 %v4199
    %v4345 = vunpack.c.h.b16 %v4199
    %v4346 = vunpack.c.l.b16 %v4200
    %v4347 = vunpack.c.h.b16 %v4200
    %v4348 = vunpack.c.l.b16 %v4201
    %v4349 = vunpack.c.h.b16 %v4201
    %v4350 = vunpack.c.l.b16 %v4202
    %v4351 = vunpack.c.h.b16 %v4202
    %v4352 = vunpack.c.l.b16 %v4203
    %v4353 = vunpack.c.h.b16 %v4203
    %v4354 = vunpack.c.l.b16 %v4204
    %v4355 = vunpack.c.h.b16 %v4204
    %v4356 = vunpack.c.l.b16 %v4205
    %v4357 = vunpack.c.h.b16 %v4205
    %v4358 = vpack.c.b16 %v4296, %v4294
    %v4359 = vpack.c.b16 %v4297, %v4295
    %v4360 = vpack.c.b16 %v4300, %v4298
    %v4361 = vpack.c.b16 %v4301, %v4299
    %v4362 = vpack.c.b16 %v4304, %v4302
    %v4363 = vpack.c.b16 %v4305, %v4303
    %v4364 = vpack.c.b16 %v4308, %v4306
    %v4365 = vpack.c.b16 %v4309, %v4307
    %v4366 = vpack.c.b16 %v4312, %v4310
    %v4367 = vpack.c.b16 %v4313, %v4311
    %v4368 = vpack.c.b16 %v4316, %v4314
    %v4369 = vpack.c.b16 %v4317, %v4315
    %v4370 = vpack.c.b16 %v4320, %v4318
    %v4371 = vpack.c.b16 %v4321, %v4319
    %v4372 = vpack.c.b16 %v4324, %v4322
    %v4373 = vpack.c.b16 %v4325, %v4323
    %v4374 = vpack.c.b16 %v4328, %v4326
    %v4375 = vpack.c.b16 %v4329, %v4327
    %v4376 = vpack.c.b16 %v4332, %v4330
    %v4377 = vpack.c.b16 %v4333, %v4331
    %v4378 = vpack.c.b16 %v4336, %v4334
    %v4379 = vpack.c.b16 %v4337, %v4335
    %v4380 = vpack.c.b16 %v4340, %v4338
    %v4381 = vpack.c.b16 %v4341, %v4339
    %v4382 = vpack.c.b16 %v4344, %v4342
    %v4383 = vpack.c.b16 %v4345, %v4343
    %v4384 = vpack.c.b16 %v4348, %v4346
    %v4385 = vpack.c.b16 %v4349, %v4347
    %v4386 = vpack.c.b16 %v4352, %v4350
    %v4387 = vpack.c.b16 %v4353, %v4351
    %v4388 = vpack.c.b16 %v4356, %v4354
    %v4389 = vpack.c.b16 %v4357, %v4355
    %4422 = vmatprep.subr.bf16.mxu0 %v4373
    %4423 = vmatpush1.bf16.msra.mxu0 %v4372
    %4424 = vmatprep.subr.bf16.mxu0 %v4371
    %4425 = vmatpush1.bf16.msra.mxu0 %v4370
    %4426 = vmatprep.subr.bf16.mxu0 %v4369
    %4427 = vmatpush1.bf16.msra.mxu0 %v4368
    %4428 = vmatprep.subr.bf16.mxu0 %v4367
    %4429 = vmatpush1.bf16.msra.mxu0 %v4366
    %4430 = vmatprep.subr.bf16.mxu0 %v4365
    %4431 = vmatpush1.bf16.msra.mxu0 %v4364
    %4432 = vmatprep.subr.bf16.mxu0 %v4363
    %4433 = vmatpush1.bf16.msra.mxu0 %v4362
    %4434 = vmatprep.subr.bf16.mxu0 %v4361
    %4435 = vmatpush1.bf16.msra.mxu0 %v4360
    %4436 = vmatprep.subr.bf16.mxu0 %v4359
    %4437 = vmatpush1.bf16.msra.mxu0 %v4358
    %4438 = vmatprep.subr.bf16.mxu0 %v4389
    %4439 = vmatpush2.bf16.msra.mxu0 %v4388
    %4440 = vmatprep.subr.bf16.mxu0 %v4387
    %4441 = vmatpush2.bf16.msra.mxu0 %v4386
    %4442 = vmatprep.subr.bf16.mxu0 %v4385
    %4443 = vmatpush2.bf16.msra.mxu0 %v4384
    %4444 = vmatprep.subr.bf16.mxu0 %v4383
    %4445 = vmatpush2.bf16.msra.mxu0 %v4382
    %4446 = vmatprep.subr.bf16.mxu0 %v4381
    %4447 = vmatpush2.bf16.msra.mxu0 %v4380
    %4448 = vmatprep.subr.bf16.mxu0 %v4379
    %4449 = vmatpush2.bf16.msra.mxu0 %v4378
    %4450 = vmatprep.subr.bf16.mxu0 %v4377
    %4451 = vmatpush2.bf16.msra.mxu0 %v4376
    %4452 = vmatprep.subr.bf16.mxu0 %v4375
    %4453 = vmatpush2.bf16.msra.mxu0 %v4374
    %4454 = vmatprep.mubr.bf16.mxu0 %v4259
    %4455 = vmatmul.mubr.bf16.gmra.mxu0 %v4258
    %v4456 = vpop.f32.mrf.mxu0
    %v4457 = vadd.f32 0.0, %v4456
    %v4458 = vpop.f32.mrf.mxu0
    %v4459 = vadd.f32 0.0, %v4458
    %v4460 = vpop.f32.mrf.mxu0
    %v4461 = vpop.f32.mrf.mxu0
    %4462 = vdwg.mxu0
    %v4463 = vadd.f32 %v4171, %v4457
    %v4464 = vadd.f32 %v4172, %v4459
    %s4465 = scalar_lea.vmem %s5, 1792
    %v4466 = vld [vmem:[%s4465] sm:$0xff]
    %v4467 = vld [vmem:[%s4465 + $0x8] sm:$0xff]
    %v4468 = vld [vmem:[%s4465 + $0x10] sm:$0xff]
    %v4469 = vld [vmem:[%s4465 + $0x18] sm:$0xff]
    %v4470 = vld [vmem:[%s4465 + $0x20] sm:$0xff]
    %v4471 = vld [vmem:[%s4465 + $0x28] sm:$0xff]
    %v4472 = vld [vmem:[%s4465 + $0x30] sm:$0xff]
    %v4473 = vld [vmem:[%s4465 + $0x38] sm:$0xff]
    %v4474 = vld [vmem:[%s4465 + $0x40] sm:$0xff]
    %v4475 = vld [vmem:[%s4465 + $0x48] sm:$0xff]
    %v4476 = vld [vmem:[%s4465 + $0x50] sm:$0xff]
    %v4477 = vld [vmem:[%s4465 + $0x58] sm:$0xff]
    %v4478 = vld [vmem:[%s4465 + $0x60] sm:$0xff]
    %v4479 = vld [vmem:[%s4465 + $0x68] sm:$0xff]
    %v4480 = vld [vmem:[%s4465 + $0x70] sm:$0xff]
    %v4481 = vld [vmem:[%s4465 + $0x78] sm:$0xff]
    %v4482 = vld [vmem:[%s4465 + $0x80] sm:$0xff]
    %v4483 = vld [vmem:[%s4465 + $0x88] sm:$0xff]
    %v4484 = vld [vmem:[%s4465 + $0x90] sm:$0xff]
    %v4485 = vld [vmem:[%s4465 + $0x98] sm:$0xff]
    %v4486 = vld [vmem:[%s4465 + $0xa0] sm:$0xff]
    %v4487 = vld [vmem:[%s4465 + $0xa8] sm:$0xff]
    %v4488 = vld [vmem:[%s4465 + $0xb0] sm:$0xff]
    %v4489 = vld [vmem:[%s4465 + $0xb8] sm:$0xff]
    %v4490 = vld [vmem:[%s4465 + $0xc0] sm:$0xff]
    %v4491 = vld [vmem:[%s4465 + $0xc8] sm:$0xff]
    %v4492 = vld [vmem:[%s4465 + $0xd0] sm:$0xff]
    %v4493 = vld [vmem:[%s4465 + $0xd8] sm:$0xff]
    %v4494 = vld [vmem:[%s4465 + $0xe0] sm:$0xff]
    %v4495 = vld [vmem:[%s4465 + $0xe8] sm:$0xff]
    %v4496 = vld [vmem:[%s4465 + $0xf0] sm:$0xff]
    %v4497 = vld [vmem:[%s4465 + $0xf8] sm:$0xff]
    %v4498 = vrot.slane %v4250, 1
    %v4499 = vsel %vm1613, %v4252, %v4498
    %v4500 = vrot.slane %v4251, 1
    %v4501 = vsel %vm1613, %v4253, %v4500
    %v4502 = vpack.c.b16 %v4499, %v4499
    %v4503 = vpack.c.b16 %v4501, %v4501
    %v4538 = vunpack.c.l.b16 %v4466
    %v4539 = vunpack.c.h.b16 %v4466
    %v4540 = vunpack.c.l.b16 %v4467
    %v4541 = vunpack.c.h.b16 %v4467
    %v4542 = vunpack.c.l.b16 %v4468
    %v4543 = vunpack.c.h.b16 %v4468
    %v4544 = vunpack.c.l.b16 %v4469
    %v4545 = vunpack.c.h.b16 %v4469
    %v4546 = vunpack.c.l.b16 %v4470
    %v4547 = vunpack.c.h.b16 %v4470
    %v4548 = vunpack.c.l.b16 %v4471
    %v4549 = vunpack.c.h.b16 %v4471
    %v4550 = vunpack.c.l.b16 %v4472
    %v4551 = vunpack.c.h.b16 %v4472
    %v4552 = vunpack.c.l.b16 %v4473
    %v4553 = vunpack.c.h.b16 %v4473
    %v4554 = vunpack.c.l.b16 %v4474
    %v4555 = vunpack.c.h.b16 %v4474
    %v4556 = vunpack.c.l.b16 %v4475
    %v4557 = vunpack.c.h.b16 %v4475
    %v4558 = vunpack.c.l.b16 %v4476
    %v4559 = vunpack.c.h.b16 %v4476
    %v4560 = vunpack.c.l.b16 %v4477
    %v4561 = vunpack.c.h.b16 %v4477
    %v4562 = vunpack.c.l.b16 %v4478
    %v4563 = vunpack.c.h.b16 %v4478
    %v4564 = vunpack.c.l.b16 %v4479
    %v4565 = vunpack.c.h.b16 %v4479
    %v4566 = vunpack.c.l.b16 %v4480
    %v4567 = vunpack.c.h.b16 %v4480
    %v4568 = vunpack.c.l.b16 %v4481
    %v4569 = vunpack.c.h.b16 %v4481
    %v4570 = vunpack.c.l.b16 %v4482
    %v4571 = vunpack.c.h.b16 %v4482
    %v4572 = vunpack.c.l.b16 %v4483
    %v4573 = vunpack.c.h.b16 %v4483
    %v4574 = vunpack.c.l.b16 %v4484
    %v4575 = vunpack.c.h.b16 %v4484
    %v4576 = vunpack.c.l.b16 %v4485
    %v4577 = vunpack.c.h.b16 %v4485
    %v4578 = vunpack.c.l.b16 %v4486
    %v4579 = vunpack.c.h.b16 %v4486
    %v4580 = vunpack.c.l.b16 %v4487
    %v4581 = vunpack.c.h.b16 %v4487
    %v4582 = vunpack.c.l.b16 %v4488
    %v4583 = vunpack.c.h.b16 %v4488
    %v4584 = vunpack.c.l.b16 %v4489
    %v4585 = vunpack.c.h.b16 %v4489
    %v4586 = vunpack.c.l.b16 %v4490
    %v4587 = vunpack.c.h.b16 %v4490
    %v4588 = vunpack.c.l.b16 %v4491
    %v4589 = vunpack.c.h.b16 %v4491
    %v4590 = vunpack.c.l.b16 %v4492
    %v4591 = vunpack.c.h.b16 %v4492
    %v4592 = vunpack.c.l.b16 %v4493
    %v4593 = vunpack.c.h.b16 %v4493
    %v4594 = vunpack.c.l.b16 %v4494
    %v4595 = vunpack.c.h.b16 %v4494
    %v4596 = vunpack.c.l.b16 %v4495
    %v4597 = vunpack.c.h.b16 %v4495
    %v4598 = vunpack.c.l.b16 %v4496
    %v4599 = vunpack.c.h.b16 %v4496
    %v4600 = vunpack.c.l.b16 %v4497
    %v4601 = vunpack.c.h.b16 %v4497
    %v4602 = vpack.c.b16 %v4540, %v4538
    %v4603 = vpack.c.b16 %v4541, %v4539
    %v4604 = vpack.c.b16 %v4544, %v4542
    %v4605 = vpack.c.b16 %v4545, %v4543
    %v4606 = vpack.c.b16 %v4548, %v4546
    %v4607 = vpack.c.b16 %v4549, %v4547
    %v4608 = vpack.c.b16 %v4552, %v4550
    %v4609 = vpack.c.b16 %v4553, %v4551
    %v4610 = vpack.c.b16 %v4556, %v4554
    %v4611 = vpack.c.b16 %v4557, %v4555
    %v4612 = vpack.c.b16 %v4560, %v4558
    %v4613 = vpack.c.b16 %v4561, %v4559
    %v4614 = vpack.c.b16 %v4564, %v4562
    %v4615 = vpack.c.b16 %v4565, %v4563
    %v4616 = vpack.c.b16 %v4568, %v4566
    %v4617 = vpack.c.b16 %v4569, %v4567
    %v4618 = vpack.c.b16 %v4572, %v4570
    %v4619 = vpack.c.b16 %v4573, %v4571
    %v4620 = vpack.c.b16 %v4576, %v4574
    %v4621 = vpack.c.b16 %v4577, %v4575
    %v4622 = vpack.c.b16 %v4580, %v4578
    %v4623 = vpack.c.b16 %v4581, %v4579
    %v4624 = vpack.c.b16 %v4584, %v4582
    %v4625 = vpack.c.b16 %v4585, %v4583
    %v4626 = vpack.c.b16 %v4588, %v4586
    %v4627 = vpack.c.b16 %v4589, %v4587
    %v4628 = vpack.c.b16 %v4592, %v4590
    %v4629 = vpack.c.b16 %v4593, %v4591
    %v4630 = vpack.c.b16 %v4596, %v4594
    %v4631 = vpack.c.b16 %v4597, %v4595
    %v4632 = vpack.c.b16 %v4600, %v4598
    %v4633 = vpack.c.b16 %v4601, %v4599
    %4666 = vmatprep.subr.bf16.mxu0 %v4617
    %4667 = vmatpush1.bf16.msra.mxu0 %v4616
    %4668 = vmatprep.subr.bf16.mxu0 %v4615
    %4669 = vmatpush1.bf16.msra.mxu0 %v4614
    %4670 = vmatprep.subr.bf16.mxu0 %v4613
    %4671 = vmatpush1.bf16.msra.mxu0 %v4612
    %4672 = vmatprep.subr.bf16.mxu0 %v4611
    %4673 = vmatpush1.bf16.msra.mxu0 %v4610
    %4674 = vmatprep.subr.bf16.mxu0 %v4609
    %4675 = vmatpush1.bf16.msra.mxu0 %v4608
    %4676 = vmatprep.subr.bf16.mxu0 %v4607
    %4677 = vmatpush1.bf16.msra.mxu0 %v4606
    %4678 = vmatprep.subr.bf16.mxu0 %v4605
    %4679 = vmatpush1.bf16.msra.mxu0 %v4604
    %4680 = vmatprep.subr.bf16.mxu0 %v4603
    %4681 = vmatpush1.bf16.msra.mxu0 %v4602
    %4682 = vmatprep.subr.bf16.mxu0 %v4633
    %4683 = vmatpush2.bf16.msra.mxu0 %v4632
    %4684 = vmatprep.subr.bf16.mxu0 %v4631
    %4685 = vmatpush2.bf16.msra.mxu0 %v4630
    %4686 = vmatprep.subr.bf16.mxu0 %v4629
    %4687 = vmatpush2.bf16.msra.mxu0 %v4628
    %4688 = vmatprep.subr.bf16.mxu0 %v4627
    %4689 = vmatpush2.bf16.msra.mxu0 %v4626
    %4690 = vmatprep.subr.bf16.mxu0 %v4625
    %4691 = vmatpush2.bf16.msra.mxu0 %v4624
    %4692 = vmatprep.subr.bf16.mxu0 %v4623
    %4693 = vmatpush2.bf16.msra.mxu0 %v4622
    %4694 = vmatprep.subr.bf16.mxu0 %v4621
    %4695 = vmatpush2.bf16.msra.mxu0 %v4620
    %4696 = vmatprep.subr.bf16.mxu0 %v4619
    %4697 = vmatpush2.bf16.msra.mxu0 %v4618
    %4698 = vmatprep.mubr.bf16.mxu0 %v4503
    %4699 = vmatmul.mubr.bf16.gmra.mxu0 %v4502
    %v4700 = vpop.f32.mrf.mxu0
    %v4701 = vadd.f32 0.0, %v4700
    %v4702 = vpop.f32.mrf.mxu0
    %v4703 = vadd.f32 0.0, %v4702
    %v4704 = vpop.f32.mrf.mxu0
    %v4705 = vpop.f32.mrf.mxu0
    %4706 = vdwg.mxu0
    %v4707 = vadd.f32 %v4463, %v4701
    %v4708 = vadd.f32 %v4464, %v4703
    %s4709 = scalar_lea.vmem %s5, 2048
    %v4710 = vld [vmem:[%s4709] sm:$0xff]
    %v4711 = vld [vmem:[%s4709 + $0x8] sm:$0xff]
    %v4712 = vld [vmem:[%s4709 + $0x10] sm:$0xff]
    %v4713 = vld [vmem:[%s4709 + $0x18] sm:$0xff]
    %v4714 = vld [vmem:[%s4709 + $0x20] sm:$0xff]
    %v4715 = vld [vmem:[%s4709 + $0x28] sm:$0xff]
    %v4716 = vld [vmem:[%s4709 + $0x30] sm:$0xff]
    %v4717 = vld [vmem:[%s4709 + $0x38] sm:$0xff]
    %v4718 = vld [vmem:[%s4709 + $0x40] sm:$0xff]
    %v4719 = vld [vmem:[%s4709 + $0x48] sm:$0xff]
    %v4720 = vld [vmem:[%s4709 + $0x50] sm:$0xff]
    %v4721 = vld [vmem:[%s4709 + $0x58] sm:$0xff]
    %v4722 = vld [vmem:[%s4709 + $0x60] sm:$0xff]
    %v4723 = vld [vmem:[%s4709 + $0x68] sm:$0xff]
    %v4724 = vld [vmem:[%s4709 + $0x70] sm:$0xff]
    %v4725 = vld [vmem:[%s4709 + $0x78] sm:$0xff]
    %v4726 = vld [vmem:[%s4709 + $0x80] sm:$0xff]
    %v4727 = vld [vmem:[%s4709 + $0x88] sm:$0xff]
    %v4728 = vld [vmem:[%s4709 + $0x90] sm:$0xff]
    %v4729 = vld [vmem:[%s4709 + $0x98] sm:$0xff]
    %v4730 = vld [vmem:[%s4709 + $0xa0] sm:$0xff]
    %v4731 = vld [vmem:[%s4709 + $0xa8] sm:$0xff]
    %v4732 = vld [vmem:[%s4709 + $0xb0] sm:$0xff]
    %v4733 = vld [vmem:[%s4709 + $0xb8] sm:$0xff]
    %v4734 = vld [vmem:[%s4709 + $0xc0] sm:$0xff]
    %v4735 = vld [vmem:[%s4709 + $0xc8] sm:$0xff]
    %v4736 = vld [vmem:[%s4709 + $0xd0] sm:$0xff]
    %v4737 = vld [vmem:[%s4709 + $0xd8] sm:$0xff]
    %v4738 = vld [vmem:[%s4709 + $0xe0] sm:$0xff]
    %v4739 = vld [vmem:[%s4709 + $0xe8] sm:$0xff]
    %v4740 = vld [vmem:[%s4709 + $0xf0] sm:$0xff]
    %v4741 = vld [vmem:[%s4709 + $0xf8] sm:$0xff]
    %v4743 = vunpack.c.l.s4 1966171168
    %v4744 = vunpack.c.0.s8 %v4743
    %v4745 = vlaneseq
    %v4746 = vshrl.u32 %v4745, 7
    %v4747 = vsub.s32 %v4744, %v4746
    %v4748 = vrot.slane %v2528, %v4747
    %v4749 = vcombine.high %v4748, %v4748
    %v4751 = vunpack.c.l.s4 1966171168
    %v4752 = vunpack.c.0.s8 %v4751
    %v4753 = vlaneseq
    %v4754 = vshrl.u32 %v4753, 7
    %v4755 = vsub.s32 %v4752, %v4754
    %v4756 = vrot.slane %v4748, %v4755
    %v4758 = vunpack.c.l.s4 1966171168
    %v4759 = vunpack.c.0.s8 %v4758
    %v4760 = vlaneseq
    %v4761 = vshrl.u32 %v4760, 7
    %v4762 = vsub.s32 %v4759, %v4761
    %v4763 = vrot.slane %v4749, %v4762
    %v4765 = vunpack.c.l.s4 1966171168
    %v4766 = vunpack.c.0.s8 %v4765
    %v4767 = vlaneseq
    %v4768 = vshrl.u32 %v4767, 7
    %v4769 = vsub.s32 %v4766, %v4768
    %v4770 = vrot.slane %v2569, %v4769
    %v4771 = vcombine.high %v4770, %v4770
    %v4773 = vunpack.c.l.s4 1966171168
    %v4774 = vunpack.c.0.s8 %v4773
    %v4775 = vlaneseq
    %v4776 = vshrl.u32 %v4775, 7
    %v4777 = vsub.s32 %v4774, %v4776
    %v4778 = vrot.slane %v4770, %v4777
    %v4780 = vunpack.c.l.s4 1966171168
    %v4781 = vunpack.c.0.s8 %v4780
    %v4782 = vlaneseq
    %v4783 = vshrl.u32 %v4782, 7
    %v4784 = vsub.s32 %v4781, %v4783
    %v4785 = vrot.slane %v4771, %v4784
    %v4786 = vunpack.c.l.b16 %v4756
    %v4787 = vunpack.c.l.b16 %v4763
    %v4788 = vunpack.c.l.b16 %v4778
    %v4789 = vunpack.c.l.b16 %v4785
    %v4790 = vrot.slane %v4788, 7
    %v4791 = vsel %vm1613, %v4790, %v4786
    %v4792 = vrot.slane %v4789, 7
    %v4793 = vsel %vm1613, %v4792, %v4787
    %v4794 = vpack.c.b16 %v4791, %v4791
    %v4795 = vpack.c.b16 %v4793, %v4793
    %v4830 = vunpack.c.l.b16 %v4710
    %v4831 = vunpack.c.h.b16 %v4710
    %v4832 = vunpack.c.l.b16 %v4711
    %v4833 = vunpack.c.h.b16 %v4711
    %v4834 = vunpack.c.l.b16 %v4712
    %v4835 = vunpack.c.h.b16 %v4712
    %v4836 = vunpack.c.l.b16 %v4713
    %v4837 = vunpack.c.h.b16 %v4713
    %v4838 = vunpack.c.l.b16 %v4714
    %v4839 = vunpack.c.h.b16 %v4714
    %v4840 = vunpack.c.l.b16 %v4715
    %v4841 = vunpack.c.h.b16 %v4715
    %v4842 = vunpack.c.l.b16 %v4716
    %v4843 = vunpack.c.h.b16 %v4716
    %v4844 = vunpack.c.l.b16 %v4717
    %v4845 = vunpack.c.h.b16 %v4717
    %v4846 = vunpack.c.l.b16 %v4718
    %v4847 = vunpack.c.h.b16 %v4718
    %v4848 = vunpack.c.l.b16 %v4719
    %v4849 = vunpack.c.h.b16 %v4719
    %v4850 = vunpack.c.l.b16 %v4720
    %v4851 = vunpack.c.h.b16 %v4720
    %v4852 = vunpack.c.l.b16 %v4721
    %v4853 = vunpack.c.h.b16 %v4721
    %v4854 = vunpack.c.l.b16 %v4722
    %v4855 = vunpack.c.h.b16 %v4722
    %v4856 = vunpack.c.l.b16 %v4723
    %v4857 = vunpack.c.h.b16 %v4723
    %v4858 = vunpack.c.l.b16 %v4724
    %v4859 = vunpack.c.h.b16 %v4724
    %v4860 = vunpack.c.l.b16 %v4725
    %v4861 = vunpack.c.h.b16 %v4725
    %v4862 = vunpack.c.l.b16 %v4726
    %v4863 = vunpack.c.h.b16 %v4726
    %v4864 = vunpack.c.l.b16 %v4727
    %v4865 = vunpack.c.h.b16 %v4727
    %v4866 = vunpack.c.l.b16 %v4728
    %v4867 = vunpack.c.h.b16 %v4728
    %v4868 = vunpack.c.l.b16 %v4729
    %v4869 = vunpack.c.h.b16 %v4729
    %v4870 = vunpack.c.l.b16 %v4730
    %v4871 = vunpack.c.h.b16 %v4730
    %v4872 = vunpack.c.l.b16 %v4731
    %v4873 = vunpack.c.h.b16 %v4731
    %v4874 = vunpack.c.l.b16 %v4732
    %v4875 = vunpack.c.h.b16 %v4732
    %v4876 = vunpack.c.l.b16 %v4733
    %v4877 = vunpack.c.h.b16 %v4733
    %v4878 = vunpack.c.l.b16 %v4734
    %v4879 = vunpack.c.h.b16 %v4734
    %v4880 = vunpack.c.l.b16 %v4735
    %v4881 = vunpack.c.h.b16 %v4735
    %v4882 = vunpack.c.l.b16 %v4736
    %v4883 = vunpack.c.h.b16 %v4736
    %v4884 = vunpack.c.l.b16 %v4737
    %v4885 = vunpack.c.h.b16 %v4737
    %v4886 = vunpack.c.l.b16 %v4738
    %v4887 = vunpack.c.h.b16 %v4738
    %v4888 = vunpack.c.l.b16 %v4739
    %v4889 = vunpack.c.h.b16 %v4739
    %v4890 = vunpack.c.l.b16 %v4740
    %v4891 = vunpack.c.h.b16 %v4740
    %v4892 = vunpack.c.l.b16 %v4741
    %v4893 = vunpack.c.h.b16 %v4741
    %v4894 = vpack.c.b16 %v4832, %v4830
    %v4895 = vpack.c.b16 %v4833, %v4831
    %v4896 = vpack.c.b16 %v4836, %v4834
    %v4897 = vpack.c.b16 %v4837, %v4835
    %v4898 = vpack.c.b16 %v4840, %v4838
    %v4899 = vpack.c.b16 %v4841, %v4839
    %v4900 = vpack.c.b16 %v4844, %v4842
    %v4901 = vpack.c.b16 %v4845, %v4843
    %v4902 = vpack.c.b16 %v4848, %v4846
    %v4903 = vpack.c.b16 %v4849, %v4847
    %v4904 = vpack.c.b16 %v4852, %v4850
    %v4905 = vpack.c.b16 %v4853, %v4851
    %v4906 = vpack.c.b16 %v4856, %v4854
    %v4907 = vpack.c.b16 %v4857, %v4855
    %v4908 = vpack.c.b16 %v4860, %v4858
    %v4909 = vpack.c.b16 %v4861, %v4859
    %v4910 = vpack.c.b16 %v4864, %v4862
    %v4911 = vpack.c.b16 %v4865, %v4863
    %v4912 = vpack.c.b16 %v4868, %v4866
    %v4913 = vpack.c.b16 %v4869, %v4867
    %v4914 = vpack.c.b16 %v4872, %v4870
    %v4915 = vpack.c.b16 %v4873, %v4871
    %v4916 = vpack.c.b16 %v4876, %v4874
    %v4917 = vpack.c.b16 %v4877, %v4875
    %v4918 = vpack.c.b16 %v4880, %v4878
    %v4919 = vpack.c.b16 %v4881, %v4879
    %v4920 = vpack.c.b16 %v4884, %v4882
    %v4921 = vpack.c.b16 %v4885, %v4883
    %v4922 = vpack.c.b16 %v4888, %v4886
    %v4923 = vpack.c.b16 %v4889, %v4887
    %v4924 = vpack.c.b16 %v4892, %v4890
    %v4925 = vpack.c.b16 %v4893, %v4891
    %4958 = vmatprep.subr.bf16.mxu0 %v4909
    %4959 = vmatpush1.bf16.msra.mxu0 %v4908
    %4960 = vmatprep.subr.bf16.mxu0 %v4907
    %4961 = vmatpush1.bf16.msra.mxu0 %v4906
    %4962 = vmatprep.subr.bf16.mxu0 %v4905
    %4963 = vmatpush1.bf16.msra.mxu0 %v4904
    %4964 = vmatprep.subr.bf16.mxu0 %v4903
    %4965 = vmatpush1.bf16.msra.mxu0 %v4902
    %4966 = vmatprep.subr.bf16.mxu0 %v4901
    %4967 = vmatpush1.bf16.msra.mxu0 %v4900
    %4968 = vmatprep.subr.bf16.mxu0 %v4899
    %4969 = vmatpush1.bf16.msra.mxu0 %v4898
    %4970 = vmatprep.subr.bf16.mxu0 %v4897
    %4971 = vmatpush1.bf16.msra.mxu0 %v4896
    %4972 = vmatprep.subr.bf16.mxu0 %v4895
    %4973 = vmatpush1.bf16.msra.mxu0 %v4894
    %4974 = vmatprep.subr.bf16.mxu0 %v4925
    %4975 = vmatpush2.bf16.msra.mxu0 %v4924
    %4976 = vmatprep.subr.bf16.mxu0 %v4923
    %4977 = vmatpush2.bf16.msra.mxu0 %v4922
    %4978 = vmatprep.subr.bf16.mxu0 %v4921
    %4979 = vmatpush2.bf16.msra.mxu0 %v4920
    %4980 = vmatprep.subr.bf16.mxu0 %v4919
    %4981 = vmatpush2.bf16.msra.mxu0 %v4918
    %4982 = vmatprep.subr.bf16.mxu0 %v4917
    %4983 = vmatpush2.bf16.msra.mxu0 %v4916
    %4984 = vmatprep.subr.bf16.mxu0 %v4915
    %4985 = vmatpush2.bf16.msra.mxu0 %v4914
    %4986 = vmatprep.subr.bf16.mxu0 %v4913
    %4987 = vmatpush2.bf16.msra.mxu0 %v4912
    %4988 = vmatprep.subr.bf16.mxu0 %v4911
    %4989 = vmatpush2.bf16.msra.mxu0 %v4910
    %4990 = vmatprep.mubr.bf16.mxu0 %v4795
    %4991 = vmatmul.mubr.bf16.gmra.mxu0 %v4794
    %v4992 = vpop.f32.mrf.mxu0
    %v4993 = vadd.f32 0.0, %v4992
    %v4994 = vpop.f32.mrf.mxu0
    %v4995 = vadd.f32 0.0, %v4994
    %v4996 = vpop.f32.mrf.mxu0
    %v4997 = vpop.f32.mrf.mxu0
    %4998 = vdwg.mxu0
    %v4999 = vadd.f32 %v4707, %v4993
    %v5000 = vadd.f32 %v4708, %v4995
    %s5001 = scalar_lea.vmem %s5, 2304
    %v5002 = vld [vmem:[%s5001] sm:$0xff]
    %v5003 = vld [vmem:[%s5001 + $0x8] sm:$0xff]
    %v5004 = vld [vmem:[%s5001 + $0x10] sm:$0xff]
    %v5005 = vld [vmem:[%s5001 + $0x18] sm:$0xff]
    %v5006 = vld [vmem:[%s5001 + $0x20] sm:$0xff]
    %v5007 = vld [vmem:[%s5001 + $0x28] sm:$0xff]
    %v5008 = vld [vmem:[%s5001 + $0x30] sm:$0xff]
    %v5009 = vld [vmem:[%s5001 + $0x38] sm:$0xff]
    %v5010 = vld [vmem:[%s5001 + $0x40] sm:$0xff]
    %v5011 = vld [vmem:[%s5001 + $0x48] sm:$0xff]
    %v5012 = vld [vmem:[%s5001 + $0x50] sm:$0xff]
    %v5013 = vld [vmem:[%s5001 + $0x58] sm:$0xff]
    %v5014 = vld [vmem:[%s5001 + $0x60] sm:$0xff]
    %v5015 = vld [vmem:[%s5001 + $0x68] sm:$0xff]
    %v5016 = vld [vmem:[%s5001 + $0x70] sm:$0xff]
    %v5017 = vld [vmem:[%s5001 + $0x78] sm:$0xff]
    %v5018 = vld [vmem:[%s5001 + $0x80] sm:$0xff]
    %v5019 = vld [vmem:[%s5001 + $0x88] sm:$0xff]
    %v5020 = vld [vmem:[%s5001 + $0x90] sm:$0xff]
    %v5021 = vld [vmem:[%s5001 + $0x98] sm:$0xff]
    %v5022 = vld [vmem:[%s5001 + $0xa0] sm:$0xff]
    %v5023 = vld [vmem:[%s5001 + $0xa8] sm:$0xff]
    %v5024 = vld [vmem:[%s5001 + $0xb0] sm:$0xff]
    %v5025 = vld [vmem:[%s5001 + $0xb8] sm:$0xff]
    %v5026 = vld [vmem:[%s5001 + $0xc0] sm:$0xff]
    %v5027 = vld [vmem:[%s5001 + $0xc8] sm:$0xff]
    %v5028 = vld [vmem:[%s5001 + $0xd0] sm:$0xff]
    %v5029 = vld [vmem:[%s5001 + $0xd8] sm:$0xff]
    %v5030 = vld [vmem:[%s5001 + $0xe0] sm:$0xff]
    %v5031 = vld [vmem:[%s5001 + $0xe8] sm:$0xff]
    %v5032 = vld [vmem:[%s5001 + $0xf0] sm:$0xff]
    %v5033 = vld [vmem:[%s5001 + $0xf8] sm:$0xff]
    %v5034 = vrot.slane %v4786, 1
    %v5035 = vsel %vm1613, %v4788, %v5034
    %v5036 = vrot.slane %v4787, 1
    %v5037 = vsel %vm1613, %v4789, %v5036
    %v5038 = vpack.c.b16 %v5035, %v5035
    %v5039 = vpack.c.b16 %v5037, %v5037
    %v5074 = vunpack.c.l.b16 %v5002
    %v5075 = vunpack.c.h.b16 %v5002
    %v5076 = vunpack.c.l.b16 %v5003
    %v5077 = vunpack.c.h.b16 %v5003
    %v5078 = vunpack.c.l.b16 %v5004
    %v5079 = vunpack.c.h.b16 %v5004
    %v5080 = vunpack.c.l.b16 %v5005
    %v5081 = vunpack.c.h.b16 %v5005
    %v5082 = vunpack.c.l.b16 %v5006
    %v5083 = vunpack.c.h.b16 %v5006
    %v5084 = vunpack.c.l.b16 %v5007
    %v5085 = vunpack.c.h.b16 %v5007
    %v5086 = vunpack.c.l.b16 %v5008
    %v5087 = vunpack.c.h.b16 %v5008
    %v5088 = vunpack.c.l.b16 %v5009
    %v5089 = vunpack.c.h.b16 %v5009
    %v5090 = vunpack.c.l.b16 %v5010
    %v5091 = vunpack.c.h.b16 %v5010
    %v5092 = vunpack.c.l.b16 %v5011
    %v5093 = vunpack.c.h.b16 %v5011
    %v5094 = vunpack.c.l.b16 %v5012
    %v5095 = vunpack.c.h.b16 %v5012
    %v5096 = vunpack.c.l.b16 %v5013
    %v5097 = vunpack.c.h.b16 %v5013
    %v5098 = vunpack.c.l.b16 %v5014
    %v5099 = vunpack.c.h.b16 %v5014
    %v5100 = vunpack.c.l.b16 %v5015
    %v5101 = vunpack.c.h.b16 %v5015
    %v5102 = vunpack.c.l.b16 %v5016
    %v5103 = vunpack.c.h.b16 %v5016
    %v5104 = vunpack.c.l.b16 %v5017
    %v5105 = vunpack.c.h.b16 %v5017
    %v5106 = vunpack.c.l.b16 %v5018
    %v5107 = vunpack.c.h.b16 %v5018
    %v5108 = vunpack.c.l.b16 %v5019
    %v5109 = vunpack.c.h.b16 %v5019
    %v5110 = vunpack.c.l.b16 %v5020
    %v5111 = vunpack.c.h.b16 %v5020
    %v5112 = vunpack.c.l.b16 %v5021
    %v5113 = vunpack.c.h.b16 %v5021
    %v5114 = vunpack.c.l.b16 %v5022
    %v5115 = vunpack.c.h.b16 %v5022
    %v5116 = vunpack.c.l.b16 %v5023
    %v5117 = vunpack.c.h.b16 %v5023
    %v5118 = vunpack.c.l.b16 %v5024
    %v5119 = vunpack.c.h.b16 %v5024
    %v5120 = vunpack.c.l.b16 %v5025
    %v5121 = vunpack.c.h.b16 %v5025
    %v5122 = vunpack.c.l.b16 %v5026
    %v5123 = vunpack.c.h.b16 %v5026
    %v5124 = vunpack.c.l.b16 %v5027
    %v5125 = vunpack.c.h.b16 %v5027
    %v5126 = vunpack.c.l.b16 %v5028
    %v5127 = vunpack.c.h.b16 %v5028
    %v5128 = vunpack.c.l.b16 %v5029
    %v5129 = vunpack.c.h.b16 %v5029
    %v5130 = vunpack.c.l.b16 %v5030
    %v5131 = vunpack.c.h.b16 %v5030
    %v5132 = vunpack.c.l.b16 %v5031
    %v5133 = vunpack.c.h.b16 %v5031
    %v5134 = vunpack.c.l.b16 %v5032
    %v5135 = vunpack.c.h.b16 %v5032
    %v5136 = vunpack.c.l.b16 %v5033
    %v5137 = vunpack.c.h.b16 %v5033
    %v5138 = vpack.c.b16 %v5076, %v5074
    %v5139 = vpack.c.b16 %v5077, %v5075
    %v5140 = vpack.c.b16 %v5080, %v5078
    %v5141 = vpack.c.b16 %v5081, %v5079
    %v5142 = vpack.c.b16 %v5084, %v5082
    %v5143 = vpack.c.b16 %v5085, %v5083
    %v5144 = vpack.c.b16 %v5088, %v5086
    %v5145 = vpack.c.b16 %v5089, %v5087
    %v5146 = vpack.c.b16 %v5092, %v5090
    %v5147 = vpack.c.b16 %v5093, %v5091
    %v5148 = vpack.c.b16 %v5096, %v5094
    %v5149 = vpack.c.b16 %v5097, %v5095
    %v5150 = vpack.c.b16 %v5100, %v5098
    %v5151 = vpack.c.b16 %v5101, %v5099
    %v5152 = vpack.c.b16 %v5104, %v5102
    %v5153 = vpack.c.b16 %v5105, %v5103
    %v5154 = vpack.c.b16 %v5108, %v5106
    %v5155 = vpack.c.b16 %v5109, %v5107
    %v5156 = vpack.c.b16 %v5112, %v5110
    %v5157 = vpack.c.b16 %v5113, %v5111
    %v5158 = vpack.c.b16 %v5116, %v5114
    %v5159 = vpack.c.b16 %v5117, %v5115
    %v5160 = vpack.c.b16 %v5120, %v5118
    %v5161 = vpack.c.b16 %v5121, %v5119
    %v5162 = vpack.c.b16 %v5124, %v5122
    %v5163 = vpack.c.b16 %v5125, %v5123
    %v5164 = vpack.c.b16 %v5128, %v5126
    %v5165 = vpack.c.b16 %v5129, %v5127
    %v5166 = vpack.c.b16 %v5132, %v5130
    %v5167 = vpack.c.b16 %v5133, %v5131
    %v5168 = vpack.c.b16 %v5136, %v5134
    %v5169 = vpack.c.b16 %v5137, %v5135
    %5202 = vmatprep.subr.bf16.mxu0 %v5153
    %5203 = vmatpush1.bf16.msra.mxu0 %v5152
    %5204 = vmatprep.subr.bf16.mxu0 %v5151
    %5205 = vmatpush1.bf16.msra.mxu0 %v5150
    %5206 = vmatprep.subr.bf16.mxu0 %v5149
    %5207 = vmatpush1.bf16.msra.mxu0 %v5148
    %5208 = vmatprep.subr.bf16.mxu0 %v5147
    %5209 = vmatpush1.bf16.msra.mxu0 %v5146
    %5210 = vmatprep.subr.bf16.mxu0 %v5145
    %5211 = vmatpush1.bf16.msra.mxu0 %v5144
    %5212 = vmatprep.subr.bf16.mxu0 %v5143
    %5213 = vmatpush1.bf16.msra.mxu0 %v5142
    %5214 = vmatprep.subr.bf16.mxu0 %v5141
    %5215 = vmatpush1.bf16.msra.mxu0 %v5140
    %5216 = vmatprep.subr.bf16.mxu0 %v5139
    %5217 = vmatpush1.bf16.msra.mxu0 %v5138
    %5218 = vmatprep.subr.bf16.mxu0 %v5169
    %5219 = vmatpush2.bf16.msra.mxu0 %v5168
    %5220 = vmatprep.subr.bf16.mxu0 %v5167
    %5221 = vmatpush2.bf16.msra.mxu0 %v5166
    %5222 = vmatprep.subr.bf16.mxu0 %v5165
    %5223 = vmatpush2.bf16.msra.mxu0 %v5164
    %5224 = vmatprep.subr.bf16.mxu0 %v5163
    %5225 = vmatpush2.bf16.msra.mxu0 %v5162
    %5226 = vmatprep.subr.bf16.mxu0 %v5161
    %5227 = vmatpush2.bf16.msra.mxu0 %v5160
    %5228 = vmatprep.subr.bf16.mxu0 %v5159
    %5229 = vmatpush2.bf16.msra.mxu0 %v5158
    %5230 = vmatprep.subr.bf16.mxu0 %v5157
    %5231 = vmatpush2.bf16.msra.mxu0 %v5156
    %5232 = vmatprep.subr.bf16.mxu0 %v5155
    %5233 = vmatpush2.bf16.msra.mxu0 %v5154
    %5234 = vmatprep.mubr.bf16.mxu0 %v5039
    %5235 = vmatmul.mubr.bf16.gmra.mxu0 %v5038
    %v5236 = vpop.f32.mrf.mxu0
    %v5237 = vadd.f32 0.0, %v5236
    %v5238 = vpop.f32.mrf.mxu0
    %v5239 = vadd.f32 0.0, %v5238
    %v5240 = vpop.f32.mrf.mxu0
    %v5241 = vpop.f32.mrf.mxu0
    %5242 = vdwg.mxu0
    %v5243 = vadd.f32 %v4999, %v5237
    %v5244 = vadd.f32 %v5000, %v5239
    %v5245 = vld [vmem:[%s6] sm:$0x3]
    %v5247 = vlaneseq
    %v5248 = vshrl.u32 %v5247, 7
    %v5249 = vsub.s32 0, %v5248
    %v5250 = vrot.slane %v5245, %v5249
    %v5251 = vlaneseq
    %v5252 = vshrl.u32 %v5251, 7
    %v5253 = vsub.s32 1, %v5252
    %v5254 = vrot.slane %v5245, %v5253
    %v5257 = vadd.f32 %v5243, %v5250
    %v5258 = vadd.f32 %v5244, %v5254
    %v5259 = vmax.f32 %v5257, 0.0
    %v5260 = vmax.f32 %v5258, 0.0
    %v5261 = vpack.c.bf16 %v5259, %v5259
    %v5262 = vpack.c.bf16 %v5260, %v5260
    %v5263 = vld [vmem:[%s7] sm:$0xf]
    %v5264 = vld [vmem:[%s7 + $0x4] sm:$0xf]
    %v5265 = vld [vmem:[%s7 + $0x8] sm:$0xf]
    %v5266 = vld [vmem:[%s7 + $0xc] sm:$0xf]
    %v5267 = vld [vmem:[%s7 + $0x10] sm:$0xf]
    %v5268 = vld [vmem:[%s7 + $0x14] sm:$0xf]
    %v5269 = vld [vmem:[%s7 + $0x18] sm:$0xf]
    %v5270 = vld [vmem:[%s7 + $0x1c] sm:$0xf]
    %v5271 = vld [vmem:[%s7 + $0x20] sm:$0xf]
    %v5272 = vld [vmem:[%s7 + $0x24] sm:$0xf]
    %v5273 = vld [vmem:[%s7 + $0x28] sm:$0xf]
    %v5274 = vld [vmem:[%s7 + $0x2c] sm:$0xf]
    %v5275 = vld [vmem:[%s7 + $0x30] sm:$0xf]
    %v5276 = vld [vmem:[%s7 + $0x34] sm:$0xf]
    %v5277 = vld [vmem:[%s7 + $0x38] sm:$0xf]
    %v5278 = vld [vmem:[%s7 + $0x3c] sm:$0xf]
    %v5279 = vld [vmem:[%s7 + $0x40] sm:$0xf]
    %v5280 = vld [vmem:[%s7 + $0x44] sm:$0xf]
    %v5281 = vld [vmem:[%s7 + $0x48] sm:$0x7]
    %v5282 = vld [vmem:[%s8] sm:$0x1]
    %v5284 = vlaneseq
    %v5285 = vshrl.u32 %v5284, 7
    %v5286 = vsub.s32 0, %v5285
    %v5287 = vrot.slane %v5282, %v5286
    %v5308 = vunpack.c.l.b16 %v5263
    %v5309 = vunpack.c.l.b16 %v5264
    %v5310 = vunpack.c.l.b16 %v5265
    %v5311 = vunpack.c.l.b16 %v5266
    %v5312 = vunpack.c.l.b16 %v5267
    %v5313 = vunpack.c.l.b16 %v5268
    %v5314 = vunpack.c.l.b16 %v5269
    %v5315 = vunpack.c.l.b16 %v5270
    %v5316 = vunpack.c.l.b16 %v5271
    %v5317 = vunpack.c.l.b16 %v5272
    %v5318 = vunpack.c.l.b16 %v5273
    %v5319 = vunpack.c.l.b16 %v5274
    %v5320 = vunpack.c.l.b16 %v5275
    %v5321 = vunpack.c.l.b16 %v5276
    %v5322 = vunpack.c.l.b16 %v5277
    %v5323 = vunpack.c.l.b16 %v5278
    %v5324 = vunpack.c.l.b16 %v5279
    %v5325 = vunpack.c.l.b16 %v5280
    %v5326 = vunpack.c.l.b16 %v5281
    %v5327 = vpack.c.b16 %v5309, %v5308
    %v5328 = vpack.c.b16 %v5311, %v5310
    %v5329 = vpack.c.b16 %v5313, %v5312
    %v5330 = vpack.c.b16 %v5315, %v5314
    %v5331 = vpack.c.b16 %v5317, %v5316
    %v5332 = vpack.c.b16 %v5319, %v5318
    %v5333 = vpack.c.b16 %v5321, %v5320
    %v5334 = vpack.c.b16 %v5323, %v5322
    %v5335 = vpack.c.b16 %v5325, %v5324
    %v5336 = vpack.c.b16 %v5326, %v5326
    %vm5346 = vcmask 179200
    %v5348 = vsel %vm5346, %v5262, 0
    %vm5350 = vcmask 1042432
    %v5352 = vsel %vm5350, %v5336, 0
    %5354 = vmatprep.subr.bf16.mxu0 0
    %5355 = vmatpush1.bf16.msra.mxu0 %v5334
    %5356 = vmatprep.subr.bf16.mxu0 0
    %5357 = vmatpush1.bf16.msra.mxu0 %v5333
    %5358 = vmatprep.subr.bf16.mxu0 0
    %5359 = vmatpush1.bf16.msra.mxu0 %v5332
    %5360 = vmatprep.subr.bf16.mxu0 0
    %5361 = vmatpush1.bf16.msra.mxu0 %v5331
    %5362 = vmatprep.subr.bf16.mxu0 0
    %5363 = vmatpush1.bf16.msra.mxu0 %v5330
    %5364 = vmatprep.subr.bf16.mxu0 0
    %5365 = vmatpush1.bf16.msra.mxu0 %v5329
    %5366 = vmatprep.subr.bf16.mxu0 0
    %5367 = vmatpush1.bf16.msra.mxu0 %v5328
    %5368 = vmatprep.subr.bf16.mxu0 0
    %5369 = vmatpush1.bf16.msra.mxu0 %v5327
    %5370 = vmatprep.subr.bf16.mxu0 0
    %5371 = vmatpush2.bf16.msra.mxu0 0
    %5372 = vmatprep.subr.bf16.mxu0 0
    %5373 = vmatpush2.bf16.msra.mxu0 0
    %5374 = vmatprep.subr.bf16.mxu0 0
    %5375 = vmatpush2.bf16.msra.mxu0 0
    %5376 = vmatprep.subr.bf16.mxu0 0
    %5377 = vmatpush2.bf16.msra.mxu0 0
    %5378 = vmatprep.subr.bf16.mxu0 0
    %5379 = vmatpush2.bf16.msra.mxu0 0
    %5380 = vmatprep.subr.bf16.mxu0 0
    %5381 = vmatpush2.bf16.msra.mxu0 0
    %5382 = vmatprep.subr.bf16.mxu0 0
    %5383 = vmatpush2.bf16.msra.mxu0 %v5352
    %5384 = vmatprep.subr.bf16.mxu0 0
    %5385 = vmatpush2.bf16.msra.mxu0 %v5335
    %5386 = vmatprep.mubr.bf16.mxu0 %v5348
    %5387 = vmatmul.mubr.bf16.gmra.mxu0 %v5261
    %v5388 = vpop.f32.mrf.mxu0
    %v5389 = vadd.f32 %v5287, %v5388
    %v5390 = vpop.f32.mrf.mxu0
    %v5391 = vpop.f32.mrf.mxu0
    %v5392 = vpop.f32.mrf.mxu0
    %5393 = vdwg.mxu0
    %v5394 = vmax.f32 %v5389, 0.0
    %v5395 = vpack.c.bf16 %v5394, %v5394
    %v5396 = vld [vmem:[%s9] sm:$0xf]
    %v5397 = vld [vmem:[%s9 + $0x4] sm:$0xf]
    %v5398 = vld [vmem:[%s9 + $0x8] sm:$0xf]
    %v5399 = vld [vmem:[%s9 + $0xc] sm:$0xf]
    %v5400 = vld [vmem:[%s9 + $0x10] sm:$0xf]
    %v5401 = vld [vmem:[%s9 + $0x14] sm:$0xf]
    %v5402 = vld [vmem:[%s9 + $0x18] sm:$0xf]
    %v5403 = vld [vmem:[%s9 + $0x1c] sm:$0xf]
    %v5404 = vld [vmem:[%s9 + $0x20] sm:$0xf]
    %v5405 = vld [vmem:[%s9 + $0x24] sm:$0xf]
    %v5406 = vld [vmem:[%s9 + $0x28] sm:$0xf]
    %v5407 = vld [vmem:[%s9 + $0x2c] sm:$0x1]
    %v5408 = vld [vmem:[%s10] sm:$0x1]
    %v5410 = vlaneseq
    %v5411 = vshrl.u32 %v5410, 7
    %v5412 = vsub.s32 0, %v5411
    %v5413 = vrot.slane %v5408, %v5412
    %v5427 = vunpack.c.l.b16 %v5396
    %v5428 = vunpack.c.l.b16 %v5397
    %v5429 = vunpack.c.l.b16 %v5398
    %v5430 = vunpack.c.l.b16 %v5399
    %v5431 = vunpack.c.l.b16 %v5400
    %v5432 = vunpack.c.l.b16 %v5401
    %v5433 = vunpack.c.l.b16 %v5402
    %v5434 = vunpack.c.l.b16 %v5403
    %v5435 = vunpack.c.l.b16 %v5404
    %v5436 = vunpack.c.l.b16 %v5405
    %v5437 = vunpack.c.l.b16 %v5406
    %v5438 = vunpack.c.l.b16 %v5407
    %v5439 = vpack.c.b16 %v5428, %v5427
    %v5440 = vpack.c.b16 %v5430, %v5429
    %v5441 = vpack.c.b16 %v5432, %v5431
    %v5442 = vpack.c.b16 %v5434, %v5433
    %v5443 = vpack.c.b16 %v5436, %v5435
    %v5444 = vpack.c.b16 %v5438, %v5437
    %vm5450 = vcmask 736256
    %v5452 = vsel %vm5450, %v5395, 0
    %vm5454 = vcmask 1044480
    %v5456 = vsel %vm5454, %v5444, 0
    %5458 = vmatprep.subr.bf16.mxu0 0
    %5459 = vmatpush1.bf16.msra.mxu0 0
    %5460 = vmatprep.subr.bf16.mxu0 0
    %5461 = vmatpush1.bf16.msra.mxu0 0
    %5462 = vmatprep.subr.bf16.mxu0 0
    %5463 = vmatpush1.bf16.msra.mxu0 %v5456
    %5464 = vmatprep.subr.bf16.mxu0 0
    %5465 = vmatpush1.bf16.msra.mxu0 %v5443
    %5466 = vmatprep.subr.bf16.mxu0 0
    %5467 = vmatpush1.bf16.msra.mxu0 %v5442
    %5468 = vmatprep.subr.bf16.mxu0 0
    %5469 = vmatpush1.bf16.msra.mxu0 %v5441
    %5470 = vmatprep.subr.bf16.mxu0 0
    %5471 = vmatpush1.bf16.msra.mxu0 %v5440
    %5472 = vmatprep.subr.bf16.mxu0 0
    %5473 = vmatpush1.bf16.msra.mxu0 %v5439
    %5474 = vmatprep.subr.bf16.mxu0 0
    %5475 = vmatpush2.bf16.msra.mxu0 0
    %5476 = vmatprep.subr.bf16.mxu0 0
    %5477 = vmatpush2.bf16.msra.mxu0 0
    %5478 = vmatprep.subr.bf16.mxu0 0
    %5479 = vmatpush2.bf16.msra.mxu0 0
    %5480 = vmatprep.subr.bf16.mxu0 0
    %5481 = vmatpush2.bf16.msra.mxu0 0
    %5482 = vmatprep.subr.bf16.mxu0 0
    %5483 = vmatpush2.bf16.msra.mxu0 0
    %5484 = vmatprep.subr.bf16.mxu0 0
    %5485 = vmatpush2.bf16.msra.mxu0 0
    %5486 = vmatprep.subr.bf16.mxu0 0
    %5487 = vmatpush2.bf16.msra.mxu0 0
    %5488 = vmatprep.subr.bf16.mxu0 0
    %5489 = vmatpush2.bf16.msra.mxu0 0
    %5490 = vmatprep.mubr.bf16.mxu0 0
    %5491 = vmatmul.mubr.bf16.gmra.mxu0 %v5452
    %v5492 = vpop.f32.mrf.mxu0
    %v5493 = vadd.f32 %v5413, %v5492
    %v5494 = vpop.f32.mrf.mxu0
    %v5495 = vpop.f32.mrf.mxu0
    %v5496 = vpop.f32.mrf.mxu0
    %5497 = vdwg.mxu0
    %v5498 = vmax.f32 %v5493, 0.0
    %v5499 = vpack.c.bf16 %v5498, %v5498
    %v5500 = vld [vmem:[%s11] sm:$0xf]
    %v5501 = vld [vmem:[%s11 + $0x4] sm:$0xf]
    %v5502 = vld [vmem:[%s11 + $0x8] sm:$0xf]
    %v5503 = vld [vmem:[%s11 + $0xc] sm:$0x7]
    %v5504 = vld [vmem:[%s12] sm:$0x1]
    %v5506 = vlaneseq
    %v5507 = vshrl.u32 %v5506, 7
    %v5508 = vsub.s32 0, %v5507
    %v5509 = vrot.slane %v5504, %v5508
    %v5515 = vunpack.c.l.b16 %v5500
    %v5516 = vunpack.c.l.b16 %v5501
    %v5517 = vunpack.c.l.b16 %v5502
    %v5518 = vunpack.c.l.b16 %v5503
    %v5519 = vpack.c.b16 %v5516, %v5515
    %v5520 = vpack.c.b16 %v5518, %v5517
    %vm5522 = vcmask 244736
    %v5524 = vsel %vm5522, %v5499, 0
    %vm5526 = vcmask 1046528
    %v5528 = vsel %vm5526, %v5520, 0
    %5530 = vmatprep.subr.bf16.mxu0 0
    %5531 = vmatpush1.bf16.msra.mxu0 0
    %5532 = vmatprep.subr.bf16.mxu0 0
    %5533 = vmatpush1.bf16.msra.mxu0 0
    %5534 = vmatprep.subr.bf16.mxu0 0
    %5535 = vmatpush1.bf16.msra.mxu0 0
    %5536 = vmatprep.subr.bf16.mxu0 0
    %5537 = vmatpush1.bf16.msra.mxu0 0
    %5538 = vmatprep.subr.bf16.mxu0 0
    %5539 = vmatpush1.bf16.msra.mxu0 0
    %5540 = vmatprep.subr.bf16.mxu0 0
    %5541 = vmatpush1.bf16.msra.mxu0 0
    %5542 = vmatprep.subr.bf16.mxu0 0
    %5543 = vmatpush1.bf16.msra.mxu0 %v5528
    %5544 = vmatprep.subr.bf16.mxu0 0
    %5545 = vmatpush1.bf16.msra.mxu0 %v5519
    %5546 = vmatprep.subr.bf16.mxu0 0
    %5547 = vmatpush2.bf16.msra.mxu0 0
    %5548 = vmatprep.subr.bf16.mxu0 0
    %5549 = vmatpush2.bf16.msra.mxu0 0
    %5550 = vmatprep.subr.bf16.mxu0 0
    %5551 = vmatpush2.bf16.msra.mxu0 0
    %5552 = vmatprep.subr.bf16.mxu0 0
    %5553 = vmatpush2.bf16.msra.mxu0 0
    %5554 = vmatprep.subr.bf16.mxu0 0
    %5555 = vmatpush2.bf16.msra.mxu0 0
    %5556 = vmatprep.subr.bf16.mxu0 0
    %5557 = vmatpush2.bf16.msra.mxu0 0
    %5558 = vmatprep.subr.bf16.mxu0 0
    %5559 = vmatpush2.bf16.msra.mxu0 0
    %5560 = vmatprep.subr.bf16.mxu0 0
    %5561 = vmatpush2.bf16.msra.mxu0 0
    %5562 = vmatprep.mubr.bf16.mxu0 0
    %5563 = vmatmul.mubr.bf16.gmra.mxu0 %v5524
    %v5564 = vpop.f32.mrf.mxu0
    %v5565 = vadd.f32 %v5509, %v5564
    %v5566 = vpop.f32.mrf.mxu0
    %v5567 = vpop.f32.mrf.mxu0
    %v5568 = vpop.f32.mrf.mxu0
    %5569 = vdwg.mxu0
    %5570 = vst [vmem:[#allocation2] sm:$0x3] %v5565
    // Predicated region
    $region54: #{net_forward_pallas.1} parent=1 // pred_check
      _
    $region55: #{net_forward_pallas.1} parent=1 // pred_check_branch
      %5572 = sbr.rel (0) target = $region57
    $region56: #{net_forward_pallas.1} parent=1 // pred_region
      %s5574 = ssub.s32 32, 32
      %5575 = vsyncadd [#allocation3], %s5574
      %s5577 = sshll.u32 [#allocation2], 4
      %s5578 = int_to_ptr.vmem [resolvable:$true] %s5577
      %5580 = dma.vmem_to_hbm [thread:$0]  %s5578, 32, %s13, [#allocation3]
    $region57: #{net_forward_pallas.1} parent=1 // pred_fallthru
      _
    // Predicated region
    $region58: #{net_forward_pallas.1} parent=1 // pred_check
      _
    $region59: #{net_forward_pallas.1} parent=1 // pred_check_branch
      %5582 = sbr.rel (0) target = $region61
    $region60: #{net_forward_pallas.1} parent=1 // pred_region
      %5583 = dma.done [#allocation3], 32
    $region61: #{net_forward_pallas.1} parent=1 // pred_fallthru
      _
    %5584 = vsyncpa [#allocation3], 1

</llo_original>
